<compile_context>
chip_gen: v7x
topology: tpu7x:2x2x1
jax: 0.10.0
libtpu: 0.0.40
codegen_flags: <defaults>
</compile_context>

<pallas_src>
import jax
import jax.numpy as jnp
from jax.experimental import pallas as pl
from jax.experimental.pallas import tpu as pltpu

LANE = 128
BN_EPS = 1e-5
# Scoped-VMEM request: generous for the tiles used here (worst-case working
# set ~12 MiB at real ResNet sizes), while leaving plenty of headroom on
# v7x's 64 MiB physical VMEM and fitting v5e / v6e trivially.
VMEM_LIMIT = 32 * 1024 * 1024


# ---------------------------------------------------------------------------
# small tiling helpers
# ---------------------------------------------------------------------------
def _round_channels(c):
    return ((c + LANE - 1) // LANE) * LANE


def _chan_tile(c):
    """Largest channel tile (multiple of 128, capped at 256 for v7x VMEM)."""
    for t in (256, 128):
        if c % t == 0:
            return t
    return c


def _largest_div_tile(m, cap):
    best = 8
    t = 8
    while t <= min(m, cap):
        if m % t == 0:
            best = t
        t += 8
    return best


def _row_tiling(m, cap=1024):
    """Row tile (multiple of 8) that divides m when possible (no pad/slice),
    preferring >= 2 grid steps so both v7x TensorCores get work."""
    cap = min(cap, max(8, m // 2))
    if m % 8 == 0:
        return _largest_div_tile(m, cap), m
    mp = ((m + 7) // 8) * 8          # rare fallback: pad rows
    return _largest_div_tile(mp, cap), mp


# ---------------------------------------------------------------------------
# direct convolution kernel (tap-unrolled, K-tiled, fused BN statistics)
# ---------------------------------------------------------------------------
def _make_conv_kernel(taps, ho, wo, n_k):
    m = ho * wo

    def kernel(x_ref, w_ref, y_ref, st_ref, acc_ref):
        k = pl.program_id(2)

        @pl.when(k == 0)
        def _init():
            acc_ref[...] = jnp.zeros_like(acc_ref)

        acc = acc_ref[...]
        for t, (ph_i, oy, ox) in enumerate(taps):   # static unroll over taps
            patch = x_ref[ph_i, oy:oy + ho, ox:ox + wo, :]
            patch = patch.reshape(m, patch.shape[-1])
            acc = acc + jnp.dot(patch, w_ref[t],
                                preferred_element_type=jnp.float32)
        acc_ref[...] = acc

        @pl.when(k == n_k - 1)
        def _finalize():
            y_ref[0] = acc.reshape(ho, wo, acc.shape[-1]).astype(y_ref.dtype)
            # Fused per-channel BatchNorm statistics (sum, sum of squares),
            # computed from the exact f32 accumulator.
            st_ref[0, 0:1, :] = jnp.sum(acc, axis=0, keepdims=True)
            st_ref[0, 1:2, :] = jnp.sum(acc * acc, axis=0, keepdims=True)

    return kernel


def _conv_phases(x, ksize, stride):
    """Rearrange x (N, H, W, Cp) so every conv tap is a contiguous window.

    Returns (phases [N*P, Hph, Wph, Cp], taps [(phase, oy, ox)], P, Ho, Wo).
    """
    # TODO(synk): the stride-2 tap windows are not expressible as a BlockSpec
    # index_map (strided windows), so the parity-phase rearrangement below is
    # done once in XLA glue (~1x data movement) instead of inside the kernel.
    n, h, w, cp = x.shape
    if ksize == 1:
        ho = (h - 1) // stride + 1
        wo = (w - 1) // stride + 1
        ph = x[:, ::stride, ::stride, :][:, :ho, :wo, :]
        return ph, [(0, 0, 0)], 1, ho, wo
    assert ksize == 3
    ho = (h + 2 - 3) // stride + 1
    wo = (w + 2 - 3) // stride + 1
    xp = jnp.pad(x, ((0, 0), (1, 1), (1, 1), (0, 0)))
    if stride == 1:
        taps = [(0, dy, dx) for dy in range(3) for dx in range(3)]
        return xp, taps, 1, ho, wo
    assert stride == 2
    # Parity-phase decomposition: tap (dy, dx) of the strided conv becomes a
    # contiguous (Ho, Wo) window of phase (dy % 2, dx % 2) at offset
    # (dy // 2, dx // 2).
    phs = []
    for py in range(2):
        for px in range(2):
            phase = xp[:, py::2, px::2, :][:, :ho + 1, :wo + 1, :]
            pad_h = ho + 1 - phase.shape[1]
            pad_w = wo + 1 - phase.shape[2]
            if pad_h or pad_w:
                phase = jnp.pad(phase, ((0, 0), (0, pad_h), (0, pad_w), (0, 0)))
            phs.append(phase)
    phases = jnp.stack(phs, axis=1).reshape(n * 4, ho + 1, wo + 1, cp)
    taps = [((dy % 2) * 2 + (dx % 2), dy // 2, dx // 2)
            for dy in range(3) for dx in range(3)]
    return phases, taps, 4, ho, wo


def conv2d_with_stats(x, w_pt, ksize, stride):
    """Direct conv (bias=False) + fused per-channel sum/sumsq statistics.

    x: (N, H, W, Cinp) bf16, channel-padded; w_pt: (Cout, Cin, k, k) f32.
    Returns y (N, Ho, Wo, Coutp) bf16 and stats (2, Coutp) f32.
    """
    n = x.shape[0]
    cinp = x.shape[-1]
    cout, cin = w_pt.shape[0], w_pt.shape[1]
    coutp = _round_channels(cout)
    n_taps = ksize * ksize

    # (Cout, Cin, kh, kw) -> (kh*kw, Cinp, Coutp), bf16 for the MXU.
    wm = jnp.transpose(w_pt, (2, 3, 1, 0)).reshape(n_taps, cin, cout)
    wm = jnp.pad(wm, ((0, 0), (0, cinp - cin), (0, coutp - cout)))
    wm = wm.astype(jnp.bfloat16)

    phases, taps, n_ph, ho, wo = _conv_phases(x, ksize, stride)
    hph, wph = phases.shape[1], phases.shape[2]
    tck = _chan_tile(cinp)
    tcn = _chan_tile(coutp)
    n_k = cinp // tck

    y, st = pl.pallas_call(
        _make_conv_kernel(taps, ho, wo, n_k),
        out_shape=(
            jax.ShapeDtypeStruct((n, ho, wo, coutp), jnp.bfloat16),
            jax.ShapeDtypeStruct((n, 2, coutp), jnp.float32),
        ),
        grid=(n, coutp // tcn, n_k),
        in_specs=[
            pl.BlockSpec((n_ph, hph, wph, tck), lambda b, j, k: (b, 0, 0, k)),
            pl.BlockSpec((n_taps, tck, tcn), lambda b, j, k: (0, k, j)),
        ],
        out_specs=(
            pl.BlockSpec((1, ho, wo, tcn), lambda b, j, k: (b, 0, 0, j)),
            pl.BlockSpec((1, 2, tcn), lambda b, j, k: (b, 0, j)),
        ),
        scratch_shapes=[pltpu.VMEM((ho * wo, tcn), jnp.float32)],
        compiler_params=pltpu.CompilerParams(
            dimension_semantics=("parallel", "parallel", "arbitrary"),
            vmem_limit_bytes=VMEM_LIMIT),
    )(phases, wm)
    return y, jnp.sum(st, axis=0)


def _bn_scale_bias(stats, gamma, beta, count, coutp):
    """Training-mode BatchNorm: batch mean / biased variance from fused stats."""
    cout = gamma.shape[0]
    mean = stats[0, :cout] / count
    var = jnp.maximum(stats[1, :cout] / count - mean * mean, 0.0)
    scale = gamma / jnp.sqrt(var + BN_EPS)
    bias = beta - mean * scale
    pad = coutp - cout
    return jnp.pad(scale, (0, pad)), jnp.pad(bias, (0, pad))


# ---------------------------------------------------------------------------
# fused BN-apply (+ optional residual) + ReLU elementwise kernel
# ---------------------------------------------------------------------------
def _bn_relu_kernel(a_ref, p_ref, o_ref):
    y = a_ref[...].astype(jnp.float32) * p_ref[0:1, :] + p_ref[2:3, :]
    o_ref[...] = jnp.maximum(y, 0.0).astype(o_ref.dtype)


def _bn_res_relu_kernel(a_ref, r_ref, p_ref, o_ref):
    y = (a_ref[...].astype(jnp.float32) * p_ref[0:1, :]
         + r_ref[...].astype(jnp.float32) * p_ref[1:2, :]
         + p_ref[2:3, :])
    o_ref[...] = jnp.maximum(y, 0.0).astype(o_ref.dtype)


def bn_act(a, r, scale_a, scale_r, bias):
    """relu(scale_a * a + scale_r * r + bias) with per-channel params.

    a, r: (N, Ho, Wo, Cp) bf16 (r may be None); returns bf16, shape of a.
    """
    n, ho, wo, cp = a.shape
    m = n * ho * wo
    a2 = a.reshape(m, cp)
    has_res = r is not None
    if scale_r is None:
        scale_r = jnp.zeros((cp,), jnp.float32)
    params = jnp.stack([scale_a, scale_r, bias]).astype(jnp.float32)  # (3, Cp)

    tm, mp = _row_tiling(m)
    if mp != m:  # rare fallback; common path needs no pad/slice copies
        a2 = jnp.pad(a2, ((0, mp - m), (0, 0)))
    row_spec = pl.BlockSpec((tm, cp), lambda i: (i, 0))
    par_spec = pl.BlockSpec((3, cp), lambda i: (0, 0))

    if has_res:
        r2 = r.reshape(m, cp)
        if mp != m:
            r2 = jnp.pad(r2, ((0, mp - m), (0, 0)))
        kernel, ins = _bn_res_relu_kernel, (a2, r2, params)
        in_specs = [row_spec, row_spec, par_spec]
    else:
        kernel, ins = _bn_relu_kernel, (a2, params)
        in_specs = [row_spec, par_spec]

    out = pl.pallas_call(
        kernel,
        out_shape=jax.ShapeDtypeStruct((mp, cp), jnp.bfloat16),
        grid=(mp // tm,),
        in_specs=in_specs,
        out_specs=row_spec,
        compiler_params=pltpu.CompilerParams(
            dimension_semantics=("parallel",),
            vmem_limit_bytes=VMEM_LIMIT),
    )(*ins)
    if mp != m:
        out = out[:m]
    return out.reshape(n, ho, wo, cp)


# ---------------------------------------------------------------------------
# ResNet block / layer
# ---------------------------------------------------------------------------
def resnet_block_forward(x, p):
    """x: (N, H, W, Cp) bf16, channel-padded.  One ResNetBlock forward."""
    stride = p["stride"]

    # conv1 -> norm1 -> relu  (stats fused into conv; apply+relu fused kernel)
    y1, st1 = conv2d_with_stats(x, p["conv1_w"], 3, stride)
    n, ho, wo, cp = y1.shape
    count = n * ho * wo
    s1, b1 = _bn_scale_bias(st1, p["norm1_gamma"], p["norm1_beta"], count, cp)
    a1 = bn_act(y1, None, s1, None, b1)

    # conv2 -> norm2
    y2, st2 = conv2d_with_stats(a1, p["conv2_w"], 3, 1)
    s2, b2 = _bn_scale_bias(st2, p["norm2_gamma"], p["norm2_beta"], count, cp)

    # residual: downsample(inp) = 1x1 conv + BN, or identity
    if p["has_downsample"]:
        yd, std = conv2d_with_stats(x, p["down_conv_w"], 1, stride)
        sd, bd = _bn_scale_bias(std, p["down_gamma"], p["down_beta"], count, cp)
        return bn_act(y2, yd, s2, sd, b2 + bd)          # single folded bias
    return bn_act(y2, x, s2, jnp.ones((cp,), jnp.float32), b2)


def init_resnet_layer(key, n_layers, in_channel, out_channel, stride):
    blocks = []
    cin, s = in_channel, stride
    for _ in range(n_layers):
        key, k0, k1, k2, k3, k4, k5 = jax.random.split(key, 7)
        p = {
            "stride": s,
            "conv1_w": 0.1 * jax.random.normal(k0, (out_channel, cin, 3, 3), jnp.float32),
            "norm1_gamma": 1.0 + 0.1 * jax.random.normal(k1, (out_channel,), jnp.float32),
            "norm1_beta": 0.1 * jax.random.normal(k2, (out_channel,), jnp.float32),
            "conv2_w": 0.1 * jax.random.normal(k3, (out_channel, out_channel, 3, 3), jnp.float32),
            "norm2_gamma": 1.0 + 0.1 * jax.random.normal(k4, (out_channel,), jnp.float32),
            "norm2_beta": 0.1 * jax.random.normal(k5, (out_channel,), jnp.float32),
            "has_downsample": (s != 1 or cin != out_channel),
        }
        if p["has_downsample"]:
            key, kd0, kd1, kd2 = jax.random.split(key, 4)
            p["down_conv_w"] = 0.1 * jax.random.normal(kd0, (out_channel, cin, 1, 1), jnp.float32)
            p["down_gamma"] = 1.0 + 0.1 * jax.random.normal(kd1, (out_channel,), jnp.float32)
            p["down_beta"] = 0.1 * jax.random.normal(kd2, (out_channel,), jnp.float32)
        blocks.append(p)
        cin, s = out_channel, 1
    return blocks


def resnet_layer_forward(x_nchw, blocks):
    """x_nchw: [N, C, H, W] f32 (PyTorch layout). Returns NCHW f32 output."""
    x = jnp.transpose(x_nchw, (0, 2, 3, 1))                 # NCHW -> NHWC
    cin = x.shape[-1]
    cinp = _round_channels(cin)
    x = jnp.pad(x, ((0, 0), (0, 0), (0, 0), (0, cinp - cin)))
    x = x.astype(jnp.bfloat16)                              # lane-dense bf16 internals
    for p in blocks:
        x = resnet_block_forward(x, p)
    cout = blocks[-1]["norm2_gamma"].shape[0]
    x = x[..., :cout].astype(jnp.float32)                   # drop channel padding
    return jnp.transpose(x, (0, 3, 1, 2))                   # NHWC -> NCHW


# ---------------------------------------------------------------------------
if __name__ == "__main__":
    key = jax.random.PRNGKey(0)
    kx, kp = jax.random.split(key)

    # ResNetLayer(n_layers=2, in_channel=4, out_channel=8, stride=2)
    x = jax.random.normal(kx, (2, 4, 16, 16), jnp.float32)
    blocks = init_resnet_layer(kp, n_layers=2, in_channel=4,
                               out_channel=8, stride=2)

    fwd = jax.jit(lambda inp: resnet_layer_forward(inp, blocks))
    out = jax.block_until_ready(fwd(x))

    assert out.shape == (2, 8, 8, 8), out.shape
    assert bool(jnp.all(jnp.isfinite(out)))
    assert bool(jnp.all(out >= 0.0))  # final ReLU
    print("KERNEL_OK")
</pallas_src>

<mosaic_0001>
module attributes {stable_mosaic.version = 11 : i64} {
  func.func @kernel(%arg0: i32, %arg1: i32, %arg2: i32, %arg3: memref<1x8x8x128xbf16, #tpu.memory_space<vmem>>, %arg4: memref<1x128x128xbf16, #tpu.memory_space<vmem>>, %arg5: memref<1x8x8x128xbf16, #tpu.memory_space<vmem>>, %arg6: memref<1x2x128xf32, #tpu.memory_space<vmem>>, %arg7: memref<64x128xf32, #tpu.memory_space<vmem>>) attributes {dimension_semantics = [#tpu.dimension_semantics<parallel>, #tpu.dimension_semantics<parallel>, #tpu.dimension_semantics<arbitrary>], iteration_bounds = array<i64: 2, 1, 1>, scalar_prefetch = 0 : i64, scratch_operands = 1 : i64, tpu.core_type = #tpu.core_type<tc>, window_params = [{transform_indices = @transform_0, window_bounds = array<i64: 1, 8, 8, 128>}, {transform_indices = @transform_1, window_bounds = array<i64: 1, 128, 128>}, {transform_indices = @transform_2, window_bounds = array<i64: 1, 8, 8, 128>}, {transform_indices = @transform_3, window_bounds = array<i64: 1, 2, 128>}]} {
    %c0_i32 = arith.constant 0 : i32
    %0 = arith.cmpi eq, %arg2, %c0_i32 : i32
    %1 = arith.extui %0 : i1 to i32
    %c0_i32_0 = arith.constant 0 : i32
    %2 = arith.cmpi ne, %1, %c0_i32_0 : i32
    scf.if %2 {
      %cst_13 = arith.constant 0.000000e+00 : f32
      %15 = vector.broadcast %cst_13 : f32 to vector<64x128xf32>
      %c0_14 = arith.constant 0 : index
      %c0_15 = arith.constant 0 : index
      %16 = vector.load %arg7[%c0_14, %c0_15] : memref<64x128xf32, #tpu.memory_space<vmem>>, vector<64x128xf32>
      tpu.vector_store %arg7[%c0_14, %c0_15], %15 {strides = array<i32>} : memref<64x128xf32, #tpu.memory_space<vmem>>, vector<64x128xf32>,
    } else {
    }
    %c0 = arith.constant 0 : index
    %c0_1 = arith.constant 0 : index
    %3 = vector.load %arg7[%c0, %c0_1] : memref<64x128xf32, #tpu.memory_space<vmem>>, vector<64x128xf32>
    %c0_2 = arith.constant 0 : index
    %c0_3 = arith.constant 0 : index
    %c0_4 = arith.constant 0 : index
    %c0_5 = arith.constant 0 : index
    %4 = vector.load %arg3[%c0_2, %c0_3, %c0_4, %c0_5] : memref<1x8x8x128xbf16, #tpu.memory_space<vmem>>, vector<1x8x8x128xbf16>
    %5 = vector.shape_cast %4 : vector<1x8x8x128xbf16> to vector<8x8x128xbf16>
    %6 = vector.shape_cast %5 : vector<8x8x128xbf16> to vector<64x128xbf16>
    %c0_6 = arith.constant 0 : index
    %c0_7 = arith.constant 0 : index
    %c0_8 = arith.constant 0 : index
    %7 = vector.load %arg4[%c0_6, %c0_7, %c0_8] : memref<1x128x128xbf16, #tpu.memory_space<vmem>>, vector<1x128x128xbf16>
    %8 = vector.shape_cast %7 : vector<1x128x128xbf16> to vector<128x128xbf16>
    %cst = arith.constant dense<0.000000e+00> : vector<64x128xf32>
    %9 = tpu.matmul %6, %8, %cst {dimension_numbers = #tpu.dot_dimension_numbers<[1], [0], [0], [1], [0, 0, 1, 1], [], []>} : vector<64x128xbf16>, vector<128x128xbf16>, vector<64x128xf32> -> vector<64x128xf32>
    %10 = arith.addf %3, %9 : vector<64x128xf32>
    %c0_9 = arith.constant 0 : index
    %c0_10 = arith.constant 0 : index
    %11 = vector.load %arg7[%c0_9, %c0_10] : memref<64x128xf32, #tpu.memory_space<vmem>>, vector<64x128xf32>
    tpu.vector_store %arg7[%c0_9, %c0_10], %10 {strides = array<i32>} : memref<64x128xf32, #tpu.memory_space<vmem>>, vector<64x128xf32>,
    %c0_i32_11 = arith.constant 0 : i32
    %12 = arith.cmpi eq, %arg2, %c0_i32_11 : i32
    %13 = arith.extui %12 : i1 to i32
    %c0_i32_12 = arith.constant 0 : i32
    %14 = arith.cmpi ne, %13, %c0_i32_12 : i32
    scf.if %14 {
      %15 = vector.shape_cast %10 : vector<64x128xf32> to vector<8x8x128xf32>
      %16 = arith.truncf %15 : vector<8x8x128xf32> to vector<8x8x128xbf16>
      %c0_13 = arith.constant 0 : index
      %c0_14 = arith.constant 0 : index
      %c0_15 = arith.constant 0 : index
      %c0_16 = arith.constant 0 : index
      %17 = vector.load %arg5[%c0_13, %c0_14, %c0_15, %c0_16] : memref<1x8x8x128xbf16, #tpu.memory_space<vmem>>, vector<1x8x8x128xbf16>
      %18 = vector.shape_cast %17 : vector<1x8x8x128xbf16> to vector<8x8x128xbf16>
      %19 = vector.shape_cast %16 : vector<8x8x128xbf16> to vector<1x8x8x128xbf16>
      tpu.vector_store %arg5[%c0_13, %c0_14, %c0_15, %c0_16], %19 {strides = array<i32>} : memref<1x8x8x128xbf16, #tpu.memory_space<vmem>>, vector<1x8x8x128xbf16>,
      %cst_17 = arith.constant dense<0.000000e+00> : vector<128xf32>
      %20 = vector.multi_reduction <add>, %10, %cst_17 [0] : vector<64x128xf32> to vector<128xf32>
      %21 = vector.shape_cast %20 : vector<128xf32> to vector<1x128xf32>
      %c0_18 = arith.constant 0 : index
      %c0_19 = arith.constant 0 : index
      %c0_20 = arith.constant 0 : index
      %22 = vector.load %arg6[%c0_18, %c0_19, %c0_20] : memref<1x2x128xf32, #tpu.memory_space<vmem>>, vector<1x1x128xf32>
      %23 = vector.shape_cast %22 : vector<1x1x128xf32> to vector<1x128xf32>
      %24 = vector.shape_cast %21 : vector<1x128xf32> to vector<1x1x128xf32>
      tpu.vector_store %arg6[%c0_18, %c0_19, %c0_20], %24 {strides = array<i32>} : memref<1x2x128xf32, #tpu.memory_space<vmem>>, vector<1x1x128xf32>,
      %25 = arith.mulf %10, %10 : vector<64x128xf32>
      %cst_21 = arith.constant dense<0.000000e+00> : vector<128xf32>
      %26 = vector.multi_reduction <add>, %25, %cst_21 [0] : vector<64x128xf32> to vector<128xf32>
      %27 = vector.shape_cast %26 : vector<128xf32> to vector<1x128xf32>
      %c0_22 = arith.constant 0 : index
      %c1 = arith.constant 1 : index
      %c0_23 = arith.constant 0 : index
      %28 = vector.load %arg6[%c0_22, %c1, %c0_23] : memref<1x2x128xf32, #tpu.memory_space<vmem>>, vector<1x1x128xf32>
      %29 = vector.shape_cast %28 : vector<1x1x128xf32> to vector<1x128xf32>
      %30 = vector.shape_cast %27 : vector<1x128xf32> to vector<1x1x128xf32>
      tpu.vector_store %arg6[%c0_22, %c1, %c0_23], %30 {strides = array<i32>} : memref<1x2x128xf32, #tpu.memory_space<vmem>>, vector<1x1x128xf32>,
    } else {
    }
    return
  }
  func.func @transform_0(%arg0: i32, %arg1: i32, %arg2: i32) -> (i32, i32, i32, i32) {
    %c0_i32 = arith.constant 0 : i32
    %c0_i32_0 = arith.constant 0 : i32
    %c0_i32_1 = arith.constant 0 : i32
    return %arg0, %c0_i32, %c0_i32_0, %arg2 : i32, i32, i32, i32
  }
  func.func @transform_1(%arg0: i32, %arg1: i32, %arg2: i32) -> (i32, i32, i32) {
    %c0_i32 = arith.constant 0 : i32
    %c0_i32_0 = arith.constant 0 : i32
    return %c0_i32, %arg2, %arg1 : i32, i32, i32
  }
  func.func @transform_2(%arg0: i32, %arg1: i32, %arg2: i32) -> (i32, i32, i32, i32) {
    %c0_i32 = arith.constant 0 : i32
    %c0_i32_0 = arith.constant 0 : i32
    %c0_i32_1 = arith.constant 0 : i32
    return %arg0, %c0_i32, %c0_i32_0, %arg1 : i32, i32, i32, i32
  }
  func.func @transform_3(%arg0: i32, %arg1: i32, %arg2: i32) -> (i32, i32, i32) {
    %c0_i32 = arith.constant 0 : i32
    %c0_i32_0 = arith.constant 0 : i32
    return %arg0, %c0_i32, %arg1 : i32, i32, i32
  }
}

module attributes {stable_mosaic.version = 11 : i64} {
  func.func @kernel(%arg0: i32, %arg1: i32, %arg2: i32, %arg3: memref<4x9x9x128xbf16, #tpu.memory_space<vmem>>, %arg4: memref<9x128x128xbf16, #tpu.memory_space<vmem>>, %arg5: memref<1x8x8x128xbf16, #tpu.memory_space<vmem>>, %arg6: memref<1x2x128xf32, #tpu.memory_space<vmem>>, %arg7: memref<64x128xf32, #tpu.memory_space<vmem>>) attributes {dimension_semantics = [#tpu.dimension_semantics<parallel>, #tpu.dimension_semantics<parallel>, #tpu.dimension_semantics<arbitrary>], iteration_bounds = array<i64: 2, 1, 1>, scalar_prefetch = 0 : i64, scratch_operands = 1 : i64, tpu.core_type = #tpu.core_type<tc>, window_params = [{transform_indices = @transform_0, window_bounds = array<i64: 4, 9, 9, 128>}, {transform_indices = @transform_1, window_bounds = array<i64: 9, 128, 128>}, {transform_indices = @transform_2, window_bounds = array<i64: 1, 8, 8, 128>}, {transform_indices = @transform_3, window_bounds = array<i64: 1, 2, 128>}]} {
    %c0_i32 = arith.constant 0 : i32
    %0 = arith.cmpi eq, %arg2, %c0_i32 : i32
    %1 = arith.extui %0 : i1 to i32
    %c0_i32_0 = arith.constant 0 : i32
    %2 = arith.cmpi ne, %1, %c0_i32_0 : i32
    scf.if %2 {
      %cst_69 = arith.constant 0.000000e+00 : f32
      %71 = vector.broadcast %cst_69 : f32 to vector<64x128xf32>
      %c0_70 = arith.constant 0 : index
      %c0_71 = arith.constant 0 : index
      %72 = vector.load %arg7[%c0_70, %c0_71] : memref<64x128xf32, #tpu.memory_space<vmem>>, vector<64x128xf32>
      tpu.vector_store %arg7[%c0_70, %c0_71], %71 {strides = array<i32>} : memref<64x128xf32, #tpu.memory_space<vmem>>, vector<64x128xf32>,
    } else {
    }
    %c0 = arith.constant 0 : index
    %c0_1 = arith.constant 0 : index
    %3 = vector.load %arg7[%c0, %c0_1] : memref<64x128xf32, #tpu.memory_space<vmem>>, vector<64x128xf32>
    %c0_2 = arith.constant 0 : index
    %c0_3 = arith.constant 0 : index
    %c0_4 = arith.constant 0 : index
    %c0_5 = arith.constant 0 : index
    %4 = vector.load %arg3[%c0_2, %c0_3, %c0_4, %c0_5] : memref<4x9x9x128xbf16, #tpu.memory_space<vmem>>, vector<1x8x8x128xbf16>
    %5 = vector.shape_cast %4 : vector<1x8x8x128xbf16> to vector<8x8x128xbf16>
    %6 = vector.shape_cast %5 : vector<8x8x128xbf16> to vector<64x128xbf16>
    %c0_6 = arith.constant 0 : index
    %c0_7 = arith.constant 0 : index
    %c0_8 = arith.constant 0 : index
    %7 = vector.load %arg4[%c0_6, %c0_7, %c0_8] : memref<9x128x128xbf16, #tpu.memory_space<vmem>>, vector<1x128x128xbf16>
    %8 = vector.shape_cast %7 : vector<1x128x128xbf16> to vector<128x128xbf16>
    %cst = arith.constant dense<0.000000e+00> : vector<64x128xf32>
    %9 = tpu.matmul %6, %8, %cst {dimension_numbers = #tpu.dot_dimension_numbers<[1], [0], [0], [1], [0, 0, 1, 1], [], []>} : vector<64x128xbf16>, vector<128x128xbf16>, vector<64x128xf32> -> vector<64x128xf32>
    %10 = arith.addf %3, %9 : vector<64x128xf32>
    %c1 = arith.constant 1 : index
    %c0_9 = arith.constant 0 : index
    %c0_10 = arith.constant 0 : index
    %c0_11 = arith.constant 0 : index
    %11 = vector.load %arg3[%c1, %c0_9, %c0_10, %c0_11] : memref<4x9x9x128xbf16, #tpu.memory_space<vmem>>, vector<1x8x8x128xbf16>
    %12 = vector.shape_cast %11 : vector<1x8x8x128xbf16> to vector<8x8x128xbf16>
    %13 = vector.shape_cast %12 : vector<8x8x128xbf16> to vector<64x128xbf16>
    %c1_12 = arith.constant 1 : index
    %c0_13 = arith.constant 0 : index
    %c0_14 = arith.constant 0 : index
    %14 = vector.load %arg4[%c1_12, %c0_13, %c0_14] : memref<9x128x128xbf16, #tpu.memory_space<vmem>>, vector<1x128x128xbf16>
    %15 = vector.shape_cast %14 : vector<1x128x128xbf16> to vector<128x128xbf16>
    %cst_15 = arith.constant dense<0.000000e+00> : vector<64x128xf32>
    %16 = tpu.matmul %13, %15, %cst_15 {dimension_numbers = #tpu.dot_dimension_numbers<[1], [0], [0], [1], [0, 0, 1, 1], [], []>} : vector<64x128xbf16>, vector<128x128xbf16>, vector<64x128xf32> -> vector<64x128xf32>
    %17 = arith.addf %10, %16 : vector<64x128xf32>
    %c0_16 = arith.constant 0 : index
    %c0_17 = arith.constant 0 : index
    %c1_18 = arith.constant 1 : index
    %c0_19 = arith.constant 0 : index
    %18 = vector.load %arg3[%c0_16, %c0_17, %c1_18, %c0_19] : memref<4x9x9x128xbf16, #tpu.memory_space<vmem>>, vector<1x8x8x128xbf16>
    %19 = vector.shape_cast %18 : vector<1x8x8x128xbf16> to vector<8x8x128xbf16>
    %20 = vector.shape_cast %19 : vector<8x8x128xbf16> to vector<64x128xbf16>
    %c2 = arith.constant 2 : index
    %c0_20 = arith.constant 0 : index
    %c0_21 = arith.constant 0 : index
    %21 = vector.load %arg4[%c2, %c0_20, %c0_21] : memref<9x128x128xbf16, #tpu.memory_space<vmem>>, vector<1x128x128xbf16>
    %22 = vector.shape_cast %21 : vector<1x128x128xbf16> to vector<128x128xbf16>
    %cst_22 = arith.constant dense<0.000000e+00> : vector<64x128xf32>
    %23 = tpu.matmul %20, %22, %cst_22 {dimension_numbers = #tpu.dot_dimension_numbers<[1], [0], [0], [1], [0, 0, 1, 1], [], []>} : vector<64x128xbf16>, vector<128x128xbf16>, vector<64x128xf32> -> vector<64x128xf32>
    %24 = arith.addf %17, %23 : vector<64x128xf32>
    %c2_23 = arith.constant 2 : index
    %c0_24 = arith.constant 0 : index
    %c0_25 = arith.constant 0 : index
    %c0_26 = arith.constant 0 : index
    %25 = vector.load %arg3[%c2_23, %c0_24, %c0_25, %c0_26] : memref<4x9x9x128xbf16, #tpu.memory_space<vmem>>, vector<1x8x8x128xbf16>
    %26 = vector.shape_cast %25 : vector<1x8x8x128xbf16> to vector<8x8x128xbf16>
    %27 = vector.shape_cast %26 : vector<8x8x128xbf16> to vector<64x128xbf16>
    %c3 = arith.constant 3 : index
    %c0_27 = arith.constant 0 : index
    %c0_28 = arith.constant 0 : index
    %28 = vector.load %arg4[%c3, %c0_27, %c0_28] : memref<9x128x128xbf16, #tpu.memory_space<vmem>>, vector<1x128x128xbf16>
    %29 = vector.shape_cast %28 : vector<1x128x128xbf16> to vector<128x128xbf16>
    %cst_29 = arith.constant dense<0.000000e+00> : vector<64x128xf32>
    %30 = tpu.matmul %27, %29, %cst_29 {dimension_numbers = #tpu.dot_dimension_numbers<[1], [0], [0], [1], [0, 0, 1, 1], [], []>} : vector<64x128xbf16>, vector<128x128xbf16>, vector<64x128xf32> -> vector<64x128xf32>
    %31 = arith.addf %24, %30 : vector<64x128xf32>
    %c3_30 = arith.constant 3 : index
    %c0_31 = arith.constant 0 : index
    %c0_32 = arith.constant 0 : index
    %c0_33 = arith.constant 0 : index
    %32 = vector.load %arg3[%c3_30, %c0_31, %c0_32, %c0_33] : memref<4x9x9x128xbf16, #tpu.memory_space<vmem>>, vector<1x8x8x128xbf16>
    %33 = vector.shape_cast %32 : vector<1x8x8x128xbf16> to vector<8x8x128xbf16>
    %34 = vector.shape_cast %33 : vector<8x8x128xbf16> to vector<64x128xbf16>
    %c4 = arith.constant 4 : index
    %c0_34 = arith.constant 0 : index
    %c0_35 = arith.constant 0 : index
    %35 = vector.load %arg4[%c4, %c0_34, %c0_35] : memref<9x128x128xbf16, #tpu.memory_space<vmem>>, vector<1x128x128xbf16>
    %36 = vector.shape_cast %35 : vector<1x128x128xbf16> to vector<128x128xbf16>
    %cst_36 = arith.constant dense<0.000000e+00> : vector<64x128xf32>
    %37 = tpu.matmul %34, %36, %cst_36 {dimension_numbers = #tpu.dot_dimension_numbers<[1], [0], [0], [1], [0, 0, 1, 1], [], []>} : vector<64x128xbf16>, vector<128x128xbf16>, vector<64x128xf32> -> vector<64x128xf32>
    %38 = arith.addf %31, %37 : vector<64x128xf32>
    %c2_37 = arith.constant 2 : index
    %c0_38 = arith.constant 0 : index
    %c1_39 = arith.constant 1 : index
    %c0_40 = arith.constant 0 : index
    %39 = vector.load %arg3[%c2_37, %c0_38, %c1_39, %c0_40] : memref<4x9x9x128xbf16, #tpu.memory_space<vmem>>, vector<1x8x8x128xbf16>
    %40 = vector.shape_cast %39 : vector<1x8x8x128xbf16> to vector<8x8x128xbf16>
    %41 = vector.shape_cast %40 : vector<8x8x128xbf16> to vector<64x128xbf16>
    %c5 = arith.constant 5 : index
    %c0_41 = arith.constant 0 : index
    %c0_42 = arith.constant 0 : index
    %42 = vector.load %arg4[%c5, %c0_41, %c0_42] : memref<9x128x128xbf16, #tpu.memory_space<vmem>>, vector<1x128x128xbf16>
    %43 = vector.shape_cast %42 : vector<1x128x128xbf16> to vector<128x128xbf16>
    %cst_43 = arith.constant dense<0.000000e+00> : vector<64x128xf32>
    %44 = tpu.matmul %41, %43, %cst_43 {dimension_numbers = #tpu.dot_dimension_numbers<[1], [0], [0], [1], [0, 0, 1, 1], [], []>} : vector<64x128xbf16>, vector<128x128xbf16>, vector<64x128xf32> -> vector<64x128xf32>
    %45 = arith.addf %38, %44 : vector<64x128xf32>
    %c0_44 = arith.constant 0 : index
    %c1_45 = arith.constant 1 : index
    %c0_46 = arith.constant 0 : index
    %c0_47 = arith.constant 0 : index
    %46 = vector.load %arg3[%c0_44, %c1_45, %c0_46, %c0_47] : memref<4x9x9x128xbf16, #tpu.memory_space<vmem>>, vector<1x8x8x128xbf16>
    %47 = vector.shape_cast %46 : vector<1x8x8x128xbf16> to vector<8x8x128xbf16>
    %48 = vector.shape_cast %47 : vector<8x8x128xbf16> to vector<64x128xbf16>
    %c6 = arith.constant 6 : index
    %c0_48 = arith.constant 0 : index
    %c0_49 = arith.constant 0 : index
    %49 = vector.load %arg4[%c6, %c0_48, %c0_49] : memref<9x128x128xbf16, #tpu.memory_space<vmem>>, vector<1x128x128xbf16>
    %50 = vector.shape_cast %49 : vector<1x128x128xbf16> to vector<128x128xbf16>
    %cst_50 = arith.constant dense<0.000000e+00> : vector<64x128xf32>
    %51 = tpu.matmul %48, %50, %cst_50 {dimension_numbers = #tpu.dot_dimension_numbers<[1], [0], [0], [1], [0, 0, 1, 1], [], []>} : vector<64x128xbf16>, vector<128x128xbf16>, vector<64x128xf32> -> vector<64x128xf32>
    %52 = arith.addf %45, %51 : vector<64x128xf32>
    %c1_51 = arith.constant 1 : index
    %c1_52 = arith.constant 1 : index
    %c0_53 = arith.constant 0 : index
    %c0_54 = arith.constant 0 : index
    %53 = vector.load %arg3[%c1_51, %c1_52, %c0_53, %c0_54] : memref<4x9x9x128xbf16, #tpu.memory_space<vmem>>, vector<1x8x8x128xbf16>
    %54 = vector.shape_cast %53 : vector<1x8x8x128xbf16> to vector<8x8x128xbf16>
    %55 = vector.shape_cast %54 : vector<8x8x128xbf16> to vector<64x128xbf16>
    %c7 = arith.constant 7 : index
    %c0_55 = arith.constant 0 : index
    %c0_56 = arith.constant 0 : index
    %56 = vector.load %arg4[%c7, %c0_55, %c0_56] : memref<9x128x128xbf16, #tpu.memory_space<vmem>>, vector<1x128x128xbf16>
    %57 = vector.shape_cast %56 : vector<1x128x128xbf16> to vector<128x128xbf16>
    %cst_57 = arith.constant dense<0.000000e+00> : vector<64x128xf32>
    %58 = tpu.matmul %55, %57, %cst_57 {dimension_numbers = #tpu.dot_dimension_numbers<[1], [0], [0], [1], [0, 0, 1, 1], [], []>} : vector<64x128xbf16>, vector<128x128xbf16>, vector<64x128xf32> -> vector<64x128xf32>
    %59 = arith.addf %52, %58 : vector<64x128xf32>
    %c0_58 = arith.constant 0 : index
    %c1_59 = arith.constant 1 : index
    %c1_60 = arith.constant 1 : index
    %c0_61 = arith.constant 0 : index
    %60 = vector.load %arg3[%c0_58, %c1_59, %c1_60, %c0_61] : memref<4x9x9x128xbf16, #tpu.memory_space<vmem>>, vector<1x8x8x128xbf16>
    %61 = vector.shape_cast %60 : vector<1x8x8x128xbf16> to vector<8x8x128xbf16>
    %62 = vector.shape_cast %61 : vector<8x8x128xbf16> to vector<64x128xbf16>
    %c8 = arith.constant 8 : index
    %c0_62 = arith.constant 0 : index
    %c0_63 = arith.constant 0 : index
    %63 = vector.load %arg4[%c8, %c0_62, %c0_63] : memref<9x128x128xbf16, #tpu.memory_space<vmem>>, vector<1x128x128xbf16>
    %64 = vector.shape_cast %63 : vector<1x128x128xbf16> to vector<128x128xbf16>
    %cst_64 = arith.constant dense<0.000000e+00> : vector<64x128xf32>
    %65 = tpu.matmul %62, %64, %cst_64 {dimension_numbers = #tpu.dot_dimension_numbers<[1], [0], [0], [1], [0, 0, 1, 1], [], []>} : vector<64x128xbf16>, vector<128x128xbf16>, vector<64x128xf32> -> vector<64x128xf32>
    %66 = arith.addf %59, %65 : vector<64x128xf32>
    %c0_65 = arith.constant 0 : index
    %c0_66 = arith.constant 0 : index
    %67 = vector.load %arg7[%c0_65, %c0_66] : memref<64x128xf32, #tpu.memory_space<vmem>>, vector<64x128xf32>
    tpu.vector_store %arg7[%c0_65, %c0_66], %66 {strides = array<i32>} : memref<64x128xf32, #tpu.memory_space<vmem>>, vector<64x128xf32>,
    %c0_i32_67 = arith.constant 0 : i32
    %68 = arith.cmpi eq, %arg2, %c0_i32_67 : i32
    %69 = arith.extui %68 : i1 to i32
    %c0_i32_68 = arith.constant 0 : i32
    %70 = arith.cmpi ne, %69, %c0_i32_68 : i32
    scf.if %70 {
      %71 = vector.shape_cast %66 : vector<64x128xf32> to vector<8x8x128xf32>
      %72 = arith.truncf %71 : vector<8x8x128xf32> to vector<8x8x128xbf16>
      %c0_69 = arith.constant 0 : index
      %c0_70 = arith.constant 0 : index
      %c0_71 = arith.constant 0 : index
      %c0_72 = arith.constant 0 : index
      %73 = vector.load %arg5[%c0_69, %c0_70, %c0_71, %c0_72] : memref<1x8x8x128xbf16, #tpu.memory_space<vmem>>, vector<1x8x8x128xbf16>
      %74 = vector.shape_cast %73 : vector<1x8x8x128xbf16> to vector<8x8x128xbf16>
      %75 = vector.shape_cast %72 : vector<8x8x128xbf16> to vector<1x8x8x128xbf16>
      tpu.vector_store %arg5[%c0_69, %c0_70, %c0_71, %c0_72], %75 {strides = array<i32>} : memref<1x8x8x128xbf16, #tpu.memory_space<vmem>>, vector<1x8x8x128xbf16>,
      %cst_73 = arith.constant dense<0.000000e+00> : vector<128xf32>
      %76 = vector.multi_reduction <add>, %66, %cst_73 [0] : vector<64x128xf32> to vector<128xf32>
      %77 = vector.shape_cast %76 : vector<128xf32> to vector<1x128xf32>
      %c0_74 = arith.constant 0 : index
      %c0_75 = arith.constant 0 : index
      %c0_76 = arith.constant 0 : index
      %78 = vector.load %arg6[%c0_74, %c0_75, %c0_76] : memref<1x2x128xf32, #tpu.memory_space<vmem>>, vector<1x1x128xf32>
      %79 = vector.shape_cast %78 : vector<1x1x128xf32> to vector<1x128xf32>
      %80 = vector.shape_cast %77 : vector<1x128xf32> to vector<1x1x128xf32>
      tpu.vector_store %arg6[%c0_74, %c0_75, %c0_76], %80 {strides = array<i32>} : memref<1x2x128xf32, #tpu.memory_space<vmem>>, vector<1x1x128xf32>,
      %81 = arith.mulf %66, %66 : vector<64x128xf32>
      %cst_77 = arith.constant dense<0.000000e+00> : vector<128xf32>
      %82 = vector.multi_reduction <add>, %81, %cst_77 [0] : vector<64x128xf32> to vector<128xf32>
      %83 = vector.shape_cast %82 : vector<128xf32> to vector<1x128xf32>
      %c0_78 = arith.constant 0 : index
      %c1_79 = arith.constant 1 : index
      %c0_80 = arith.constant 0 : index
      %84 = vector.load %arg6[%c0_78, %c1_79, %c0_80] : memref<1x2x128xf32, #tpu.memory_space<vmem>>, vector<1x1x128xf32>
      %85 = vector.shape_cast %84 : vector<1x1x128xf32> to vector<1x128xf32>
      %86 = vector.shape_cast %83 : vector<1x128xf32> to vector<1x1x128xf32>
      tpu.vector_store %arg6[%c0_78, %c1_79, %c0_80], %86 {strides = array<i32>} : memref<1x2x128xf32, #tpu.memory_space<vmem>>, vector<1x1x128xf32>,
    } else {
    }
    return
  }
  func.func @transform_0(%arg0: i32, %arg1: i32, %arg2: i32) -> (i32, i32, i32, i32) {
    %c0_i32 = arith.constant 0 : i32
    %c0_i32_0 = arith.constant 0 : i32
    %c0_i32_1 = arith.constant 0 : i32
    return %arg0, %c0_i32, %c0_i32_0, %arg2 : i32, i32, i32, i32
  }
  func.func @transform_1(%arg0: i32, %arg1: i32, %arg2: i32) -> (i32, i32, i32) {
    %c0_i32 = arith.constant 0 : i32
    %c0_i32_0 = arith.constant 0 : i32
    return %c0_i32, %arg2, %arg1 : i32, i32, i32
  }
  func.func @transform_2(%arg0: i32, %arg1: i32, %arg2: i32) -> (i32, i32, i32, i32) {
    %c0_i32 = arith.constant 0 : i32
    %c0_i32_0 = arith.constant 0 : i32
    %c0_i32_1 = arith.constant 0 : i32
    return %arg0, %c0_i32, %c0_i32_0, %arg1 : i32, i32, i32, i32
  }
  func.func @transform_3(%arg0: i32, %arg1: i32, %arg2: i32) -> (i32, i32, i32) {
    %c0_i32 = arith.constant 0 : i32
    %c0_i32_0 = arith.constant 0 : i32
    return %arg0, %c0_i32, %arg1 : i32, i32, i32
  }
}

module attributes {stable_mosaic.version = 11 : i64} {
  func.func @kernel(%arg0: i32, %arg1: i32, %arg2: i32, %arg3: memref<1x10x10x128xbf16, #tpu.memory_space<vmem>>, %arg4: memref<9x128x128xbf16, #tpu.memory_space<vmem>>, %arg5: memref<1x8x8x128xbf16, #tpu.memory_space<vmem>>, %arg6: memref<1x2x128xf32, #tpu.memory_space<vmem>>, %arg7: memref<64x128xf32, #tpu.memory_space<vmem>>) attributes {dimension_semantics = [#tpu.dimension_semantics<parallel>, #tpu.dimension_semantics<parallel>, #tpu.dimension_semantics<arbitrary>], iteration_bounds = array<i64: 2, 1, 1>, scalar_prefetch = 0 : i64, scratch_operands = 1 : i64, tpu.core_type = #tpu.core_type<tc>, window_params = [{transform_indices = @transform_0, window_bounds = array<i64: 1, 10, 10, 128>}, {transform_indices = @transform_1, window_bounds = array<i64: 9, 128, 128>}, {transform_indices = @transform_2, window_bounds = array<i64: 1, 8, 8, 128>}, {transform_indices = @transform_3, window_bounds = array<i64: 1, 2, 128>}]} {
    %c0_i32 = arith.constant 0 : i32
    %0 = arith.cmpi eq, %arg2, %c0_i32 : i32
    %1 = arith.extui %0 : i1 to i32
    %c0_i32_0 = arith.constant 0 : i32
    %2 = arith.cmpi ne, %1, %c0_i32_0 : i32
    scf.if %2 {
      %cst_69 = arith.constant 0.000000e+00 : f32
      %71 = vector.broadcast %cst_69 : f32 to vector<64x128xf32>
      %c0_70 = arith.constant 0 : index
      %c0_71 = arith.constant 0 : index
      %72 = vector.load %arg7[%c0_70, %c0_71] : memref<64x128xf32, #tpu.memory_space<vmem>>, vector<64x128xf32>
      tpu.vector_store %arg7[%c0_70, %c0_71], %71 {strides = array<i32>} : memref<64x128xf32, #tpu.memory_space<vmem>>, vector<64x128xf32>,
    } else {
    }
    %c0 = arith.constant 0 : index
    %c0_1 = arith.constant 0 : index
    %3 = vector.load %arg7[%c0, %c0_1] : memref<64x128xf32, #tpu.memory_space<vmem>>, vector<64x128xf32>
    %c0_2 = arith.constant 0 : index
    %c0_3 = arith.constant 0 : index
    %c0_4 = arith.constant 0 : index
    %c0_5 = arith.constant 0 : index
    %4 = vector.load %arg3[%c0_2, %c0_3, %c0_4, %c0_5] : memref<1x10x10x128xbf16, #tpu.memory_space<vmem>>, vector<1x8x8x128xbf16>
    %5 = vector.shape_cast %4 : vector<1x8x8x128xbf16> to vector<8x8x128xbf16>
    %6 = vector.shape_cast %5 : vector<8x8x128xbf16> to vector<64x128xbf16>
    %c0_6 = arith.constant 0 : index
    %c0_7 = arith.constant 0 : index
    %c0_8 = arith.constant 0 : index
    %7 = vector.load %arg4[%c0_6, %c0_7, %c0_8] : memref<9x128x128xbf16, #tpu.memory_space<vmem>>, vector<1x128x128xbf16>
    %8 = vector.shape_cast %7 : vector<1x128x128xbf16> to vector<128x128xbf16>
    %cst = arith.constant dense<0.000000e+00> : vector<64x128xf32>
    %9 = tpu.matmul %6, %8, %cst {dimension_numbers = #tpu.dot_dimension_numbers<[1], [0], [0], [1], [0, 0, 1, 1], [], []>} : vector<64x128xbf16>, vector<128x128xbf16>, vector<64x128xf32> -> vector<64x128xf32>
    %10 = arith.addf %3, %9 : vector<64x128xf32>
    %c0_9 = arith.constant 0 : index
    %c0_10 = arith.constant 0 : index
    %c1 = arith.constant 1 : index
    %c0_11 = arith.constant 0 : index
    %11 = vector.load %arg3[%c0_9, %c0_10, %c1, %c0_11] : memref<1x10x10x128xbf16, #tpu.memory_space<vmem>>, vector<1x8x8x128xbf16>
    %12 = vector.shape_cast %11 : vector<1x8x8x128xbf16> to vector<8x8x128xbf16>
    %13 = vector.shape_cast %12 : vector<8x8x128xbf16> to vector<64x128xbf16>
    %c1_12 = arith.constant 1 : index
    %c0_13 = arith.constant 0 : index
    %c0_14 = arith.constant 0 : index
    %14 = vector.load %arg4[%c1_12, %c0_13, %c0_14] : memref<9x128x128xbf16, #tpu.memory_space<vmem>>, vector<1x128x128xbf16>
    %15 = vector.shape_cast %14 : vector<1x128x128xbf16> to vector<128x128xbf16>
    %cst_15 = arith.constant dense<0.000000e+00> : vector<64x128xf32>
    %16 = tpu.matmul %13, %15, %cst_15 {dimension_numbers = #tpu.dot_dimension_numbers<[1], [0], [0], [1], [0, 0, 1, 1], [], []>} : vector<64x128xbf16>, vector<128x128xbf16>, vector<64x128xf32> -> vector<64x128xf32>
    %17 = arith.addf %10, %16 : vector<64x128xf32>
    %c0_16 = arith.constant 0 : index
    %c0_17 = arith.constant 0 : index
    %c2 = arith.constant 2 : index
    %c0_18 = arith.constant 0 : index
    %18 = vector.load %arg3[%c0_16, %c0_17, %c2, %c0_18] : memref<1x10x10x128xbf16, #tpu.memory_space<vmem>>, vector<1x8x8x128xbf16>
    %19 = vector.shape_cast %18 : vector<1x8x8x128xbf16> to vector<8x8x128xbf16>
    %20 = vector.shape_cast %19 : vector<8x8x128xbf16> to vector<64x128xbf16>
    %c2_19 = arith.constant 2 : index
    %c0_20 = arith.constant 0 : index
    %c0_21 = arith.constant 0 : index
    %21 = vector.load %arg4[%c2_19, %c0_20, %c0_21] : memref<9x128x128xbf16, #tpu.memory_space<vmem>>, vector<1x128x128xbf16>
    %22 = vector.shape_cast %21 : vector<1x128x128xbf16> to vector<128x128xbf16>
    %cst_22 = arith.constant dense<0.000000e+00> : vector<64x128xf32>
    %23 = tpu.matmul %20, %22, %cst_22 {dimension_numbers = #tpu.dot_dimension_numbers<[1], [0], [0], [1], [0, 0, 1, 1], [], []>} : vector<64x128xbf16>, vector<128x128xbf16>, vector<64x128xf32> -> vector<64x128xf32>
    %24 = arith.addf %17, %23 : vector<64x128xf32>
    %c0_23 = arith.constant 0 : index
    %c1_24 = arith.constant 1 : index
    %c0_25 = arith.constant 0 : index
    %c0_26 = arith.constant 0 : index
    %25 = vector.load %arg3[%c0_23, %c1_24, %c0_25, %c0_26] : memref<1x10x10x128xbf16, #tpu.memory_space<vmem>>, vector<1x8x8x128xbf16>
    %26 = vector.shape_cast %25 : vector<1x8x8x128xbf16> to vector<8x8x128xbf16>
    %27 = vector.shape_cast %26 : vector<8x8x128xbf16> to vector<64x128xbf16>
    %c3 = arith.constant 3 : index
    %c0_27 = arith.constant 0 : index
    %c0_28 = arith.constant 0 : index
    %28 = vector.load %arg4[%c3, %c0_27, %c0_28] : memref<9x128x128xbf16, #tpu.memory_space<vmem>>, vector<1x128x128xbf16>
    %29 = vector.shape_cast %28 : vector<1x128x128xbf16> to vector<128x128xbf16>
    %cst_29 = arith.constant dense<0.000000e+00> : vector<64x128xf32>
    %30 = tpu.matmul %27, %29, %cst_29 {dimension_numbers = #tpu.dot_dimension_numbers<[1], [0], [0], [1], [0, 0, 1, 1], [], []>} : vector<64x128xbf16>, vector<128x128xbf16>, vector<64x128xf32> -> vector<64x128xf32>
    %31 = arith.addf %24, %30 : vector<64x128xf32>
    %c0_30 = arith.constant 0 : index
    %c1_31 = arith.constant 1 : index
    %c1_32 = arith.constant 1 : index
    %c0_33 = arith.constant 0 : index
    %32 = vector.load %arg3[%c0_30, %c1_31, %c1_32, %c0_33] : memref<1x10x10x128xbf16, #tpu.memory_space<vmem>>, vector<1x8x8x128xbf16>
    %33 = vector.shape_cast %32 : vector<1x8x8x128xbf16> to vector<8x8x128xbf16>
    %34 = vector.shape_cast %33 : vector<8x8x128xbf16> to vector<64x128xbf16>
    %c4 = arith.constant 4 : index
    %c0_34 = arith.constant 0 : index
    %c0_35 = arith.constant 0 : index
    %35 = vector.load %arg4[%c4, %c0_34, %c0_35] : memref<9x128x128xbf16, #tpu.memory_space<vmem>>, vector<1x128x128xbf16>
    %36 = vector.shape_cast %35 : vector<1x128x128xbf16> to vector<128x128xbf16>
    %cst_36 = arith.constant dense<0.000000e+00> : vector<64x128xf32>
    %37 = tpu.matmul %34, %36, %cst_36 {dimension_numbers = #tpu.dot_dimension_numbers<[1], [0], [0], [1], [0, 0, 1, 1], [], []>} : vector<64x128xbf16>, vector<128x128xbf16>, vector<64x128xf32> -> vector<64x128xf32>
    %38 = arith.addf %31, %37 : vector<64x128xf32>
    %c0_37 = arith.constant 0 : index
    %c1_38 = arith.constant 1 : index
    %c2_39 = arith.constant 2 : index
    %c0_40 = arith.constant 0 : index
    %39 = vector.load %arg3[%c0_37, %c1_38, %c2_39, %c0_40] : memref<1x10x10x128xbf16, #tpu.memory_space<vmem>>, vector<1x8x8x128xbf16>
    %40 = vector.shape_cast %39 : vector<1x8x8x128xbf16> to vector<8x8x128xbf16>
    %41 = vector.shape_cast %40 : vector<8x8x128xbf16> to vector<64x128xbf16>
    %c5 = arith.constant 5 : index
    %c0_41 = arith.constant 0 : index
    %c0_42 = arith.constant 0 : index
    %42 = vector.load %arg4[%c5, %c0_41, %c0_42] : memref<9x128x128xbf16, #tpu.memory_space<vmem>>, vector<1x128x128xbf16>
    %43 = vector.shape_cast %42 : vector<1x128x128xbf16> to vector<128x128xbf16>
    %cst_43 = arith.constant dense<0.000000e+00> : vector<64x128xf32>
    %44 = tpu.matmul %41, %43, %cst_43 {dimension_numbers = #tpu.dot_dimension_numbers<[1], [0], [0], [1], [0, 0, 1, 1], [], []>} : vector<64x128xbf16>, vector<128x128xbf16>, vector<64x128xf32> -> vector<64x128xf32>
    %45 = arith.addf %38, %44 : vector<64x128xf32>
    %c0_44 = arith.constant 0 : index
    %c2_45 = arith.constant 2 : index
    %c0_46 = arith.constant 0 : index
    %c0_47 = arith.constant 0 : index
    %46 = vector.load %arg3[%c0_44, %c2_45, %c0_46, %c0_47] : memref<1x10x10x128xbf16, #tpu.memory_space<vmem>>, vector<1x8x8x128xbf16>
    %47 = vector.shape_cast %46 : vector<1x8x8x128xbf16> to vector<8x8x128xbf16>
    %48 = vector.shape_cast %47 : vector<8x8x128xbf16> to vector<64x128xbf16>
    %c6 = arith.constant 6 : index
    %c0_48 = arith.constant 0 : index
    %c0_49 = arith.constant 0 : index
    %49 = vector.load %arg4[%c6, %c0_48, %c0_49] : memref<9x128x128xbf16, #tpu.memory_space<vmem>>, vector<1x128x128xbf16>
    %50 = vector.shape_cast %49 : vector<1x128x128xbf16> to vector<128x128xbf16>
    %cst_50 = arith.constant dense<0.000000e+00> : vector<64x128xf32>
    %51 = tpu.matmul %48, %50, %cst_50 {dimension_numbers = #tpu.dot_dimension_numbers<[1], [0], [0], [1], [0, 0, 1, 1], [], []>} : vector<64x128xbf16>, vector<128x128xbf16>, vector<64x128xf32> -> vector<64x128xf32>
    %52 = arith.addf %45, %51 : vector<64x128xf32>
    %c0_51 = arith.constant 0 : index
    %c2_52 = arith.constant 2 : index
    %c1_53 = arith.constant 1 : index
    %c0_54 = arith.constant 0 : index
    %53 = vector.load %arg3[%c0_51, %c2_52, %c1_53, %c0_54] : memref<1x10x10x128xbf16, #tpu.memory_space<vmem>>, vector<1x8x8x128xbf16>
    %54 = vector.shape_cast %53 : vector<1x8x8x128xbf16> to vector<8x8x128xbf16>
    %55 = vector.shape_cast %54 : vector<8x8x128xbf16> to vector<64x128xbf16>
    %c7 = arith.constant 7 : index
    %c0_55 = arith.constant 0 : index
    %c0_56 = arith.constant 0 : index
    %56 = vector.load %arg4[%c7, %c0_55, %c0_56] : memref<9x128x128xbf16, #tpu.memory_space<vmem>>, vector<1x128x128xbf16>
    %57 = vector.shape_cast %56 : vector<1x128x128xbf16> to vector<128x128xbf16>
    %cst_57 = arith.constant dense<0.000000e+00> : vector<64x128xf32>
    %58 = tpu.matmul %55, %57, %cst_57 {dimension_numbers = #tpu.dot_dimension_numbers<[1], [0], [0], [1], [0, 0, 1, 1], [], []>} : vector<64x128xbf16>, vector<128x128xbf16>, vector<64x128xf32> -> vector<64x128xf32>
    %59 = arith.addf %52, %58 : vector<64x128xf32>
    %c0_58 = arith.constant 0 : index
    %c2_59 = arith.constant 2 : index
    %c2_60 = arith.constant 2 : index
    %c0_61 = arith.constant 0 : index
    %60 = vector.load %arg3[%c0_58, %c2_59, %c2_60, %c0_61] : memref<1x10x10x128xbf16, #tpu.memory_space<vmem>>, vector<1x8x8x128xbf16>
    %61 = vector.shape_cast %60 : vector<1x8x8x128xbf16> to vector<8x8x128xbf16>
    %62 = vector.shape_cast %61 : vector<8x8x128xbf16> to vector<64x128xbf16>
    %c8 = arith.constant 8 : index
    %c0_62 = arith.constant 0 : index
    %c0_63 = arith.constant 0 : index
    %63 = vector.load %arg4[%c8, %c0_62, %c0_63] : memref<9x128x128xbf16, #tpu.memory_space<vmem>>, vector<1x128x128xbf16>
    %64 = vector.shape_cast %63 : vector<1x128x128xbf16> to vector<128x128xbf16>
    %cst_64 = arith.constant dense<0.000000e+00> : vector<64x128xf32>
    %65 = tpu.matmul %62, %64, %cst_64 {dimension_numbers = #tpu.dot_dimension_numbers<[1], [0], [0], [1], [0, 0, 1, 1], [], []>} : vector<64x128xbf16>, vector<128x128xbf16>, vector<64x128xf32> -> vector<64x128xf32>
    %66 = arith.addf %59, %65 : vector<64x128xf32>
    %c0_65 = arith.constant 0 : index
    %c0_66 = arith.constant 0 : index
    %67 = vector.load %arg7[%c0_65, %c0_66] : memref<64x128xf32, #tpu.memory_space<vmem>>, vector<64x128xf32>
    tpu.vector_store %arg7[%c0_65, %c0_66], %66 {strides = array<i32>} : memref<64x128xf32, #tpu.memory_space<vmem>>, vector<64x128xf32>,
    %c0_i32_67 = arith.constant 0 : i32
    %68 = arith.cmpi eq, %arg2, %c0_i32_67 : i32
    %69 = arith.extui %68 : i1 to i32
    %c0_i32_68 = arith.constant 0 : i32
    %70 = arith.cmpi ne, %69, %c0_i32_68 : i32
    scf.if %70 {
      %71 = vector.shape_cast %66 : vector<64x128xf32> to vector<8x8x128xf32>
      %72 = arith.truncf %71 : vector<8x8x128xf32> to vector<8x8x128xbf16>
      %c0_69 = arith.constant 0 : index
      %c0_70 = arith.constant 0 : index
      %c0_71 = arith.constant 0 : index
      %c0_72 = arith.constant 0 : index
      %73 = vector.load %arg5[%c0_69, %c0_70, %c0_71, %c0_72] : memref<1x8x8x128xbf16, #tpu.memory_space<vmem>>, vector<1x8x8x128xbf16>
      %74 = vector.shape_cast %73 : vector<1x8x8x128xbf16> to vector<8x8x128xbf16>
      %75 = vector.shape_cast %72 : vector<8x8x128xbf16> to vector<1x8x8x128xbf16>
      tpu.vector_store %arg5[%c0_69, %c0_70, %c0_71, %c0_72], %75 {strides = array<i32>} : memref<1x8x8x128xbf16, #tpu.memory_space<vmem>>, vector<1x8x8x128xbf16>,
      %cst_73 = arith.constant dense<0.000000e+00> : vector<128xf32>
      %76 = vector.multi_reduction <add>, %66, %cst_73 [0] : vector<64x128xf32> to vector<128xf32>
      %77 = vector.shape_cast %76 : vector<128xf32> to vector<1x128xf32>
      %c0_74 = arith.constant 0 : index
      %c0_75 = arith.constant 0 : index
      %c0_76 = arith.constant 0 : index
      %78 = vector.load %arg6[%c0_74, %c0_75, %c0_76] : memref<1x2x128xf32, #tpu.memory_space<vmem>>, vector<1x1x128xf32>
      %79 = vector.shape_cast %78 : vector<1x1x128xf32> to vector<1x128xf32>
      %80 = vector.shape_cast %77 : vector<1x128xf32> to vector<1x1x128xf32>
      tpu.vector_store %arg6[%c0_74, %c0_75, %c0_76], %80 {strides = array<i32>} : memref<1x2x128xf32, #tpu.memory_space<vmem>>, vector<1x1x128xf32>,
      %81 = arith.mulf %66, %66 : vector<64x128xf32>
      %cst_77 = arith.constant dense<0.000000e+00> : vector<128xf32>
      %82 = vector.multi_reduction <add>, %81, %cst_77 [0] : vector<64x128xf32> to vector<128xf32>
      %83 = vector.shape_cast %82 : vector<128xf32> to vector<1x128xf32>
      %c0_78 = arith.constant 0 : index
      %c1_79 = arith.constant 1 : index
      %c0_80 = arith.constant 0 : index
      %84 = vector.load %arg6[%c0_78, %c1_79, %c0_80] : memref<1x2x128xf32, #tpu.memory_space<vmem>>, vector<1x1x128xf32>
      %85 = vector.shape_cast %84 : vector<1x1x128xf32> to vector<1x128xf32>
      %86 = vector.shape_cast %83 : vector<1x128xf32> to vector<1x1x128xf32>
      tpu.vector_store %arg6[%c0_78, %c1_79, %c0_80], %86 {strides = array<i32>} : memref<1x2x128xf32, #tpu.memory_space<vmem>>, vector<1x1x128xf32>,
    } else {
    }
    return
  }
  func.func @transform_0(%arg0: i32, %arg1: i32, %arg2: i32) -> (i32, i32, i32, i32) {
    %c0_i32 = arith.constant 0 : i32
    %c0_i32_0 = arith.constant 0 : i32
    %c0_i32_1 = arith.constant 0 : i32
    return %arg0, %c0_i32, %c0_i32_0, %arg2 : i32, i32, i32, i32
  }
  func.func @transform_1(%arg0: i32, %arg1: i32, %arg2: i32) -> (i32, i32, i32) {
    %c0_i32 = arith.constant 0 : i32
    %c0_i32_0 = arith.constant 0 : i32
    return %c0_i32, %arg2, %arg1 : i32, i32, i32
  }
  func.func @transform_2(%arg0: i32, %arg1: i32, %arg2: i32) -> (i32, i32, i32, i32) {
    %c0_i32 = arith.constant 0 : i32
    %c0_i32_0 = arith.constant 0 : i32
    %c0_i32_1 = arith.constant 0 : i32
    return %arg0, %c0_i32, %c0_i32_0, %arg1 : i32, i32, i32, i32
  }
  func.func @transform_3(%arg0: i32, %arg1: i32, %arg2: i32) -> (i32, i32, i32) {
    %c0_i32 = arith.constant 0 : i32
    %c0_i32_0 = arith.constant 0 : i32
    return %arg0, %c0_i32, %arg1 : i32, i32, i32
  }
}

module attributes {stable_mosaic.version = 11 : i64} {
  func.func @_bn_relu_kernel(%arg0: i32, %arg1: memref<64x128xbf16, #tpu.memory_space<vmem>>, %arg2: memref<3x128xf32, #tpu.memory_space<vmem>>, %arg3: memref<64x128xbf16, #tpu.memory_space<vmem>>) attributes {dimension_semantics = [#tpu.dimension_semantics<parallel>], iteration_bounds = array<i64: 2>, scalar_prefetch = 0 : i64, scratch_operands = 0 : i64, tpu.core_type = #tpu.core_type<tc>, window_params = [{transform_indices = @transform_0, window_bounds = array<i64: 64, 128>}, {pipeline_mode = #tpu.pipeline_mode<synchronous>, transform_indices = @transform_1, window_bounds = array<i64: 3, 128>}, {transform_indices = @transform_2, window_bounds = array<i64: 64, 128>}]} {
    %c0 = arith.constant 0 : index
    %c0_0 = arith.constant 0 : index
    %0 = vector.load %arg1[%c0, %c0_0] : memref<64x128xbf16, #tpu.memory_space<vmem>>, vector<64x128xbf16>
    %1 = arith.extf %0 : vector<64x128xbf16> to vector<64x128xf32>
    %c0_1 = arith.constant 0 : index
    %c0_2 = arith.constant 0 : index
    %2 = vector.load %arg2[%c0_1, %c0_2] : memref<3x128xf32, #tpu.memory_space<vmem>>, vector<1x128xf32>
    %3 = vector.broadcast %2 : vector<1x128xf32> to vector<64x128xf32>
    %4 = arith.mulf %1, %3 : vector<64x128xf32>
    %c2 = arith.constant 2 : index
    %c0_3 = arith.constant 0 : index
    %5 = vector.load %arg2[%c2, %c0_3] : memref<3x128xf32, #tpu.memory_space<vmem>>, vector<1x128xf32>
    %6 = vector.broadcast %5 : vector<1x128xf32> to vector<64x128xf32>
    %7 = arith.addf %4, %6 : vector<64x128xf32>
    %cst = arith.constant 0.000000e+00 : f32
    %8 = vector.broadcast %cst : f32 to vector<64x128xf32>
    %9 = arith.maximumf %7, %8 : vector<64x128xf32>
    %10 = arith.truncf %9 : vector<64x128xf32> to vector<64x128xbf16>
    %c0_4 = arith.constant 0 : index
    %c0_5 = arith.constant 0 : index
    %11 = vector.load %arg3[%c0_4, %c0_5] : memref<64x128xbf16, #tpu.memory_space<vmem>>, vector<64x128xbf16>
    tpu.vector_store %arg3[%c0_4, %c0_5], %10 {strides = array<i32>} : memref<64x128xbf16, #tpu.memory_space<vmem>>, vector<64x128xbf16>,
    return
  }
  func.func @transform_0(%arg0: i32) -> (i32, i32) {
    %c0_i32 = arith.constant 0 : i32
    %c0_i32_0 = arith.constant 0 : i32
    return %arg0, %c0_i32 : i32, i32
  }
  func.func @transform_1(%arg0: i32) -> (i32, i32) {
    %c0_i32 = arith.constant 0 : i32
    %c0_i32_0 = arith.constant 0 : i32
    %c0_i32_1 = arith.constant 0 : i32
    return %c0_i32, %c0_i32_0 : i32, i32
  }
  func.func @transform_2(%arg0: i32) -> (i32, i32) {
    %c0_i32 = arith.constant 0 : i32
    %c0_i32_0 = arith.constant 0 : i32
    return %arg0, %c0_i32 : i32, i32
  }
}

module attributes {stable_mosaic.version = 11 : i64} {
  func.func @_bn_res_relu_kernel(%arg0: i32, %arg1: memref<64x128xbf16, #tpu.memory_space<vmem>>, %arg2: memref<64x128xbf16, #tpu.memory_space<vmem>>, %arg3: memref<3x128xf32, #tpu.memory_space<vmem>>, %arg4: memref<64x128xbf16, #tpu.memory_space<vmem>>) attributes {dimension_semantics = [#tpu.dimension_semantics<parallel>], iteration_bounds = array<i64: 2>, scalar_prefetch = 0 : i64, scratch_operands = 0 : i64, tpu.core_type = #tpu.core_type<tc>, window_params = [{transform_indices = @transform_0, window_bounds = array<i64: 64, 128>}, {transform_indices = @transform_1, window_bounds = array<i64: 64, 128>}, {pipeline_mode = #tpu.pipeline_mode<synchronous>, transform_indices = @transform_2, window_bounds = array<i64: 3, 128>}, {transform_indices = @transform_3, window_bounds = array<i64: 64, 128>}]} {
    %c0 = arith.constant 0 : index
    %c0_0 = arith.constant 0 : index
    %0 = vector.load %arg1[%c0, %c0_0] : memref<64x128xbf16, #tpu.memory_space<vmem>>, vector<64x128xbf16>
    %1 = arith.extf %0 : vector<64x128xbf16> to vector<64x128xf32>
    %c0_1 = arith.constant 0 : index
    %c0_2 = arith.constant 0 : index
    %2 = vector.load %arg3[%c0_1, %c0_2] : memref<3x128xf32, #tpu.memory_space<vmem>>, vector<1x128xf32>
    %3 = vector.broadcast %2 : vector<1x128xf32> to vector<64x128xf32>
    %4 = arith.mulf %1, %3 : vector<64x128xf32>
    %c0_3 = arith.constant 0 : index
    %c0_4 = arith.constant 0 : index
    %5 = vector.load %arg2[%c0_3, %c0_4] : memref<64x128xbf16, #tpu.memory_space<vmem>>, vector<64x128xbf16>
    %6 = arith.extf %5 : vector<64x128xbf16> to vector<64x128xf32>
    %c1 = arith.constant 1 : index
    %c0_5 = arith.constant 0 : index
    %7 = vector.load %arg3[%c1, %c0_5] : memref<3x128xf32, #tpu.memory_space<vmem>>, vector<1x128xf32>
    %8 = vector.broadcast %7 : vector<1x128xf32> to vector<64x128xf32>
    %9 = arith.mulf %6, %8 : vector<64x128xf32>
    %10 = arith.addf %4, %9 : vector<64x128xf32>
    %c2 = arith.constant 2 : index
    %c0_6 = arith.constant 0 : index
    %11 = vector.load %arg3[%c2, %c0_6] : memref<3x128xf32, #tpu.memory_space<vmem>>, vector<1x128xf32>
    %12 = vector.broadcast %11 : vector<1x128xf32> to vector<64x128xf32>
    %13 = arith.addf %10, %12 : vector<64x128xf32>
    %cst = arith.constant 0.000000e+00 : f32
    %14 = vector.broadcast %cst : f32 to vector<64x128xf32>
    %15 = arith.maximumf %13, %14 : vector<64x128xf32>
    %16 = arith.truncf %15 : vector<64x128xf32> to vector<64x128xbf16>
    %c0_7 = arith.constant 0 : index
    %c0_8 = arith.constant 0 : index
    %17 = vector.load %arg4[%c0_7, %c0_8] : memref<64x128xbf16, #tpu.memory_space<vmem>>, vector<64x128xbf16>
    tpu.vector_store %arg4[%c0_7, %c0_8], %16 {strides = array<i32>} : memref<64x128xbf16, #tpu.memory_space<vmem>>, vector<64x128xbf16>,
    return
  }
  func.func @transform_0(%arg0: i32) -> (i32, i32) {
    %c0_i32 = arith.constant 0 : i32
    %c0_i32_0 = arith.constant 0 : i32
    return %arg0, %c0_i32 : i32, i32
  }
  func.func @transform_1(%arg0: i32) -> (i32, i32) {
    %c0_i32 = arith.constant 0 : i32
    %c0_i32_0 = arith.constant 0 : i32
    return %arg0, %c0_i32 : i32, i32
  }
  func.func @transform_2(%arg0: i32) -> (i32, i32) {
    %c0_i32 = arith.constant 0 : i32
    %c0_i32_0 = arith.constant 0 : i32
    %c0_i32_1 = arith.constant 0 : i32
    return %c0_i32, %c0_i32_0 : i32, i32
  }
  func.func @transform_3(%arg0: i32) -> (i32, i32) {
    %c0_i32 = arith.constant 0 : i32
    %c0_i32_0 = arith.constant 0 : i32
    return %arg0, %c0_i32 : i32, i32
  }
}

</mosaic_0001>

<llo_original>
// kernel: _lambda_.12
$region0: #{_lambda_.12}
  #allocation0 [shape = 'u32[]', space=smem, size = 0x4, offset = 0x4, fixed_abs, tag = 'smem constant byte address 0x4 - core index']
  #allocation1 [shape = 'u32[144,128]{1,0:T(1,128)}', space=vmem, size = 0x12000, scoped, tag = 'internal scratch']
  #allocation2 [shape = 'f32[64,128]{1,0:T(8,128)}', space=vmem, size = 0x8000, scoped, tag = 'scratch operand']
  %s0 = inlined_call_operand.vmem [shape: bf16[2,8,8,128], index: 0, kind: input, shape index: {}]
  %s1 = inlined_call_operand.vmem [shape: bf16[1,128,128], index: 1, kind: input, shape index: {}]
  %s2 = inlined_call_operand.vmem [shape: bf16[2,8,8,128], index: 2, kind: output, shape index: {0}]
  %s3 = inlined_call_operand.vmem [shape: f32[2,2,128], index: 3, kind: output, shape index: {1}]
  %4 = xla_tuple %s2, %s3
  %s5 = sld [smem:[#allocation0]]
  $region57: #{_lambda_.12} parent=0
    _
  %s7 = ssub.s32 1, %s5
  %s8 = scalar_select 0, %s7, %s5
  loop: start=0, step=1, limit=4
  $region2: #{_lambda_.12} parent=0 // loop_pre_header
    _
  $region3: #{_lambda_.12} parent=0 // loop_header
    %s10 = sphi 0, %s14
    %p11 = scmp.ge.s32.totalorder %s10, 4
    %s17 = sphi 0, %s36
    %s18 = sphi 0, %s32
    %s19 = sphi 0, %s28
    %s20 = sphi 0, %s17
    %s21 = sphi 0, %s18
    %s22 = sphi 0, %s19
    %s23 = sphi 0, %s20
    %s24 = sphi 0, %s21
    %s25 = sphi 0, %s22
    %s41 = sphi 0, %s43
    %s44 = sphi 0, %s41
    %s45 = sphi 0, %s44
    %s61 = sphi 0, %s45
    %s69 = sphi 0, %s71
    %s72 = sphi 0, %s69
    %s73 = sphi 0, %s72
    %s89 = sphi 0, %s73
    %s97 = sphi 0, %s99
    %s100 = sphi 0, %s97
    %s101 = sphi 0, %s100
    %s117 = sphi 0, %s101
    %s125 = sphi 0, %s127
    %s128 = sphi 0, %s125
    %s129 = sphi 0, %s128
    %s145 = sphi 0, %s129
  $region4: #{_lambda_.12} parent=0 // loop_header_branch
    %13 = sbr.rel (%p11) target = $region8
  $region5: #{_lambda_.12} parent=0 // loop_body
    %s15 = ssub.s32 %s10, 1
    %s16 = ssub.s32 %s10, 2
    %s26 = sadd.s32 1, %s19
    %p27 = scmp.ge.s32.totalorder %s26, 1
    %s28 = scalar_select %p27, 0, %s26
    %s29 = sadd.s32 1, %s18
    %s30 = scalar_select %p27, %s29, %s18
    %p31 = scmp.ge.s32.totalorder %s30, 1
    %s32 = scalar_select %p31, 0, %s30
    %s33 = sadd.s32 1, %s17
    %s34 = scalar_select %p31, %s33, %s17
    %p35 = scmp.ge.s32.totalorder %s34, 2
    %s36 = scalar_select %p35, 0, %s34
    %s37 = ssub.s32 %s17, %s36
    %s38 = ssub.s32 %s19, %s28
    %s39 = sor.u32 %s37, %s38
    %p40 = scmp.eq.s32.totalorder %s39, 0
    %s42 = sadd.s32 %s41, 1
    %s43 = scalar_select %p40, %s41, %s42
    %p46 = pneg %p40
    %p47 = scmp.eq.s32.totalorder %s10, 1
    %p48 = por %p46, %p47
    %p49 = scmp.ne.s32.totalorder %s41, %s44
    %p50 = scmp.eq.s32.totalorder %s10, 0
    %p51 = por %p49, %p50
    %p52 = scmp.ne.s32.totalorder %s41, %s44
    %p53 = scmp.eq.s32.totalorder %s15, 1
    %p54 = por %p52, %p53
    %p55 = scmp.ne.s32.totalorder %s44, %s45
    %p56 = scmp.eq.s32.totalorder %s15, 0
    %p57 = por %p55, %p56
    %p58 = scmp.ne.s32.totalorder %s44, %s45
    %p59 = scmp.eq.s32.totalorder %s16, 1
    %p60 = por %p58, %p59
    %p62 = scmp.ne.s32.totalorder %s45, %s61
    %p63 = scmp.eq.s32.totalorder %s16, 0
    %p64 = por %p62, %p63
    %s65 = ssub.s32 %s19, %s28
    %s66 = ssub.s32 %s18, %s32
    %s67 = sor.u32 %s65, %s66
    %p68 = scmp.eq.s32.totalorder %s67, 0
    %s70 = sadd.s32 %s69, 1
    %s71 = scalar_select %p68, %s69, %s70
    %p74 = pneg %p68
    %p75 = scmp.eq.s32.totalorder %s10, 1
    %p76 = por %p74, %p75
    %p77 = scmp.ne.s32.totalorder %s69, %s72
    %p78 = scmp.eq.s32.totalorder %s10, 0
    %p79 = por %p77, %p78
    %p80 = scmp.ne.s32.totalorder %s69, %s72
    %p81 = scmp.eq.s32.totalorder %s15, 1
    %p82 = por %p80, %p81
    %p83 = scmp.ne.s32.totalorder %s72, %s73
    %p84 = scmp.eq.s32.totalorder %s15, 0
    %p85 = por %p83, %p84
    %p86 = scmp.ne.s32.totalorder %s72, %s73
    %p87 = scmp.eq.s32.totalorder %s16, 1
    %p88 = por %p86, %p87
    %p90 = scmp.ne.s32.totalorder %s73, %s89
    %p91 = scmp.eq.s32.totalorder %s16, 0
    %p92 = por %p90, %p91
    %s93 = ssub.s32 %s17, %s36
    %s94 = ssub.s32 %s18, %s32
    %s95 = sor.u32 %s93, %s94
    %p96 = scmp.eq.s32.totalorder %s95, 0
    %s98 = sadd.s32 %s97, 1
    %s99 = scalar_select %p96, %s97, %s98
    %p102 = pneg %p96
    %p103 = scmp.eq.s32.totalorder %s10, 1
    %p104 = por %p102, %p103
    %p105 = scmp.ne.s32.totalorder %s97, %s100
    %p106 = scmp.eq.s32.totalorder %s10, 0
    %p107 = por %p105, %p106
    %p108 = scmp.ne.s32.totalorder %s97, %s100
    %p109 = scmp.eq.s32.totalorder %s15, 1
    %p110 = por %p108, %p109
    %p111 = scmp.ne.s32.totalorder %s100, %s101
    %p112 = scmp.eq.s32.totalorder %s15, 0
    %p113 = por %p111, %p112
    %p114 = scmp.ne.s32.totalorder %s100, %s101
    %p115 = scmp.eq.s32.totalorder %s16, 1
    %p116 = por %p114, %p115
    %p118 = scmp.ne.s32.totalorder %s101, %s117
    %p119 = scmp.eq.s32.totalorder %s16, 0
    %p120 = por %p118, %p119
    %s121 = ssub.s32 %s17, %s36
    %s122 = ssub.s32 %s18, %s32
    %s123 = sor.u32 %s121, %s122
    %p124 = scmp.eq.s32.totalorder %s123, 0
    %s126 = sadd.s32 %s125, 1
    %s127 = scalar_select %p124, %s125, %s126
    %p130 = pneg %p124
    %p131 = scmp.eq.s32.totalorder %s10, 1
    %p132 = por %p130, %p131
    %p133 = scmp.ne.s32.totalorder %s125, %s128
    %p134 = scmp.eq.s32.totalorder %s10, 0
    %p135 = por %p133, %p134
    %p136 = scmp.ne.s32.totalorder %s125, %s128
    %p137 = scmp.eq.s32.totalorder %s15, 1
    %p138 = por %p136, %p137
    %p139 = scmp.ne.s32.totalorder %s128, %s129
    %p140 = scmp.eq.s32.totalorder %s15, 0
    %p141 = por %p139, %p140
    %p142 = scmp.ne.s32.totalorder %s128, %s129
    %p143 = scmp.eq.s32.totalorder %s16, 1
    %p144 = por %p142, %p143
    %p146 = scmp.ne.s32.totalorder %s129, %s145
    %p147 = scmp.eq.s32.totalorder %s16, 0
    %p148 = por %p146, %p147
    %p149 = scmp.le.s32.totalorder 1, %s10
    %p150 = scmp.lt.s32.totalorder %s10, 3
    %p151 = pnand %p149, %p150
    %p152 = pneg %p151
    // Predicated region
    $region9: #{_lambda_.12} parent=5 // pred_check
      _
    $region10: #{_lambda_.12} parent=5 // pred_check_branch
      %154 = sbr.rel (%p151) target = $region12
    $region11: #{_lambda_.12} parent=5 // pred_region
      %s155 = ssub.s32 %s10, 1
      // Predicated region
      $region13: #{_lambda_.12} parent=11 // pred_check
        %p156 = pneg %p85
      $region14: #{_lambda_.12} parent=11 // pred_check_branch
        %158 = sbr.rel (%p156) target = $region16
      $region15: #{_lambda_.12} parent=11 // pred_region
        %s159 = smul.u32 16, %s22
        %p160 = scmp.lt.s32.totalorder %s159, 15
        %s161 = scalar_select %p160, %s159, 15
        %p162 = scmp.lt.s32.totalorder %s21, 0
        %s163 = scalar_select %p162, %s21, 0
        %s164 = sadd.s32 %s163, %s161
        %s165 = smul.addr %s164, 4
        %s166 = scalar_lea.vmem %s1, %s165
        %s167 = smul.u32 16, %s22
      $region16: #{_lambda_.12} parent=11 // pred_fallthru
        _
    $region12: #{_lambda_.12} parent=5 // pred_fallthru
      _
    %p168 = scmp.lt.s32.totalorder %s10, 2
    // Predicated region
    $region17: #{_lambda_.12} parent=5 // pred_check
      %p169 = pneg %p168
    $region18: #{_lambda_.12} parent=5 // pred_check_branch
      %171 = sbr.rel (%p169) target = $region20
    $region19: #{_lambda_.12} parent=5 // pred_region
      // Predicated region
      $region21: #{_lambda_.12} parent=19 // pred_check
        %p172 = pneg %p51
      $region22: #{_lambda_.12} parent=19 // pred_check_branch
        %174 = sbr.rel (%p172) target = $region24
      $region23: #{_lambda_.12} parent=19 // pred_region
        %p175 = scmp.lt.s32.totalorder %s17, 1
        %s176 = scalar_select %p175, %s17, 1
        %p177 = scmp.lt.s32.totalorder %s19, 0
        %s178 = scalar_select %p177, %s19, 0
        %s179 = smul.addr %s176, 8
        %s180 = sadd.s32 %s178, %s179
        %s181 = smul.addr %s180, 4
        %s182 = scalar_lea.vmem %s0, %s181
      $region24: #{_lambda_.12} parent=19 // pred_fallthru
        _
    $region20: #{_lambda_.12} parent=5 // pred_fallthru
      _
    %p183 = scmp.le.s32.totalorder 1, %s10
    %p184 = scmp.lt.s32.totalorder %s10, 3
    %p185 = pnand %p183, %p184
    %p186 = pneg %p185
    // Predicated region
    $region25: #{_lambda_.12} parent=5 // pred_check
      _
    $region26: #{_lambda_.12} parent=5 // pred_check_branch
      %188 = sbr.rel (%p185) target = $region28
    $region27: #{_lambda_.12} parent=5 // pred_region
      %s189 = ssub.s32 %s10, 1
      %p190 = scmp.lt.s32.totalorder %s20, 1
      %s191 = scalar_select %p190, %s20, 1
      %p192 = scmp.lt.s32.totalorder %s22, 0
      %s193 = scalar_select %p192, %s22, 0
      %s194 = smul.addr %s191, 8
      %s195 = sadd.s32 %s193, %s194
      %s196 = smul.addr %s195, 4
      %s197 = scalar_lea.vmem %s0, %s196
      %p198 = pneg %p57
      %p199 = pneg %p54
      %s200 = smul.u32 16, %s22
      %p201 = scmp.lt.s32.totalorder %s200, 15
      %s202 = scalar_select %p201, %s200, 15
      %p203 = scmp.lt.s32.totalorder %s21, 0
      %s204 = scalar_select %p203, %s21, 0
      %s205 = sadd.s32 %s204, %s202
      %s206 = smul.addr %s205, 4
      %s207 = scalar_lea.vmem %s1, %s206
      %p208 = pneg %p85
      %p209 = pneg %p82
      %p210 = pneg %p113
      %p211 = pneg %p110
      %p212 = scmp.lt.s32.totalorder %s20, 1
      %s213 = scalar_select %p212, %s20, 1
      %p214 = scmp.lt.s32.totalorder %s21, 0
      %s215 = scalar_select %p214, %s21, 0
      %s216 = smul.addr %s213, 8
      %s217 = sadd.s32 %s215, %s216
      %s218 = smul.addr %s217, 4
      %s219 = scalar_lea.vmem %s2, %s218
      %p220 = pneg %p141
      %p221 = pneg %p138
      %p222 = scmp.lt.s32.totalorder %s20, 1
      %s223 = scalar_select %p222, %s20, 1
      %p224 = scmp.lt.s32.totalorder %s21, 0
      %s225 = scalar_select %p224, %s21, 0
      %s226 = sadd.s32 %s225, %s223
      %s227 = smul.addr %s226, 2
      %s228 = scalar_lea.vmem %s3, %s227
      %p229 = scmp.lt.s32.totalorder %s20, 1
      %s230 = scalar_select %p229, %s20, 1
      %p231 = scmp.lt.s32.totalorder %s22, 0
      %s232 = scalar_select %p231, %s22, 0
      %s233 = smul.addr %s230, 8
      %s234 = sadd.s32 %s232, %s233
      %s235 = smul.addr %s234, 4
      %s236 = scalar_lea.vmem %s0, %s235
      %s237 = smul.u32 16, %s22
      %p238 = scmp.lt.s32.totalorder %s237, 15
      %s239 = scalar_select %p238, %s237, 15
      %p240 = scmp.lt.s32.totalorder %s21, 0
      %s241 = scalar_select %p240, %s21, 0
      %s242 = sadd.s32 %s241, %s239
      %s243 = smul.addr %s242, 4
      %s244 = scalar_lea.vmem %s1, %s243
      %s245 = smul.u32 16, %s22
      %p246 = scmp.lt.s32.totalorder %s20, 1
      %s247 = scalar_select %p246, %s20, 1
      %p248 = scmp.lt.s32.totalorder %s21, 0
      %s249 = scalar_select %p248, %s21, 0
      %s250 = smul.addr %s247, 8
      %s251 = sadd.s32 %s249, %s250
      %s252 = smul.addr %s251, 4
      %s253 = scalar_lea.vmem %s2, %s252
      %p254 = scmp.lt.s32.totalorder %s20, 1
      %s255 = scalar_select %p254, %s20, 1
      %p256 = scmp.lt.s32.totalorder %s21, 0
      %s257 = scalar_select %p256, %s21, 0
      %s258 = sadd.s32 %s257, %s255
      %s259 = smul.addr %s258, 2
      %s260 = scalar_lea.vmem %s3, %s259
      %p262 = scmp.eq.s32.totalorder %s22, 0
      // Predicated region
      $region29: #{_lambda_.12} parent=27 // pred_check
        %p263 = pneg %p262
      $region30: #{_lambda_.12} parent=27 // pred_check_branch
        %265 = sbr.rel (%p263) target = $region32
      $region31: #{_lambda_.12} parent=27 // pred_region
        %266 = vst [vmem:[#allocation2] sm:$0xff] 0.0
        %267 = vst [vmem:[#allocation2 + $0x8] sm:$0xff] 0.0
        %268 = vst [vmem:[#allocation2 + $0x10] sm:$0xff] 0.0
        %269 = vst [vmem:[#allocation2 + $0x18] sm:$0xff] 0.0
        %270 = vst [vmem:[#allocation2 + $0x20] sm:$0xff] 0.0
        %271 = vst [vmem:[#allocation2 + $0x28] sm:$0xff] 0.0
        %272 = vst [vmem:[#allocation2 + $0x30] sm:$0xff] 0.0
        %273 = vst [vmem:[#allocation2 + $0x38] sm:$0xff] 0.0
      $region32: #{_lambda_.12} parent=27 // pred_fallthru
        _
      %v274 = vld [vmem:[#allocation2] sm:$0xff]
      %v275 = vld [vmem:[#allocation2 + $0x8] sm:$0xff]
      %v276 = vld [vmem:[#allocation2 + $0x10] sm:$0xff]
      %v277 = vld [vmem:[#allocation2 + $0x18] sm:$0xff]
      %v278 = vld [vmem:[#allocation2 + $0x20] sm:$0xff]
      %v279 = vld [vmem:[#allocation2 + $0x28] sm:$0xff]
      %v280 = vld [vmem:[#allocation2 + $0x30] sm:$0xff]
      %v281 = vld [vmem:[#allocation2 + $0x38] sm:$0xff]
      %v282 = vld [vmem:[%s236] sm:$0xf]
      %v283 = vld [vmem:[%s236 + $0x4] sm:$0xf]
      %v284 = vld [vmem:[%s236 + $0x8] sm:$0xf]
      %v285 = vld [vmem:[%s236 + $0xc] sm:$0xf]
      %v286 = vld [vmem:[%s236 + $0x10] sm:$0xf]
      %v287 = vld [vmem:[%s236 + $0x14] sm:$0xf]
      %v288 = vld [vmem:[%s236 + $0x18] sm:$0xf]
      %v289 = vld [vmem:[%s236 + $0x1c] sm:$0xf]
      %v290 = vld [vmem:[%s244] sm:$0xf]
      %v291 = vld [vmem:[%s244 + $0x4] sm:$0xf]
      %v292 = vld [vmem:[%s244 + $0x8] sm:$0xf]
      %v293 = vld [vmem:[%s244 + $0xc] sm:$0xf]
      %v294 = vld [vmem:[%s244 + $0x10] sm:$0xf]
      %v295 = vld [vmem:[%s244 + $0x14] sm:$0xf]
      %v296 = vld [vmem:[%s244 + $0x18] sm:$0xf]
      %v297 = vld [vmem:[%s244 + $0x1c] sm:$0xf]
      %v298 = vld [vmem:[%s244 + $0x20] sm:$0xf]
      %v299 = vld [vmem:[%s244 + $0x24] sm:$0xf]
      %v300 = vld [vmem:[%s244 + $0x28] sm:$0xf]
      %v301 = vld [vmem:[%s244 + $0x2c] sm:$0xf]
      %v302 = vld [vmem:[%s244 + $0x30] sm:$0xf]
      %v303 = vld [vmem:[%s244 + $0x34] sm:$0xf]
      %v304 = vld [vmem:[%s244 + $0x38] sm:$0xf]
      %v305 = vld [vmem:[%s244 + $0x3c] sm:$0xf]
      %v314 = vunpack.c.l.b16 %v282
      %v315 = vunpack.c.l.b16 %v283
      %v316 = vunpack.c.l.b16 %v284
      %v317 = vunpack.c.l.b16 %v285
      %v318 = vunpack.c.l.b16 %v286
      %v319 = vunpack.c.l.b16 %v287
      %v320 = vunpack.c.l.b16 %v288
      %v321 = vunpack.c.l.b16 %v289
      %v322 = vpack.c.b16 %v315, %v314
      %v323 = vpack.c.b16 %v317, %v316
      %v324 = vpack.c.b16 %v319, %v318
      %v325 = vpack.c.b16 %v321, %v320
      %v346 = vunpack.c.l.b16 %v290
      %v347 = vunpack.c.l.b16 %v291
      %v348 = vunpack.c.l.b16 %v292
      %v349 = vunpack.c.l.b16 %v293
      %v350 = vunpack.c.l.b16 %v294
      %v351 = vunpack.c.l.b16 %v295
      %v352 = vunpack.c.l.b16 %v296
      %v353 = vunpack.c.l.b16 %v297
      %v354 = vunpack.c.l.b16 %v298
      %v355 = vunpack.c.l.b16 %v299
      %v356 = vunpack.c.l.b16 %v300
      %v357 = vunpack.c.l.b16 %v301
      %v358 = vunpack.c.l.b16 %v302
      %v359 = vunpack.c.l.b16 %v303
      %v360 = vunpack.c.l.b16 %v304
      %v361 = vunpack.c.l.b16 %v305
      %v362 = vpack.c.b16 %v347, %v346
      %v363 = vpack.c.b16 %v349, %v348
      %v364 = vpack.c.b16 %v351, %v350
      %v365 = vpack.c.b16 %v353, %v352
      %v366 = vpack.c.b16 %v355, %v354
      %v367 = vpack.c.b16 %v357, %v356
      %v368 = vpack.c.b16 %v359, %v358
      %v369 = vpack.c.b16 %v361, %v360
      %378 = vmatprep.subr.bf16.mxu0 0
      %379 = vmatpush1.bf16.msra.mxu0 %v362
      %380 = vmatprep.subr.bf16.mxu0 0
      %381 = vmatpush1.bf16.msra.mxu0 %v363
      %382 = vmatprep.subr.bf16.mxu0 0
      %383 = vmatpush1.bf16.msra.mxu0 %v364
      %384 = vmatprep.subr.bf16.mxu0 0
      %385 = vmatpush1.bf16.msra.mxu0 %v365
      %386 = vmatprep.subr.bf16.mxu0 0
      %387 = vmatpush1.bf16.msra.mxu0 %v366
      %388 = vmatprep.subr.bf16.mxu0 0
      %389 = vmatpush1.bf16.msra.mxu0 %v367
      %390 = vmatprep.subr.bf16.mxu0 0
      %391 = vmatpush1.bf16.msra.mxu0 %v368
      %392 = vmatprep.subr.bf16.mxu0 0
      %393 = vmatpush1.bf16.msra.mxu0 %v369
      %394 = vmatprep.subr.bf16.mxu0 0
      %395 = vmatpush1.bf16.msra.mxu0 0
      %396 = vmatprep.subr.bf16.mxu0 0
      %397 = vmatpush1.bf16.msra.mxu0 0
      %398 = vmatprep.subr.bf16.mxu0 0
      %399 = vmatpush1.bf16.msra.mxu0 0
      %400 = vmatprep.subr.bf16.mxu0 0
      %401 = vmatpush1.bf16.msra.mxu0 0
      %402 = vmatprep.subr.bf16.mxu0 0
      %403 = vmatpush1.bf16.msra.mxu0 0
      %404 = vmatprep.subr.bf16.mxu0 0
      %405 = vmatpush1.bf16.msra.mxu0 0
      %406 = vmatprep.subr.bf16.mxu0 0
      %407 = vmatpush1.bf16.msra.mxu0 0
      %408 = vmatprep.subr.bf16.mxu0 0
      %409 = vmatpush1.bf16.msra.mxu0 0
      %410 = vmatprep.mubr.bf16.mxu0 0
      %411 = vmatmul.mubr.bf16.gmra.mrb[0].mxu0 %v322
      %v412 = vpop.f32.mrb[0].mxu0
      %v413 = vadd.f32 0.0, %v412
      %v414 = vpop.f32.mrb[0].mxu0
      %v415 = vpop.f32.mrb[0].mxu0
      %v416 = vadd.f32 0.0, %v415
      %v417 = vpop.f32.mrb[0].mxu0
      %418 = vmatprep.mubr.bf16.mxu0 0
      %419 = vmatmul.mubr.bf16.gmra.mrb[0].mxu0 %v323
      %v420 = vpop.f32.mrb[0].mxu0
      %v421 = vadd.f32 0.0, %v420
      %v422 = vpop.f32.mrb[0].mxu0
      %v423 = vpop.f32.mrb[0].mxu0
      %v424 = vadd.f32 0.0, %v423
      %v425 = vpop.f32.mrb[0].mxu0
      %426 = vmatprep.mubr.bf16.mxu0 0
      %427 = vmatmul.mubr.bf16.gmra.mrb[0].mxu0 %v324
      %v428 = vpop.f32.mrb[0].mxu0
      %v429 = vadd.f32 0.0, %v428
      %v430 = vpop.f32.mrb[0].mxu0
      %v431 = vpop.f32.mrb[0].mxu0
      %v432 = vadd.f32 0.0, %v431
      %v433 = vpop.f32.mrb[0].mxu0
      %434 = vmatprep.mubr.bf16.mxu0 0
      %435 = vmatmul.mubr.bf16.gmra.mrb[0].mxu0 %v325
      %v436 = vpop.f32.mrb[0].mxu0
      %v437 = vadd.f32 0.0, %v436
      %v438 = vpop.f32.mrb[0].mxu0
      %v439 = vpop.f32.mrb[0].mxu0
      %v440 = vadd.f32 0.0, %v439
      %v441 = vpop.f32.mrb[0].mxu0
      %442 = vdwg.mxu0
      %v443 = vadd.f32 %v274, %v413
      %v444 = vadd.f32 %v275, %v416
      %v445 = vadd.f32 %v276, %v421
      %v446 = vadd.f32 %v277, %v424
      %v447 = vadd.f32 %v278, %v429
      %v448 = vadd.f32 %v279, %v432
      %v449 = vadd.f32 %v280, %v437
      %v450 = vadd.f32 %v281, %v440
      %451 = vst [vmem:[#allocation2] sm:$0xff] %v443
      %452 = vst [vmem:[#allocation2 + $0x8] sm:$0xff] %v444
      %453 = vst [vmem:[#allocation2 + $0x10] sm:$0xff] %v445
      %454 = vst [vmem:[#allocation2 + $0x18] sm:$0xff] %v446
      %455 = vst [vmem:[#allocation2 + $0x20] sm:$0xff] %v447
      %456 = vst [vmem:[#allocation2 + $0x28] sm:$0xff] %v448
      %457 = vst [vmem:[#allocation2 + $0x30] sm:$0xff] %v449
      %458 = vst [vmem:[#allocation2 + $0x38] sm:$0xff] %v450
      // Predicated region
      $region33: #{_lambda_.12} parent=27 // pred_check
        %p459 = pneg %p262
      $region34: #{_lambda_.12} parent=27 // pred_check_branch
        %461 = sbr.rel (%p459) target = $region36
      $region35: #{_lambda_.12} parent=27 // pred_region
        %v462 = vpack.c.bf16 %v443, %v443
        %v463 = vpack.c.bf16 %v444, %v444
        %v464 = vpack.c.bf16 %v445, %v445
        %v465 = vpack.c.bf16 %v446, %v446
        %v466 = vpack.c.bf16 %v447, %v447
        %v467 = vpack.c.bf16 %v448, %v448
        %v468 = vpack.c.bf16 %v449, %v449
        %v469 = vpack.c.bf16 %v450, %v450
        %470 = vst [vmem:[%s253] sm:$0xf] %v462
        %471 = vst [vmem:[%s253 + $0x4] sm:$0xf] %v463
        %472 = vst [vmem:[%s253 + $0x8] sm:$0xf] %v464
        %473 = vst [vmem:[%s253 + $0xc] sm:$0xf] %v465
        %474 = vst [vmem:[%s253 + $0x10] sm:$0xf] %v466
        %475 = vst [vmem:[%s253 + $0x14] sm:$0xf] %v467
        %476 = vst [vmem:[%s253 + $0x18] sm:$0xf] %v468
        %477 = vst [vmem:[%s253 + $0x1c] sm:$0xf] %v469
        %v478 = vadd.f32 %v443, %v444
        %v479 = vadd.f32 %v478, %v445
        %v480 = vadd.f32 %v479, %v446
        %v481 = vadd.f32 %v480, %v447
        %v482 = vadd.f32 %v481, %v448
        %v483 = vadd.f32 %v482, %v449
        %v484 = vadd.f32 %v483, %v450
        %v485 = vrot.slane %v484, 4
        %v486 = vadd.f32 %v484, %v485
        %v487 = vrot.slane %v486, 2
        %v488 = vadd.f32 %v486, %v487
        %v489 = vrot.slane %v488, 1
        %v490 = vadd.f32 %v488, %v489
        %491 = vst [vmem:[%s260] sm:$0x1] %v490
        %v492 = vmul.f32 %v443, %v443
        %v493 = vmul.f32 %v444, %v444
        %v494 = vmul.f32 %v445, %v445
        %v495 = vmul.f32 %v446, %v446
        %v496 = vmul.f32 %v447, %v447
        %v497 = vmul.f32 %v448, %v448
        %v498 = vmul.f32 %v449, %v449
        %v499 = vmul.f32 %v450, %v450
        %v500 = vadd.f32 %v492, %v493
        %v501 = vadd.f32 %v500, %v494
        %v502 = vadd.f32 %v501, %v495
        %v503 = vadd.f32 %v502, %v496
        %v504 = vadd.f32 %v503, %v497
        %v505 = vadd.f32 %v504, %v498
        %v506 = vadd.f32 %v505, %v499
        %v507 = vrot.slane %v506, 4
        %v508 = vadd.f32 %v506, %v507
        %v509 = vrot.slane %v508, 2
        %v510 = vadd.f32 %v508, %v509
        %v511 = vrot.slane %v510, 1
        %v512 = vadd.f32 %v510, %v511
        %513 = vst [vmem:[%s260 + $0x1] sm:$0x1] %v512
      $region36: #{_lambda_.12} parent=27 // pred_fallthru
        _
      %p514 = scmp.lt.s32.totalorder %s20, 1
      %s515 = scalar_select %p514, %s20, 1
      %p516 = scmp.lt.s32.totalorder %s21, 0
      %s517 = scalar_select %p516, %s21, 0
      %s518 = smul.addr %s515, 8
      %s519 = sadd.s32 %s517, %s518
      %s520 = smul.addr %s519, 4
      %s521 = scalar_lea.vmem %s2, %s520
      %p522 = scmp.lt.s32.totalorder %s20, 1
      %s523 = scalar_select %p522, %s20, 1
      %p524 = scmp.lt.s32.totalorder %s21, 0
      %s525 = scalar_select %p524, %s21, 0
      %s526 = sadd.s32 %s525, %s523
      %s527 = smul.addr %s526, 2
      %s528 = scalar_lea.vmem %s3, %s527
      // Predicated region
      $region37: #{_lambda_.12} parent=27 // pred_check
        %p529 = pneg %p110
      $region38: #{_lambda_.12} parent=27 // pred_check_branch
        %531 = sbr.rel (%p529) target = $region40
      $region39: #{_lambda_.12} parent=27 // pred_region
        _
      $region40: #{_lambda_.12} parent=27 // pred_fallthru
        _
      // Predicated region
      $region41: #{_lambda_.12} parent=27 // pred_check
        %p532 = pneg %p138
      $region42: #{_lambda_.12} parent=27 // pred_check_branch
        %534 = sbr.rel (%p532) target = $region44
      $region43: #{_lambda_.12} parent=27 // pred_region
        _
      $region44: #{_lambda_.12} parent=27 // pred_fallthru
        _
    $region28: #{_lambda_.12} parent=5 // pred_fallthru
      _
    %p535 = scmp.le.s32.totalorder 2, %s10
    // Predicated region
    $region45: #{_lambda_.12} parent=5 // pred_check
      %p536 = pneg %p535
    $region46: #{_lambda_.12} parent=5 // pred_check_branch
      %538 = sbr.rel (%p536) target = $region48
    $region47: #{_lambda_.12} parent=5 // pred_region
      %s539 = ssub.s32 %s10, 2
      // Predicated region
      $region49: #{_lambda_.12} parent=47 // pred_check
        %p540 = pneg %p116
      $region50: #{_lambda_.12} parent=47 // pred_check_branch
        %542 = sbr.rel (%p540) target = $region52
      $region51: #{_lambda_.12} parent=47 // pred_region
        %p543 = scmp.lt.s32.totalorder %s23, 1
        %s544 = scalar_select %p543, %s23, 1
        %p545 = scmp.lt.s32.totalorder %s24, 0
        %s546 = scalar_select %p545, %s24, 0
        %s547 = smul.addr %s544, 8
        %s548 = sadd.s32 %s546, %s547
        %s549 = smul.addr %s548, 4
        %s550 = scalar_lea.vmem %s2, %s549
      $region52: #{_lambda_.12} parent=47 // pred_fallthru
        _
      // Predicated region
      $region53: #{_lambda_.12} parent=47 // pred_check
        %p551 = pneg %p144
      $region54: #{_lambda_.12} parent=47 // pred_check_branch
        %553 = sbr.rel (%p551) target = $region56
      $region55: #{_lambda_.12} parent=47 // pred_region
        %p554 = scmp.lt.s32.totalorder %s23, 1
        %s555 = scalar_select %p554, %s23, 1
        %p556 = scmp.lt.s32.totalorder %s24, 0
        %s557 = scalar_select %p556, %s24, 0
        %s558 = sadd.s32 %s557, %s555
        %s559 = smul.addr %s558, 2
        %s560 = scalar_lea.vmem %s3, %s559
      $region56: #{_lambda_.12} parent=47 // pred_fallthru
        _
    $region48: #{_lambda_.12} parent=5 // pred_fallthru
      _
  $region6: #{_lambda_.12} parent=0 // loop_footer
    %s14 = sadd.s32 1, %s10
  $region7: #{_lambda_.12} parent=0 // loop_footer_branch
    %9 = sbr.rel target = $region3
  $region8: #{_lambda_.12} parent=0 // loop_exit
    _

// kernel: _lambda_.10
$region0: #{_lambda_.10}
  #allocation0 [shape = 'u32[]', space=smem, size = 0x4, offset = 0x4, fixed_abs, tag = 'smem constant byte address 0x4 - core index']
  #allocation1 [shape = 'u32[144,128]{1,0:T(1,128)}', space=vmem, size = 0x12000, scoped, tag = 'internal scratch']
  %s0 = inlined_call_operand.vmem [shape: bf16[128,128], index: 0, kind: input, shape index: {}]
  %s1 = inlined_call_operand.vmem [shape: f32[3,128], index: 1, kind: input, shape index: {}]
  %s2 = inlined_call_operand.vmem [shape: bf16[128,128], index: 2, kind: output, shape index: {}]
  %s3 = sld [smem:[#allocation0]]
  $region41: #{_lambda_.10} parent=0
    _
  %s5 = ssub.s32 1, %s3
  %s6 = scalar_select 0, %s5, %s3
  loop: start=0, step=1, limit=4
  $region2: #{_lambda_.10} parent=0 // loop_pre_header
    _
  $region3: #{_lambda_.10} parent=0 // loop_header
    %s8 = sphi 0, %s12
    %p9 = scmp.ge.s32.totalorder %s8, 4
    %s18 = sphi 0, %s20
    %s21 = sphi 0, %s18
    %s22 = sphi 0, %s21
    %s38 = sphi 0, %s22
    %s42 = sphi 0, %s42
    %s44 = sphi 0, %s42
    %s45 = sphi 0, %s44
    %s59 = sphi 0, %s45
    %s65 = sphi 0, %s67
    %s68 = sphi 0, %s65
    %s69 = sphi 0, %s68
    %s85 = sphi 0, %s69
  $region4: #{_lambda_.10} parent=0 // loop_header_branch
    %11 = sbr.rel (%p9) target = $region8
  $region5: #{_lambda_.10} parent=0 // loop_body
    %s13 = ssub.s32 %s8, 1
    %s14 = ssub.s32 %s8, 2
    %s15 = sadd.s32 %s8, 1
    %s16 = ssub.s32 %s8, %s15
    %p17 = scmp.eq.s32.totalorder %s16, 0
    %s19 = sadd.s32 %s18, 1
    %s20 = scalar_select %p17, %s18, %s19
    %p23 = pneg %p17
    %p24 = scmp.eq.s32.totalorder %s8, 1
    %p25 = por %p23, %p24
    %p26 = scmp.ne.s32.totalorder %s18, %s21
    %p27 = scmp.eq.s32.totalorder %s8, 0
    %p28 = por %p26, %p27
    %p29 = scmp.ne.s32.totalorder %s18, %s21
    %p30 = scmp.eq.s32.totalorder %s13, 1
    %p31 = por %p29, %p30
    %p32 = scmp.ne.s32.totalorder %s21, %s22
    %p33 = scmp.eq.s32.totalorder %s13, 0
    %p34 = por %p32, %p33
    %p35 = scmp.ne.s32.totalorder %s21, %s22
    %p36 = scmp.eq.s32.totalorder %s14, 1
    %p37 = por %p35, %p36
    %p39 = scmp.ne.s32.totalorder %s22, %s38
    %p40 = scmp.eq.s32.totalorder %s14, 0
    %p41 = por %p39, %p40
    %s43 = sadd.s32 %s42, 1
    %p46 = scmp.eq.s32.totalorder %s8, 1
    %p47 = scmp.ne.s32.totalorder %s42, %s44
    %p48 = scmp.eq.s32.totalorder %s8, 0
    %p49 = por %p47, %p48
    %p50 = scmp.ne.s32.totalorder %s42, %s44
    %p51 = scmp.eq.s32.totalorder %s13, 1
    %p52 = por %p50, %p51
    %p53 = scmp.ne.s32.totalorder %s44, %s45
    %p54 = scmp.eq.s32.totalorder %s13, 0
    %p55 = por %p53, %p54
    %p56 = scmp.ne.s32.totalorder %s44, %s45
    %p57 = scmp.eq.s32.totalorder %s14, 1
    %p58 = por %p56, %p57
    %p60 = scmp.ne.s32.totalorder %s45, %s59
    %p61 = scmp.eq.s32.totalorder %s14, 0
    %p62 = por %p60, %p61
    %s63 = ssub.s32 %s8, %s15
    %p64 = scmp.eq.s32.totalorder %s63, 0
    %s66 = sadd.s32 %s65, 1
    %s67 = scalar_select %p64, %s65, %s66
    %p70 = pneg %p64
    %p71 = scmp.eq.s32.totalorder %s8, 1
    %p72 = por %p70, %p71
    %p73 = scmp.ne.s32.totalorder %s65, %s68
    %p74 = scmp.eq.s32.totalorder %s8, 0
    %p75 = por %p73, %p74
    %p76 = scmp.ne.s32.totalorder %s65, %s68
    %p77 = scmp.eq.s32.totalorder %s13, 1
    %p78 = por %p76, %p77
    %p79 = scmp.ne.s32.totalorder %s68, %s69
    %p80 = scmp.eq.s32.totalorder %s13, 0
    %p81 = por %p79, %p80
    %p82 = scmp.ne.s32.totalorder %s68, %s69
    %p83 = scmp.eq.s32.totalorder %s14, 1
    %p84 = por %p82, %p83
    %p86 = scmp.ne.s32.totalorder %s69, %s85
    %p87 = scmp.eq.s32.totalorder %s14, 0
    %p88 = por %p86, %p87
    %p89 = scmp.le.s32.totalorder 1, %s8
    %p90 = scmp.lt.s32.totalorder %s8, 3
    %p91 = pnand %p89, %p90
    %p92 = pneg %p91
    // Predicated region
    $region9: #{_lambda_.10} parent=5 // pred_check
      _
    $region10: #{_lambda_.10} parent=5 // pred_check_branch
      %94 = sbr.rel (%p91) target = $region12
    $region11: #{_lambda_.10} parent=5 // pred_region
      %s95 = ssub.s32 %s8, 1
      // Predicated region
      $region13: #{_lambda_.10} parent=11 // pred_check
        %p96 = pneg %p55
      $region14: #{_lambda_.10} parent=11 // pred_check_branch
        %98 = sbr.rel (%p96) target = $region16
      $region15: #{_lambda_.10} parent=11 // pred_region
        _
      $region16: #{_lambda_.10} parent=11 // pred_fallthru
        _
    $region12: #{_lambda_.10} parent=5 // pred_fallthru
      _
    %p99 = scmp.lt.s32.totalorder %s8, 2
    // Predicated region
    $region17: #{_lambda_.10} parent=5 // pred_check
      %p100 = pneg %p99
    $region18: #{_lambda_.10} parent=5 // pred_check_branch
      %102 = sbr.rel (%p100) target = $region20
    $region19: #{_lambda_.10} parent=5 // pred_region
      // Predicated region
      $region21: #{_lambda_.10} parent=19 // pred_check
        %p103 = pneg %p28
      $region22: #{_lambda_.10} parent=19 // pred_check_branch
        %105 = sbr.rel (%p103) target = $region24
      $region23: #{_lambda_.10} parent=19 // pred_region
        %s106 = smul.u32 8, %s8
        %p107 = scmp.lt.s32.totalorder %s106, 15
        %s108 = scalar_select %p107, %s106, 15
        %s109 = smul.addr %s108, 4
        %s110 = scalar_lea.vmem %s0, %s109
        %s111 = smul.u32 8, %s8
      $region24: #{_lambda_.10} parent=19 // pred_fallthru
        _
    $region20: #{_lambda_.10} parent=5 // pred_fallthru
      _
    %p112 = scmp.le.s32.totalorder 1, %s8
    %p113 = scmp.lt.s32.totalorder %s8, 3
    %p114 = pnand %p112, %p113
    %p115 = pneg %p114
    // Predicated region
    $region25: #{_lambda_.10} parent=5 // pred_check
      _
    $region26: #{_lambda_.10} parent=5 // pred_check_branch
      %117 = sbr.rel (%p114) target = $region28
    $region27: #{_lambda_.10} parent=5 // pred_region
      %s118 = ssub.s32 %s8, 1
      %s119 = smul.u32 8, %s13
      %p120 = scmp.lt.s32.totalorder %s119, 15
      %s121 = scalar_select %p120, %s119, 15
      %s122 = smul.addr %s121, 4
      %s123 = scalar_lea.vmem %s0, %s122
      %p124 = pneg %p34
      %p125 = pneg %p31
      %p126 = pneg %p55
      %p127 = pneg %p52
      %p128 = pneg %p81
      %p129 = pneg %p78
      %s130 = smul.u32 8, %s13
      %p131 = scmp.lt.s32.totalorder %s130, 15
      %s132 = scalar_select %p131, %s130, 15
      %s133 = smul.addr %s132, 4
      %s134 = scalar_lea.vmem %s2, %s133
      %s135 = smul.u32 8, %s13
      %p136 = scmp.lt.s32.totalorder %s135, 15
      %s137 = scalar_select %p136, %s135, 15
      %s138 = smul.addr %s137, 4
      %s139 = scalar_lea.vmem %s0, %s138
      %s140 = smul.u32 8, %s13
      %s141 = smul.u32 8, %s13
      %p142 = scmp.lt.s32.totalorder %s141, 15
      %s143 = scalar_select %p142, %s141, 15
      %s144 = smul.addr %s143, 4
      %s145 = scalar_lea.vmem %s2, %s144
      %s146 = smul.u32 8, %s13
      %v147 = vld [vmem:[%s139] sm:$0xf]
      %v148 = vld [vmem:[%s139 + $0x4] sm:$0xf]
      %v149 = vld [vmem:[%s139 + $0x8] sm:$0xf]
      %v150 = vld [vmem:[%s139 + $0xc] sm:$0xf]
      %v151 = vld [vmem:[%s139 + $0x10] sm:$0xf]
      %v152 = vld [vmem:[%s139 + $0x14] sm:$0xf]
      %v153 = vld [vmem:[%s139 + $0x18] sm:$0xf]
      %v154 = vld [vmem:[%s139 + $0x1c] sm:$0xf]
      %v155 = vunpack.c.l.bf16 %v147
      %v156 = vunpack.c.l.bf16 %v148
      %v157 = vunpack.c.l.bf16 %v149
      %v158 = vunpack.c.l.bf16 %v150
      %v159 = vunpack.c.l.bf16 %v151
      %v160 = vunpack.c.l.bf16 %v152
      %v161 = vunpack.c.l.bf16 %v153
      %v162 = vunpack.c.l.bf16 %v154
      %v163 = vld [vmem:[%s1] sm:$0x1]
      %v164 = vlaneseq
      %v165 = vshrl.u32 %v164, 7
      %v166 = vsub.s32 0, %v165
      %v167 = vrot.slane %v163, %v166
      %v168 = vmul.f32 %v155, %v167
      %v169 = vmul.f32 %v156, %v167
      %v170 = vmul.f32 %v157, %v167
      %v171 = vmul.f32 %v158, %v167
      %v172 = vmul.f32 %v159, %v167
      %v173 = vmul.f32 %v160, %v167
      %v174 = vmul.f32 %v161, %v167
      %v175 = vmul.f32 %v162, %v167
      %v176 = vld [vmem:[%s1 + $0x2] sm:$0x1]
      %v177 = vlaneseq
      %v178 = vshrl.u32 %v177, 7
      %v179 = vsub.s32 0, %v178
      %v180 = vrot.slane %v176, %v179
      %v181 = vadd.f32 %v168, %v180
      %v182 = vadd.f32 %v169, %v180
      %v183 = vadd.f32 %v170, %v180
      %v184 = vadd.f32 %v171, %v180
      %v185 = vadd.f32 %v172, %v180
      %v186 = vadd.f32 %v173, %v180
      %v187 = vadd.f32 %v174, %v180
      %v188 = vadd.f32 %v175, %v180
      %v189 = vmax.f32 %v181, 0.0
      %v190 = vmax.f32 %v182, 0.0
      %v191 = vmax.f32 %v183, 0.0
      %v192 = vmax.f32 %v184, 0.0
      %v193 = vmax.f32 %v185, 0.0
      %v194 = vmax.f32 %v186, 0.0
      %v195 = vmax.f32 %v187, 0.0
      %v196 = vmax.f32 %v188, 0.0
      %v197 = vpack.c.bf16 %v190, %v189
      %v198 = vpack.c.bf16 %v192, %v191
      %v199 = vpack.c.bf16 %v194, %v193
      %v200 = vpack.c.bf16 %v196, %v195
      %v205 = vunpack.c.l.b16 %v197
      %v206 = vunpack.c.h.b16 %v197
      %v207 = vunpack.c.l.b16 %v198
      %v208 = vunpack.c.h.b16 %v198
      %v209 = vunpack.c.l.b16 %v199
      %v210 = vunpack.c.h.b16 %v199
      %v211 = vunpack.c.l.b16 %v200
      %v212 = vunpack.c.h.b16 %v200
      %v213 = vpack.c.b16 %v205, %v205
      %v214 = vpack.c.b16 %v206, %v206
      %v215 = vpack.c.b16 %v207, %v207
      %v216 = vpack.c.b16 %v208, %v208
      %v217 = vpack.c.b16 %v209, %v209
      %v218 = vpack.c.b16 %v210, %v210
      %v219 = vpack.c.b16 %v211, %v211
      %v220 = vpack.c.b16 %v212, %v212
      %229 = vst [vmem:[%s145] sm:$0xf] %v213
      %230 = vst [vmem:[%s145 + $0x4] sm:$0xf] %v214
      %231 = vst [vmem:[%s145 + $0x8] sm:$0xf] %v215
      %232 = vst [vmem:[%s145 + $0xc] sm:$0xf] %v216
      %233 = vst [vmem:[%s145 + $0x10] sm:$0xf] %v217
      %234 = vst [vmem:[%s145 + $0x14] sm:$0xf] %v218
      %235 = vst [vmem:[%s145 + $0x18] sm:$0xf] %v219
      %236 = vst [vmem:[%s145 + $0x1c] sm:$0xf] %v220
      %s237 = smul.u32 8, %s13
      %p238 = scmp.lt.s32.totalorder %s237, 15
      %s239 = scalar_select %p238, %s237, 15
      %s240 = smul.addr %s239, 4
      %s241 = scalar_lea.vmem %s2, %s240
      // Predicated region
      $region29: #{_lambda_.10} parent=27 // pred_check
        %p242 = pneg %p78
      $region30: #{_lambda_.10} parent=27 // pred_check_branch
        %244 = sbr.rel (%p242) target = $region32
      $region31: #{_lambda_.10} parent=27 // pred_region
        %s245 = smul.u32 8, %s13
      $region32: #{_lambda_.10} parent=27 // pred_fallthru
        _
    $region28: #{_lambda_.10} parent=5 // pred_fallthru
      _
    %p246 = scmp.le.s32.totalorder 2, %s8
    // Predicated region
    $region33: #{_lambda_.10} parent=5 // pred_check
      %p247 = pneg %p246
    $region34: #{_lambda_.10} parent=5 // pred_check_branch
      %249 = sbr.rel (%p247) target = $region36
    $region35: #{_lambda_.10} parent=5 // pred_region
      %s250 = ssub.s32 %s8, 2
      // Predicated region
      $region37: #{_lambda_.10} parent=35 // pred_check
        %p251 = pneg %p84
      $region38: #{_lambda_.10} parent=35 // pred_check_branch
        %253 = sbr.rel (%p251) target = $region40
      $region39: #{_lambda_.10} parent=35 // pred_region
        %s254 = smul.u32 8, %s14
        %p255 = scmp.lt.s32.totalorder %s254, 15
        %s256 = scalar_select %p255, %s254, 15
        %s257 = smul.addr %s256, 4
        %s258 = scalar_lea.vmem %s2, %s257
      $region40: #{_lambda_.10} parent=35 // pred_fallthru
        _
    $region36: #{_lambda_.10} parent=5 // pred_fallthru
      _
  $region6: #{_lambda_.10} parent=0 // loop_footer
    %s12 = sadd.s32 1, %s8
  $region7: #{_lambda_.10} parent=0 // loop_footer_branch
    %7 = sbr.rel target = $region3
  $region8: #{_lambda_.10} parent=0 // loop_exit
    _

// kernel: _lambda_.13
$region0: #{_lambda_.13}
  #allocation0 [shape = 'u32[]', space=smem, size = 0x4, offset = 0x4, fixed_abs, tag = 'smem constant byte address 0x4 - core index']
  #allocation1 [shape = 'u32[144,128]{1,0:T(1,128)}', space=vmem, size = 0x12000, scoped, tag = 'internal scratch']
  %s0 = inlined_call_operand.vmem [shape: bf16[128,128], index: 0, kind: input, shape index: {}]
  %s1 = inlined_call_operand.vmem [shape: bf16[128,128], index: 1, kind: input, shape index: {}]
  %s2 = inlined_call_operand.vmem [shape: f32[3,128], index: 2, kind: input, shape index: {}]
  %s3 = inlined_call_operand.vmem [shape: bf16[128,128], index: 3, kind: output, shape index: {}]
  %s4 = sld [smem:[#allocation0]]
  $region45: #{_lambda_.13} parent=0
    _
  %s6 = ssub.s32 1, %s4
  %s7 = scalar_select 0, %s6, %s4
  loop: start=0, step=1, limit=4
  $region2: #{_lambda_.13} parent=0 // loop_pre_header
    _
  $region3: #{_lambda_.13} parent=0 // loop_header
    %s9 = sphi 0, %s13
    %p10 = scmp.ge.s32.totalorder %s9, 4
    %s19 = sphi 0, %s21
    %s22 = sphi 0, %s19
    %s23 = sphi 0, %s22
    %s39 = sphi 0, %s23
    %s45 = sphi 0, %s47
    %s48 = sphi 0, %s45
    %s49 = sphi 0, %s48
    %s65 = sphi 0, %s49
    %s69 = sphi 0, %s69
    %s71 = sphi 0, %s69
    %s72 = sphi 0, %s71
    %s86 = sphi 0, %s72
    %s92 = sphi 0, %s94
    %s95 = sphi 0, %s92
    %s96 = sphi 0, %s95
    %s112 = sphi 0, %s96
  $region4: #{_lambda_.13} parent=0 // loop_header_branch
    %12 = sbr.rel (%p10) target = $region8
  $region5: #{_lambda_.13} parent=0 // loop_body
    %s14 = ssub.s32 %s9, 1
    %s15 = ssub.s32 %s9, 2
    %s16 = sadd.s32 %s9, 1
    %s17 = ssub.s32 %s9, %s16
    %p18 = scmp.eq.s32.totalorder %s17, 0
    %s20 = sadd.s32 %s19, 1
    %s21 = scalar_select %p18, %s19, %s20
    %p24 = pneg %p18
    %p25 = scmp.eq.s32.totalorder %s9, 1
    %p26 = por %p24, %p25
    %p27 = scmp.ne.s32.totalorder %s19, %s22
    %p28 = scmp.eq.s32.totalorder %s9, 0
    %p29 = por %p27, %p28
    %p30 = scmp.ne.s32.totalorder %s19, %s22
    %p31 = scmp.eq.s32.totalorder %s14, 1
    %p32 = por %p30, %p31
    %p33 = scmp.ne.s32.totalorder %s22, %s23
    %p34 = scmp.eq.s32.totalorder %s14, 0
    %p35 = por %p33, %p34
    %p36 = scmp.ne.s32.totalorder %s22, %s23
    %p37 = scmp.eq.s32.totalorder %s15, 1
    %p38 = por %p36, %p37
    %p40 = scmp.ne.s32.totalorder %s23, %s39
    %p41 = scmp.eq.s32.totalorder %s15, 0
    %p42 = por %p40, %p41
    %s43 = ssub.s32 %s9, %s16
    %p44 = scmp.eq.s32.totalorder %s43, 0
    %s46 = sadd.s32 %s45, 1
    %s47 = scalar_select %p44, %s45, %s46
    %p50 = pneg %p44
    %p51 = scmp.eq.s32.totalorder %s9, 1
    %p52 = por %p50, %p51
    %p53 = scmp.ne.s32.totalorder %s45, %s48
    %p54 = scmp.eq.s32.totalorder %s9, 0
    %p55 = por %p53, %p54
    %p56 = scmp.ne.s32.totalorder %s45, %s48
    %p57 = scmp.eq.s32.totalorder %s14, 1
    %p58 = por %p56, %p57
    %p59 = scmp.ne.s32.totalorder %s48, %s49
    %p60 = scmp.eq.s32.totalorder %s14, 0
    %p61 = por %p59, %p60
    %p62 = scmp.ne.s32.totalorder %s48, %s49
    %p63 = scmp.eq.s32.totalorder %s15, 1
    %p64 = por %p62, %p63
    %p66 = scmp.ne.s32.totalorder %s49, %s65
    %p67 = scmp.eq.s32.totalorder %s15, 0
    %p68 = por %p66, %p67
    %s70 = sadd.s32 %s69, 1
    %p73 = scmp.eq.s32.totalorder %s9, 1
    %p74 = scmp.ne.s32.totalorder %s69, %s71
    %p75 = scmp.eq.s32.totalorder %s9, 0
    %p76 = por %p74, %p75
    %p77 = scmp.ne.s32.totalorder %s69, %s71
    %p78 = scmp.eq.s32.totalorder %s14, 1
    %p79 = por %p77, %p78
    %p80 = scmp.ne.s32.totalorder %s71, %s72
    %p81 = scmp.eq.s32.totalorder %s14, 0
    %p82 = por %p80, %p81
    %p83 = scmp.ne.s32.totalorder %s71, %s72
    %p84 = scmp.eq.s32.totalorder %s15, 1
    %p85 = por %p83, %p84
    %p87 = scmp.ne.s32.totalorder %s72, %s86
    %p88 = scmp.eq.s32.totalorder %s15, 0
    %p89 = por %p87, %p88
    %s90 = ssub.s32 %s9, %s16
    %p91 = scmp.eq.s32.totalorder %s90, 0
    %s93 = sadd.s32 %s92, 1
    %s94 = scalar_select %p91, %s92, %s93
    %p97 = pneg %p91
    %p98 = scmp.eq.s32.totalorder %s9, 1
    %p99 = por %p97, %p98
    %p100 = scmp.ne.s32.totalorder %s92, %s95
    %p101 = scmp.eq.s32.totalorder %s9, 0
    %p102 = por %p100, %p101
    %p103 = scmp.ne.s32.totalorder %s92, %s95
    %p104 = scmp.eq.s32.totalorder %s14, 1
    %p105 = por %p103, %p104
    %p106 = scmp.ne.s32.totalorder %s95, %s96
    %p107 = scmp.eq.s32.totalorder %s14, 0
    %p108 = por %p106, %p107
    %p109 = scmp.ne.s32.totalorder %s95, %s96
    %p110 = scmp.eq.s32.totalorder %s15, 1
    %p111 = por %p109, %p110
    %p113 = scmp.ne.s32.totalorder %s96, %s112
    %p114 = scmp.eq.s32.totalorder %s15, 0
    %p115 = por %p113, %p114
    %p116 = scmp.le.s32.totalorder 1, %s9
    %p117 = scmp.lt.s32.totalorder %s9, 3
    %p118 = pnand %p116, %p117
    %p119 = pneg %p118
    // Predicated region
    $region9: #{_lambda_.13} parent=5 // pred_check
      _
    $region10: #{_lambda_.13} parent=5 // pred_check_branch
      %121 = sbr.rel (%p118) target = $region12
    $region11: #{_lambda_.13} parent=5 // pred_region
      %s122 = ssub.s32 %s9, 1
      // Predicated region
      $region13: #{_lambda_.13} parent=11 // pred_check
        %p123 = pneg %p82
      $region14: #{_lambda_.13} parent=11 // pred_check_branch
        %125 = sbr.rel (%p123) target = $region16
      $region15: #{_lambda_.13} parent=11 // pred_region
        _
      $region16: #{_lambda_.13} parent=11 // pred_fallthru
        _
    $region12: #{_lambda_.13} parent=5 // pred_fallthru
      _
    %p126 = scmp.lt.s32.totalorder %s9, 2
    // Predicated region
    $region17: #{_lambda_.13} parent=5 // pred_check
      %p127 = pneg %p126
    $region18: #{_lambda_.13} parent=5 // pred_check_branch
      %129 = sbr.rel (%p127) target = $region20
    $region19: #{_lambda_.13} parent=5 // pred_region
      // Predicated region
      $region21: #{_lambda_.13} parent=19 // pred_check
        %p130 = pneg %p29
      $region22: #{_lambda_.13} parent=19 // pred_check_branch
        %132 = sbr.rel (%p130) target = $region24
      $region23: #{_lambda_.13} parent=19 // pred_region
        %s133 = smul.u32 8, %s9
        %p134 = scmp.lt.s32.totalorder %s133, 15
        %s135 = scalar_select %p134, %s133, 15
        %s136 = smul.addr %s135, 4
        %s137 = scalar_lea.vmem %s0, %s136
        %s138 = smul.u32 8, %s9
      $region24: #{_lambda_.13} parent=19 // pred_fallthru
        _
      // Predicated region
      $region25: #{_lambda_.13} parent=19 // pred_check
        %p139 = pneg %p55
      $region26: #{_lambda_.13} parent=19 // pred_check_branch
        %141 = sbr.rel (%p139) target = $region28
      $region27: #{_lambda_.13} parent=19 // pred_region
        %s142 = smul.u32 8, %s9
        %p143 = scmp.lt.s32.totalorder %s142, 15
        %s144 = scalar_select %p143, %s142, 15
        %s145 = smul.addr %s144, 4
        %s146 = scalar_lea.vmem %s1, %s145
        %s147 = smul.u32 8, %s9
      $region28: #{_lambda_.13} parent=19 // pred_fallthru
        _
    $region20: #{_lambda_.13} parent=5 // pred_fallthru
      _
    %p148 = scmp.le.s32.totalorder 1, %s9
    %p149 = scmp.lt.s32.totalorder %s9, 3
    %p150 = pnand %p148, %p149
    %p151 = pneg %p150
    // Predicated region
    $region29: #{_lambda_.13} parent=5 // pred_check
      _
    $region30: #{_lambda_.13} parent=5 // pred_check_branch
      %153 = sbr.rel (%p150) target = $region32
    $region31: #{_lambda_.13} parent=5 // pred_region
      %s154 = ssub.s32 %s9, 1
      %s155 = smul.u32 8, %s14
      %p156 = scmp.lt.s32.totalorder %s155, 15
      %s157 = scalar_select %p156, %s155, 15
      %s158 = smul.addr %s157, 4
      %s159 = scalar_lea.vmem %s0, %s158
      %p160 = pneg %p35
      %p161 = pneg %p32
      %s162 = smul.u32 8, %s14
      %p163 = scmp.lt.s32.totalorder %s162, 15
      %s164 = scalar_select %p163, %s162, 15
      %s165 = smul.addr %s164, 4
      %s166 = scalar_lea.vmem %s1, %s165
      %p167 = pneg %p61
      %p168 = pneg %p58
      %p169 = pneg %p82
      %p170 = pneg %p79
      %p171 = pneg %p108
      %p172 = pneg %p105
      %s173 = smul.u32 8, %s14
      %p174 = scmp.lt.s32.totalorder %s173, 15
      %s175 = scalar_select %p174, %s173, 15
      %s176 = smul.addr %s175, 4
      %s177 = scalar_lea.vmem %s3, %s176
      %s178 = smul.u32 8, %s14
      %p179 = scmp.lt.s32.totalorder %s178, 15
      %s180 = scalar_select %p179, %s178, 15
      %s181 = smul.addr %s180, 4
      %s182 = scalar_lea.vmem %s0, %s181
      %s183 = smul.u32 8, %s14
      %s184 = smul.u32 8, %s14
      %p185 = scmp.lt.s32.totalorder %s184, 15
      %s186 = scalar_select %p185, %s184, 15
      %s187 = smul.addr %s186, 4
      %s188 = scalar_lea.vmem %s1, %s187
      %s189 = smul.u32 8, %s14
      %s190 = smul.u32 8, %s14
      %p191 = scmp.lt.s32.totalorder %s190, 15
      %s192 = scalar_select %p191, %s190, 15
      %s193 = smul.addr %s192, 4
      %s194 = scalar_lea.vmem %s3, %s193
      %s195 = smul.u32 8, %s14
      %v196 = vld [vmem:[%s182] sm:$0xf]
      %v197 = vld [vmem:[%s182 + $0x4] sm:$0xf]
      %v198 = vld [vmem:[%s182 + $0x8] sm:$0xf]
      %v199 = vld [vmem:[%s182 + $0xc] sm:$0xf]
      %v200 = vld [vmem:[%s182 + $0x10] sm:$0xf]
      %v201 = vld [vmem:[%s182 + $0x14] sm:$0xf]
      %v202 = vld [vmem:[%s182 + $0x18] sm:$0xf]
      %v203 = vld [vmem:[%s182 + $0x1c] sm:$0xf]
      %v204 = vunpack.c.l.bf16 %v196
      %v205 = vunpack.c.l.bf16 %v197
      %v206 = vunpack.c.l.bf16 %v198
      %v207 = vunpack.c.l.bf16 %v199
      %v208 = vunpack.c.l.bf16 %v200
      %v209 = vunpack.c.l.bf16 %v201
      %v210 = vunpack.c.l.bf16 %v202
      %v211 = vunpack.c.l.bf16 %v203
      %v212 = vld [vmem:[%s2] sm:$0x1]
      %v213 = vlaneseq
      %v214 = vshrl.u32 %v213, 7
      %v215 = vsub.s32 0, %v214
      %v216 = vrot.slane %v212, %v215
      %v217 = vmul.f32 %v204, %v216
      %v218 = vmul.f32 %v205, %v216
      %v219 = vmul.f32 %v206, %v216
      %v220 = vmul.f32 %v207, %v216
      %v221 = vmul.f32 %v208, %v216
      %v222 = vmul.f32 %v209, %v216
      %v223 = vmul.f32 %v210, %v216
      %v224 = vmul.f32 %v211, %v216
      %v225 = vld [vmem:[%s188] sm:$0xf]
      %v226 = vld [vmem:[%s188 + $0x4] sm:$0xf]
      %v227 = vld [vmem:[%s188 + $0x8] sm:$0xf]
      %v228 = vld [vmem:[%s188 + $0xc] sm:$0xf]
      %v229 = vld [vmem:[%s188 + $0x10] sm:$0xf]
      %v230 = vld [vmem:[%s188 + $0x14] sm:$0xf]
      %v231 = vld [vmem:[%s188 + $0x18] sm:$0xf]
      %v232 = vld [vmem:[%s188 + $0x1c] sm:$0xf]
      %v233 = vunpack.c.l.bf16 %v225
      %v234 = vunpack.c.l.bf16 %v226
      %v235 = vunpack.c.l.bf16 %v227
      %v236 = vunpack.c.l.bf16 %v228
      %v237 = vunpack.c.l.bf16 %v229
      %v238 = vunpack.c.l.bf16 %v230
      %v239 = vunpack.c.l.bf16 %v231
      %v240 = vunpack.c.l.bf16 %v232
      %v241 = vld [vmem:[%s2 + $0x1] sm:$0x1]
      %v242 = vlaneseq
      %v243 = vshrl.u32 %v242, 7
      %v244 = vsub.s32 0, %v243
      %v245 = vrot.slane %v241, %v244
      %v246 = vmul.f32 %v233, %v245
      %v247 = vmul.f32 %v234, %v245
      %v248 = vmul.f32 %v235, %v245
      %v249 = vmul.f32 %v236, %v245
      %v250 = vmul.f32 %v237, %v245
      %v251 = vmul.f32 %v238, %v245
      %v252 = vmul.f32 %v239, %v245
      %v253 = vmul.f32 %v240, %v245
      %v254 = vadd.f32 %v217, %v246
      %v255 = vadd.f32 %v218, %v247
      %v256 = vadd.f32 %v219, %v248
      %v257 = vadd.f32 %v220, %v249
      %v258 = vadd.f32 %v221, %v250
      %v259 = vadd.f32 %v222, %v251
      %v260 = vadd.f32 %v223, %v252
      %v261 = vadd.f32 %v224, %v253
      %v262 = vld [vmem:[%s2 + $0x2] sm:$0x1]
      %v263 = vlaneseq
      %v264 = vshrl.u32 %v263, 7
      %v265 = vsub.s32 0, %v264
      %v266 = vrot.slane %v262, %v265
      %v267 = vadd.f32 %v254, %v266
      %v268 = vadd.f32 %v255, %v266
      %v269 = vadd.f32 %v256, %v266
      %v270 = vadd.f32 %v257, %v266
      %v271 = vadd.f32 %v258, %v266
      %v272 = vadd.f32 %v259, %v266
      %v273 = vadd.f32 %v260, %v266
      %v274 = vadd.f32 %v261, %v266
      %v275 = vmax.f32 %v267, 0.0
      %v276 = vmax.f32 %v268, 0.0
      %v277 = vmax.f32 %v269, 0.0
      %v278 = vmax.f32 %v270, 0.0
      %v279 = vmax.f32 %v271, 0.0
      %v280 = vmax.f32 %v272, 0.0
      %v281 = vmax.f32 %v273, 0.0
      %v282 = vmax.f32 %v274, 0.0
      %v283 = vpack.c.bf16 %v276, %v275
      %v284 = vpack.c.bf16 %v278, %v277
      %v285 = vpack.c.bf16 %v280, %v279
      %v286 = vpack.c.bf16 %v282, %v281
      %v291 = vunpack.c.l.b16 %v283
      %v292 = vunpack.c.h.b16 %v283
      %v293 = vunpack.c.l.b16 %v284
      %v294 = vunpack.c.h.b16 %v284
      %v295 = vunpack.c.l.b16 %v285
      %v296 = vunpack.c.h.b16 %v285
      %v297 = vunpack.c.l.b16 %v286
      %v298 = vunpack.c.h.b16 %v286
      %v299 = vpack.c.b16 %v291, %v291
      %v300 = vpack.c.b16 %v292, %v292
      %v301 = vpack.c.b16 %v293, %v293
      %v302 = vpack.c.b16 %v294, %v294
      %v303 = vpack.c.b16 %v295, %v295
      %v304 = vpack.c.b16 %v296, %v296
      %v305 = vpack.c.b16 %v297, %v297
      %v306 = vpack.c.b16 %v298, %v298
      %315 = vst [vmem:[%s194] sm:$0xf] %v299
      %316 = vst [vmem:[%s194 + $0x4] sm:$0xf] %v300
      %317 = vst [vmem:[%s194 + $0x8] sm:$0xf] %v301
      %318 = vst [vmem:[%s194 + $0xc] sm:$0xf] %v302
      %319 = vst [vmem:[%s194 + $0x10] sm:$0xf] %v303
      %320 = vst [vmem:[%s194 + $0x14] sm:$0xf] %v304
      %321 = vst [vmem:[%s194 + $0x18] sm:$0xf] %v305
      %322 = vst [vmem:[%s194 + $0x1c] sm:$0xf] %v306
      %s323 = smul.u32 8, %s14
      %p324 = scmp.lt.s32.totalorder %s323, 15
      %s325 = scalar_select %p324, %s323, 15
      %s326 = smul.addr %s325, 4
      %s327 = scalar_lea.vmem %s3, %s326
      // Predicated region
      $region33: #{_lambda_.13} parent=31 // pred_check
        %p328 = pneg %p105
      $region34: #{_lambda_.13} parent=31 // pred_check_branch
        %330 = sbr.rel (%p328) target = $region36
      $region35: #{_lambda_.13} parent=31 // pred_region
        %s331 = smul.u32 8, %s14
      $region36: #{_lambda_.13} parent=31 // pred_fallthru
        _
    $region32: #{_lambda_.13} parent=5 // pred_fallthru
      _
    %p332 = scmp.le.s32.totalorder 2, %s9
    // Predicated region
    $region37: #{_lambda_.13} parent=5 // pred_check
      %p333 = pneg %p332
    $region38: #{_lambda_.13} parent=5 // pred_check_branch
      %335 = sbr.rel (%p333) target = $region40
    $region39: #{_lambda_.13} parent=5 // pred_region
      %s336 = ssub.s32 %s9, 2
      // Predicated region
      $region41: #{_lambda_.13} parent=39 // pred_check
        %p337 = pneg %p111
      $region42: #{_lambda_.13} parent=39 // pred_check_branch
        %339 = sbr.rel (%p337) target = $region44
      $region43: #{_lambda_.13} parent=39 // pred_region
        %s340 = smul.u32 8, %s15
        %p341 = scmp.lt.s32.totalorder %s340, 15
        %s342 = scalar_select %p341, %s340, 15
        %s343 = smul.addr %s342, 4
        %s344 = scalar_lea.vmem %s3, %s343
      $region44: #{_lambda_.13} parent=39 // pred_fallthru
        _
    $region40: #{_lambda_.13} parent=5 // pred_fallthru
      _
  $region6: #{_lambda_.13} parent=0 // loop_footer
    %s13 = sadd.s32 1, %s9
  $region7: #{_lambda_.13} parent=0 // loop_footer_branch
    %8 = sbr.rel target = $region3
  $region8: #{_lambda_.13} parent=0 // loop_exit
    _

// kernel: _lambda_.9
$region0: #{_lambda_.9}
  #allocation0 [shape = 'u32[]', space=smem, size = 0x4, offset = 0x4, fixed_abs, tag = 'smem constant byte address 0x4 - core index']
  #allocation1 [shape = 'u32[144,128]{1,0:T(1,128)}', space=vmem, size = 0x12000, scoped, tag = 'internal scratch']
  #allocation2 [shape = 'f32[64,128]{1,0:T(8,128)}', space=vmem, size = 0x8000, scoped, tag = 'scratch operand']
  %s0 = inlined_call_operand.vmem [shape: bf16[8,9,9,128], index: 0, kind: input, shape index: {}]
  %s1 = inlined_call_operand.vmem [shape: bf16[9,128,128], index: 1, kind: input, shape index: {}]
  %s2 = inlined_call_operand.vmem [shape: bf16[2,8,8,128], index: 2, kind: output, shape index: {0}]
  %s3 = inlined_call_operand.vmem [shape: f32[2,2,128], index: 3, kind: output, shape index: {1}]
  %4 = xla_tuple %s2, %s3
  %s5 = sld [smem:[#allocation0]]
  $region57: #{_lambda_.9} parent=0
    _
  %s7 = ssub.s32 1, %s5
  %s8 = scalar_select 0, %s7, %s5
  loop: start=0, step=1, limit=4
  $region2: #{_lambda_.9} parent=0 // loop_pre_header
    _
  $region3: #{_lambda_.9} parent=0 // loop_header
    %s10 = sphi 0, %s14
    %p11 = scmp.ge.s32.totalorder %s10, 4
    %s17 = sphi 0, %s36
    %s18 = sphi 0, %s32
    %s19 = sphi 0, %s28
    %s20 = sphi 0, %s17
    %s21 = sphi 0, %s18
    %s22 = sphi 0, %s19
    %s23 = sphi 0, %s20
    %s24 = sphi 0, %s21
    %s25 = sphi 0, %s22
    %s41 = sphi 0, %s43
    %s44 = sphi 0, %s41
    %s45 = sphi 0, %s44
    %s61 = sphi 0, %s45
    %s69 = sphi 0, %s71
    %s72 = sphi 0, %s69
    %s73 = sphi 0, %s72
    %s89 = sphi 0, %s73
    %s97 = sphi 0, %s99
    %s100 = sphi 0, %s97
    %s101 = sphi 0, %s100
    %s117 = sphi 0, %s101
    %s125 = sphi 0, %s127
    %s128 = sphi 0, %s125
    %s129 = sphi 0, %s128
    %s145 = sphi 0, %s129
  $region4: #{_lambda_.9} parent=0 // loop_header_branch
    %13 = sbr.rel (%p11) target = $region8
  $region5: #{_lambda_.9} parent=0 // loop_body
    %s15 = ssub.s32 %s10, 1
    %s16 = ssub.s32 %s10, 2
    %s26 = sadd.s32 1, %s19
    %p27 = scmp.ge.s32.totalorder %s26, 1
    %s28 = scalar_select %p27, 0, %s26
    %s29 = sadd.s32 1, %s18
    %s30 = scalar_select %p27, %s29, %s18
    %p31 = scmp.ge.s32.totalorder %s30, 1
    %s32 = scalar_select %p31, 0, %s30
    %s33 = sadd.s32 1, %s17
    %s34 = scalar_select %p31, %s33, %s17
    %p35 = scmp.ge.s32.totalorder %s34, 2
    %s36 = scalar_select %p35, 0, %s34
    %s37 = ssub.s32 %s17, %s36
    %s38 = ssub.s32 %s19, %s28
    %s39 = sor.u32 %s37, %s38
    %p40 = scmp.eq.s32.totalorder %s39, 0
    %s42 = sadd.s32 %s41, 1
    %s43 = scalar_select %p40, %s41, %s42
    %p46 = pneg %p40
    %p47 = scmp.eq.s32.totalorder %s10, 1
    %p48 = por %p46, %p47
    %p49 = scmp.ne.s32.totalorder %s41, %s44
    %p50 = scmp.eq.s32.totalorder %s10, 0
    %p51 = por %p49, %p50
    %p52 = scmp.ne.s32.totalorder %s41, %s44
    %p53 = scmp.eq.s32.totalorder %s15, 1
    %p54 = por %p52, %p53
    %p55 = scmp.ne.s32.totalorder %s44, %s45
    %p56 = scmp.eq.s32.totalorder %s15, 0
    %p57 = por %p55, %p56
    %p58 = scmp.ne.s32.totalorder %s44, %s45
    %p59 = scmp.eq.s32.totalorder %s16, 1
    %p60 = por %p58, %p59
    %p62 = scmp.ne.s32.totalorder %s45, %s61
    %p63 = scmp.eq.s32.totalorder %s16, 0
    %p64 = por %p62, %p63
    %s65 = ssub.s32 %s19, %s28
    %s66 = ssub.s32 %s18, %s32
    %s67 = sor.u32 %s65, %s66
    %p68 = scmp.eq.s32.totalorder %s67, 0
    %s70 = sadd.s32 %s69, 1
    %s71 = scalar_select %p68, %s69, %s70
    %p74 = pneg %p68
    %p75 = scmp.eq.s32.totalorder %s10, 1
    %p76 = por %p74, %p75
    %p77 = scmp.ne.s32.totalorder %s69, %s72
    %p78 = scmp.eq.s32.totalorder %s10, 0
    %p79 = por %p77, %p78
    %p80 = scmp.ne.s32.totalorder %s69, %s72
    %p81 = scmp.eq.s32.totalorder %s15, 1
    %p82 = por %p80, %p81
    %p83 = scmp.ne.s32.totalorder %s72, %s73
    %p84 = scmp.eq.s32.totalorder %s15, 0
    %p85 = por %p83, %p84
    %p86 = scmp.ne.s32.totalorder %s72, %s73
    %p87 = scmp.eq.s32.totalorder %s16, 1
    %p88 = por %p86, %p87
    %p90 = scmp.ne.s32.totalorder %s73, %s89
    %p91 = scmp.eq.s32.totalorder %s16, 0
    %p92 = por %p90, %p91
    %s93 = ssub.s32 %s17, %s36
    %s94 = ssub.s32 %s18, %s32
    %s95 = sor.u32 %s93, %s94
    %p96 = scmp.eq.s32.totalorder %s95, 0
    %s98 = sadd.s32 %s97, 1
    %s99 = scalar_select %p96, %s97, %s98
    %p102 = pneg %p96
    %p103 = scmp.eq.s32.totalorder %s10, 1
    %p104 = por %p102, %p103
    %p105 = scmp.ne.s32.totalorder %s97, %s100
    %p106 = scmp.eq.s32.totalorder %s10, 0
    %p107 = por %p105, %p106
    %p108 = scmp.ne.s32.totalorder %s97, %s100
    %p109 = scmp.eq.s32.totalorder %s15, 1
    %p110 = por %p108, %p109
    %p111 = scmp.ne.s32.totalorder %s100, %s101
    %p112 = scmp.eq.s32.totalorder %s15, 0
    %p113 = por %p111, %p112
    %p114 = scmp.ne.s32.totalorder %s100, %s101
    %p115 = scmp.eq.s32.totalorder %s16, 1
    %p116 = por %p114, %p115
    %p118 = scmp.ne.s32.totalorder %s101, %s117
    %p119 = scmp.eq.s32.totalorder %s16, 0
    %p120 = por %p118, %p119
    %s121 = ssub.s32 %s17, %s36
    %s122 = ssub.s32 %s18, %s32
    %s123 = sor.u32 %s121, %s122
    %p124 = scmp.eq.s32.totalorder %s123, 0
    %s126 = sadd.s32 %s125, 1
    %s127 = scalar_select %p124, %s125, %s126
    %p130 = pneg %p124
    %p131 = scmp.eq.s32.totalorder %s10, 1
    %p132 = por %p130, %p131
    %p133 = scmp.ne.s32.totalorder %s125, %s128
    %p134 = scmp.eq.s32.totalorder %s10, 0
    %p135 = por %p133, %p134
    %p136 = scmp.ne.s32.totalorder %s125, %s128
    %p137 = scmp.eq.s32.totalorder %s15, 1
    %p138 = por %p136, %p137
    %p139 = scmp.ne.s32.totalorder %s128, %s129
    %p140 = scmp.eq.s32.totalorder %s15, 0
    %p141 = por %p139, %p140
    %p142 = scmp.ne.s32.totalorder %s128, %s129
    %p143 = scmp.eq.s32.totalorder %s16, 1
    %p144 = por %p142, %p143
    %p146 = scmp.ne.s32.totalorder %s129, %s145
    %p147 = scmp.eq.s32.totalorder %s16, 0
    %p148 = por %p146, %p147
    %p149 = scmp.le.s32.totalorder 1, %s10
    %p150 = scmp.lt.s32.totalorder %s10, 3
    %p151 = pnand %p149, %p150
    %p152 = pneg %p151
    // Predicated region
    $region9: #{_lambda_.9} parent=5 // pred_check
      _
    $region10: #{_lambda_.9} parent=5 // pred_check_branch
      %154 = sbr.rel (%p151) target = $region12
    $region11: #{_lambda_.9} parent=5 // pred_region
      %s155 = ssub.s32 %s10, 1
      // Predicated region
      $region13: #{_lambda_.9} parent=11 // pred_check
        %p156 = pneg %p85
      $region14: #{_lambda_.9} parent=11 // pred_check_branch
        %158 = sbr.rel (%p156) target = $region16
      $region15: #{_lambda_.9} parent=11 // pred_region
        %s159 = smul.u32 16, %s22
        %p160 = scmp.lt.s32.totalorder %s159, 15
        %s161 = scalar_select %p160, %s159, 15
        %p162 = scmp.lt.s32.totalorder %s21, 0
        %s163 = scalar_select %p162, %s21, 0
        %s164 = sadd.s32 %s163, %s161
        %s165 = smul.addr %s164, 4
        %s166 = scalar_lea.vmem %s1, %s165
        %s167 = smul.u32 16, %s22
      $region16: #{_lambda_.9} parent=11 // pred_fallthru
        _
    $region12: #{_lambda_.9} parent=5 // pred_fallthru
      _
    %p168 = scmp.lt.s32.totalorder %s10, 2
    // Predicated region
    $region17: #{_lambda_.9} parent=5 // pred_check
      %p169 = pneg %p168
    $region18: #{_lambda_.9} parent=5 // pred_check_branch
      %171 = sbr.rel (%p169) target = $region20
    $region19: #{_lambda_.9} parent=5 // pred_region
      // Predicated region
      $region21: #{_lambda_.9} parent=19 // pred_check
        %p172 = pneg %p51
      $region22: #{_lambda_.9} parent=19 // pred_check_branch
        %174 = sbr.rel (%p172) target = $region24
      $region23: #{_lambda_.9} parent=19 // pred_region
        %s175 = smul.u32 4, %s17
        %p176 = scmp.lt.s32.totalorder %s175, 7
        %s177 = scalar_select %p176, %s175, 7
        %p178 = scmp.lt.s32.totalorder %s19, 0
        %s179 = scalar_select %p178, %s19, 0
        %s180 = smul.addr %s177, 18
        %s181 = sadd.s32 %s179, %s180
        %s182 = smul.addr %s181, 4
        %s183 = scalar_lea.vmem %s0, %s182
        %s184 = smul.u32 4, %s17
      $region24: #{_lambda_.9} parent=19 // pred_fallthru
        _
    $region20: #{_lambda_.9} parent=5 // pred_fallthru
      _
    %p185 = scmp.le.s32.totalorder 1, %s10
    %p186 = scmp.lt.s32.totalorder %s10, 3
    %p187 = pnand %p185, %p186
    %p188 = pneg %p187
    // Predicated region
    $region25: #{_lambda_.9} parent=5 // pred_check
      _
    $region26: #{_lambda_.9} parent=5 // pred_check_branch
      %190 = sbr.rel (%p187) target = $region28
    $region27: #{_lambda_.9} parent=5 // pred_region
      %s191 = ssub.s32 %s10, 1
      %s192 = smul.u32 4, %s20
      %p193 = scmp.lt.s32.totalorder %s192, 7
      %s194 = scalar_select %p193, %s192, 7
      %p195 = scmp.lt.s32.totalorder %s22, 0
      %s196 = scalar_select %p195, %s22, 0
      %s197 = smul.addr %s194, 18
      %s198 = sadd.s32 %s196, %s197
      %s199 = smul.addr %s198, 4
      %s200 = scalar_lea.vmem %s0, %s199
      %p201 = pneg %p57
      %p202 = pneg %p54
      %s203 = smul.u32 16, %s22
      %p204 = scmp.lt.s32.totalorder %s203, 15
      %s205 = scalar_select %p204, %s203, 15
      %p206 = scmp.lt.s32.totalorder %s21, 0
      %s207 = scalar_select %p206, %s21, 0
      %s208 = sadd.s32 %s207, %s205
      %s209 = smul.addr %s208, 4
      %s210 = scalar_lea.vmem %s1, %s209
      %p211 = pneg %p85
      %p212 = pneg %p82
      %p213 = pneg %p113
      %p214 = pneg %p110
      %p215 = scmp.lt.s32.totalorder %s20, 1
      %s216 = scalar_select %p215, %s20, 1
      %p217 = scmp.lt.s32.totalorder %s21, 0
      %s218 = scalar_select %p217, %s21, 0
      %s219 = smul.addr %s216, 8
      %s220 = sadd.s32 %s218, %s219
      %s221 = smul.addr %s220, 4
      %s222 = scalar_lea.vmem %s2, %s221
      %p223 = pneg %p141
      %p224 = pneg %p138
      %p225 = scmp.lt.s32.totalorder %s20, 1
      %s226 = scalar_select %p225, %s20, 1
      %p227 = scmp.lt.s32.totalorder %s21, 0
      %s228 = scalar_select %p227, %s21, 0
      %s229 = sadd.s32 %s228, %s226
      %s230 = smul.addr %s229, 2
      %s231 = scalar_lea.vmem %s3, %s230
      %s232 = smul.u32 4, %s20
      %p233 = scmp.lt.s32.totalorder %s232, 7
      %s234 = scalar_select %p233, %s232, 7
      %p235 = scmp.lt.s32.totalorder %s22, 0
      %s236 = scalar_select %p235, %s22, 0
      %s237 = smul.addr %s234, 18
      %s238 = sadd.s32 %s236, %s237
      %s239 = smul.addr %s238, 4
      %s240 = scalar_lea.vmem %s0, %s239
      %s241 = smul.u32 4, %s20
      %s242 = smul.u32 16, %s22
      %p243 = scmp.lt.s32.totalorder %s242, 15
      %s244 = scalar_select %p243, %s242, 15
      %p245 = scmp.lt.s32.totalorder %s21, 0
      %s246 = scalar_select %p245, %s21, 0
      %s247 = sadd.s32 %s246, %s244
      %s248 = smul.addr %s247, 4
      %s249 = scalar_lea.vmem %s1, %s248
      %s250 = smul.u32 16, %s22
      %p251 = scmp.lt.s32.totalorder %s20, 1
      %s252 = scalar_select %p251, %s20, 1
      %p253 = scmp.lt.s32.totalorder %s21, 0
      %s254 = scalar_select %p253, %s21, 0
      %s255 = smul.addr %s252, 8
      %s256 = sadd.s32 %s254, %s255
      %s257 = smul.addr %s256, 4
      %s258 = scalar_lea.vmem %s2, %s257
      %p259 = scmp.lt.s32.totalorder %s20, 1
      %s260 = scalar_select %p259, %s20, 1
      %p261 = scmp.lt.s32.totalorder %s21, 0
      %s262 = scalar_select %p261, %s21, 0
      %s263 = sadd.s32 %s262, %s260
      %s264 = smul.addr %s263, 2
      %s265 = scalar_lea.vmem %s3, %s264
      %p267 = scmp.eq.s32.totalorder %s22, 0
      // Predicated region
      $region29: #{_lambda_.9} parent=27 // pred_check
        %p268 = pneg %p267
      $region30: #{_lambda_.9} parent=27 // pred_check_branch
        %270 = sbr.rel (%p268) target = $region32
      $region31: #{_lambda_.9} parent=27 // pred_region
        %271 = vst [vmem:[#allocation2] sm:$0xff] 0.0
        %272 = vst [vmem:[#allocation2 + $0x8] sm:$0xff] 0.0
        %273 = vst [vmem:[#allocation2 + $0x10] sm:$0xff] 0.0
        %274 = vst [vmem:[#allocation2 + $0x18] sm:$0xff] 0.0
        %275 = vst [vmem:[#allocation2 + $0x20] sm:$0xff] 0.0
        %276 = vst [vmem:[#allocation2 + $0x28] sm:$0xff] 0.0
        %277 = vst [vmem:[#allocation2 + $0x30] sm:$0xff] 0.0
        %278 = vst [vmem:[#allocation2 + $0x38] sm:$0xff] 0.0
      $region32: #{_lambda_.9} parent=27 // pred_fallthru
        _
      %v279 = vld [vmem:[#allocation2] sm:$0xff]
      %v280 = vld [vmem:[#allocation2 + $0x8] sm:$0xff]
      %v281 = vld [vmem:[#allocation2 + $0x10] sm:$0xff]
      %v282 = vld [vmem:[#allocation2 + $0x18] sm:$0xff]
      %v283 = vld [vmem:[#allocation2 + $0x20] sm:$0xff]
      %v284 = vld [vmem:[#allocation2 + $0x28] sm:$0xff]
      %v285 = vld [vmem:[#allocation2 + $0x30] sm:$0xff]
      %v286 = vld [vmem:[#allocation2 + $0x38] sm:$0xff]
      %v287 = vld [vmem:[%s240] sm:$0xf]
      %v288 = vld [vmem:[%s240 + $0x8] sm:$0xf]
      %v289 = vld [vmem:[%s240 + $0x10] sm:$0xf]
      %v290 = vld [vmem:[%s240 + $0x18] sm:$0xf]
      %v291 = vld [vmem:[%s240 + $0x20] sm:$0xf]
      %v292 = vld [vmem:[%s240 + $0x28] sm:$0xf]
      %v293 = vld [vmem:[%s240 + $0x30] sm:$0xf]
      %v294 = vld [vmem:[%s240 + $0x38] sm:$0xf]
      %v295 = vld [vmem:[%s249] sm:$0xf]
      %v296 = vld [vmem:[%s249 + $0x4] sm:$0xf]
      %v297 = vld [vmem:[%s249 + $0x8] sm:$0xf]
      %v298 = vld [vmem:[%s249 + $0xc] sm:$0xf]
      %v299 = vld [vmem:[%s249 + $0x10] sm:$0xf]
      %v300 = vld [vmem:[%s249 + $0x14] sm:$0xf]
      %v301 = vld [vmem:[%s249 + $0x18] sm:$0xf]
      %v302 = vld [vmem:[%s249 + $0x1c] sm:$0xf]
      %v303 = vld [vmem:[%s249 + $0x20] sm:$0xf]
      %v304 = vld [vmem:[%s249 + $0x24] sm:$0xf]
      %v305 = vld [vmem:[%s249 + $0x28] sm:$0xf]
      %v306 = vld [vmem:[%s249 + $0x2c] sm:$0xf]
      %v307 = vld [vmem:[%s249 + $0x30] sm:$0xf]
      %v308 = vld [vmem:[%s249 + $0x34] sm:$0xf]
      %v309 = vld [vmem:[%s249 + $0x38] sm:$0xf]
      %v310 = vld [vmem:[%s249 + $0x3c] sm:$0xf]
      %v319 = vunpack.c.l.b16 %v287
      %v320 = vunpack.c.l.b16 %v288
      %v321 = vunpack.c.l.b16 %v289
      %v322 = vunpack.c.l.b16 %v290
      %v323 = vunpack.c.l.b16 %v291
      %v324 = vunpack.c.l.b16 %v292
      %v325 = vunpack.c.l.b16 %v293
      %v326 = vunpack.c.l.b16 %v294
      %v327 = vpack.c.b16 %v320, %v319
      %v328 = vpack.c.b16 %v322, %v321
      %v329 = vpack.c.b16 %v324, %v323
      %v330 = vpack.c.b16 %v326, %v325
      %v351 = vunpack.c.l.b16 %v295
      %v352 = vunpack.c.l.b16 %v296
      %v353 = vunpack.c.l.b16 %v297
      %v354 = vunpack.c.l.b16 %v298
      %v355 = vunpack.c.l.b16 %v299
      %v356 = vunpack.c.l.b16 %v300
      %v357 = vunpack.c.l.b16 %v301
      %v358 = vunpack.c.l.b16 %v302
      %v359 = vunpack.c.l.b16 %v303
      %v360 = vunpack.c.l.b16 %v304
      %v361 = vunpack.c.l.b16 %v305
      %v362 = vunpack.c.l.b16 %v306
      %v363 = vunpack.c.l.b16 %v307
      %v364 = vunpack.c.l.b16 %v308
      %v365 = vunpack.c.l.b16 %v309
      %v366 = vunpack.c.l.b16 %v310
      %v367 = vpack.c.b16 %v352, %v351
      %v368 = vpack.c.b16 %v354, %v353
      %v369 = vpack.c.b16 %v356, %v355
      %v370 = vpack.c.b16 %v358, %v357
      %v371 = vpack.c.b16 %v360, %v359
      %v372 = vpack.c.b16 %v362, %v361
      %v373 = vpack.c.b16 %v364, %v363
      %v374 = vpack.c.b16 %v366, %v365
      %383 = vmatprep.subr.bf16.mxu0 0
      %384 = vmatpush1.bf16.msra.mxu0 %v367
      %385 = vmatprep.subr.bf16.mxu0 0
      %386 = vmatpush1.bf16.msra.mxu0 %v368
      %387 = vmatprep.subr.bf16.mxu0 0
      %388 = vmatpush1.bf16.msra.mxu0 %v369
      %389 = vmatprep.subr.bf16.mxu0 0
      %390 = vmatpush1.bf16.msra.mxu0 %v370
      %391 = vmatprep.subr.bf16.mxu0 0
      %392 = vmatpush1.bf16.msra.mxu0 %v371
      %393 = vmatprep.subr.bf16.mxu0 0
      %394 = vmatpush1.bf16.msra.mxu0 %v372
      %395 = vmatprep.subr.bf16.mxu0 0
      %396 = vmatpush1.bf16.msra.mxu0 %v373
      %397 = vmatprep.subr.bf16.mxu0 0
      %398 = vmatpush1.bf16.msra.mxu0 %v374
      %399 = vmatprep.subr.bf16.mxu0 0
      %400 = vmatpush1.bf16.msra.mxu0 0
      %401 = vmatprep.subr.bf16.mxu0 0
      %402 = vmatpush1.bf16.msra.mxu0 0
      %403 = vmatprep.subr.bf16.mxu0 0
      %404 = vmatpush1.bf16.msra.mxu0 0
      %405 = vmatprep.subr.bf16.mxu0 0
      %406 = vmatpush1.bf16.msra.mxu0 0
      %407 = vmatprep.subr.bf16.mxu0 0
      %408 = vmatpush1.bf16.msra.mxu0 0
      %409 = vmatprep.subr.bf16.mxu0 0
      %410 = vmatpush1.bf16.msra.mxu0 0
      %411 = vmatprep.subr.bf16.mxu0 0
      %412 = vmatpush1.bf16.msra.mxu0 0
      %413 = vmatprep.subr.bf16.mxu0 0
      %414 = vmatpush1.bf16.msra.mxu0 0
      %415 = vmatprep.mubr.bf16.mxu0 0
      %416 = vmatmul.mubr.bf16.gmra.mrb[0].mxu0 %v327
      %v417 = vpop.f32.mrb[0].mxu0
      %v418 = vadd.f32 0.0, %v417
      %v419 = vpop.f32.mrb[0].mxu0
      %v420 = vpop.f32.mrb[0].mxu0
      %v421 = vadd.f32 0.0, %v420
      %v422 = vpop.f32.mrb[0].mxu0
      %423 = vmatprep.mubr.bf16.mxu0 0
      %424 = vmatmul.mubr.bf16.gmra.mrb[0].mxu0 %v328
      %v425 = vpop.f32.mrb[0].mxu0
      %v426 = vadd.f32 0.0, %v425
      %v427 = vpop.f32.mrb[0].mxu0
      %v428 = vpop.f32.mrb[0].mxu0
      %v429 = vadd.f32 0.0, %v428
      %v430 = vpop.f32.mrb[0].mxu0
      %431 = vmatprep.mubr.bf16.mxu0 0
      %432 = vmatmul.mubr.bf16.gmra.mrb[0].mxu0 %v329
      %v433 = vpop.f32.mrb[0].mxu0
      %v434 = vadd.f32 0.0, %v433
      %v435 = vpop.f32.mrb[0].mxu0
      %v436 = vpop.f32.mrb[0].mxu0
      %v437 = vadd.f32 0.0, %v436
      %v438 = vpop.f32.mrb[0].mxu0
      %439 = vmatprep.mubr.bf16.mxu0 0
      %440 = vmatmul.mubr.bf16.gmra.mrb[0].mxu0 %v330
      %v441 = vpop.f32.mrb[0].mxu0
      %v442 = vadd.f32 0.0, %v441
      %v443 = vpop.f32.mrb[0].mxu0
      %v444 = vpop.f32.mrb[0].mxu0
      %v445 = vadd.f32 0.0, %v444
      %v446 = vpop.f32.mrb[0].mxu0
      %447 = vdwg.mxu0
      %v448 = vadd.f32 %v279, %v418
      %v449 = vadd.f32 %v280, %v421
      %v450 = vadd.f32 %v281, %v426
      %v451 = vadd.f32 %v282, %v429
      %v452 = vadd.f32 %v283, %v434
      %v453 = vadd.f32 %v284, %v437
      %v454 = vadd.f32 %v285, %v442
      %v455 = vadd.f32 %v286, %v445
      %s456 = scalar_lea.vmem %s240, 72
      %v457 = vld [vmem:[%s456] sm:$0xf]
      %v458 = vld [vmem:[%s456 + $0x8] sm:$0xf]
      %v459 = vld [vmem:[%s456 + $0x10] sm:$0xf]
      %v460 = vld [vmem:[%s456 + $0x18] sm:$0xf]
      %v461 = vld [vmem:[%s456 + $0x20] sm:$0xf]
      %v462 = vld [vmem:[%s456 + $0x28] sm:$0xf]
      %v463 = vld [vmem:[%s456 + $0x30] sm:$0xf]
      %v464 = vld [vmem:[%s456 + $0x38] sm:$0xf]
      %s465 = scalar_lea.vmem %s249, 64
      %v466 = vld [vmem:[%s465] sm:$0xf]
      %v467 = vld [vmem:[%s465 + $0x4] sm:$0xf]
      %v468 = vld [vmem:[%s465 + $0x8] sm:$0xf]
      %v469 = vld [vmem:[%s465 + $0xc] sm:$0xf]
      %v470 = vld [vmem:[%s465 + $0x10] sm:$0xf]
      %v471 = vld [vmem:[%s465 + $0x14] sm:$0xf]
      %v472 = vld [vmem:[%s465 + $0x18] sm:$0xf]
      %v473 = vld [vmem:[%s465 + $0x1c] sm:$0xf]
      %v474 = vld [vmem:[%s465 + $0x20] sm:$0xf]
      %v475 = vld [vmem:[%s465 + $0x24] sm:$0xf]
      %v476 = vld [vmem:[%s465 + $0x28] sm:$0xf]
      %v477 = vld [vmem:[%s465 + $0x2c] sm:$0xf]
      %v478 = vld [vmem:[%s465 + $0x30] sm:$0xf]
      %v479 = vld [vmem:[%s465 + $0x34] sm:$0xf]
      %v480 = vld [vmem:[%s465 + $0x38] sm:$0xf]
      %v481 = vld [vmem:[%s465 + $0x3c] sm:$0xf]
      %v490 = vunpack.c.l.b16 %v457
      %v491 = vunpack.c.l.b16 %v458
      %v492 = vunpack.c.l.b16 %v459
      %v493 = vunpack.c.l.b16 %v460
      %v494 = vunpack.c.l.b16 %v461
      %v495 = vunpack.c.l.b16 %v462
      %v496 = vunpack.c.l.b16 %v463
      %v497 = vunpack.c.l.b16 %v464
      %v498 = vpack.c.b16 %v491, %v490
      %v499 = vpack.c.b16 %v493, %v492
      %v500 = vpack.c.b16 %v495, %v494
      %v501 = vpack.c.b16 %v497, %v496
      %v522 = vunpack.c.l.b16 %v466
      %v523 = vunpack.c.l.b16 %v467
      %v524 = vunpack.c.l.b16 %v468
      %v525 = vunpack.c.l.b16 %v469
      %v526 = vunpack.c.l.b16 %v470
      %v527 = vunpack.c.l.b16 %v471
      %v528 = vunpack.c.l.b16 %v472
      %v529 = vunpack.c.l.b16 %v473
      %v530 = vunpack.c.l.b16 %v474
      %v531 = vunpack.c.l.b16 %v475
      %v532 = vunpack.c.l.b16 %v476
      %v533 = vunpack.c.l.b16 %v477
      %v534 = vunpack.c.l.b16 %v478
      %v535 = vunpack.c.l.b16 %v479
      %v536 = vunpack.c.l.b16 %v480
      %v537 = vunpack.c.l.b16 %v481
      %v538 = vpack.c.b16 %v523, %v522
      %v539 = vpack.c.b16 %v525, %v524
      %v540 = vpack.c.b16 %v527, %v526
      %v541 = vpack.c.b16 %v529, %v528
      %v542 = vpack.c.b16 %v531, %v530
      %v543 = vpack.c.b16 %v533, %v532
      %v544 = vpack.c.b16 %v535, %v534
      %v545 = vpack.c.b16 %v537, %v536
      %554 = vmatprep.subr.bf16.mxu0 0
      %555 = vmatpush1.bf16.msra.mxu0 %v538
      %556 = vmatprep.subr.bf16.mxu0 0
      %557 = vmatpush1.bf16.msra.mxu0 %v539
      %558 = vmatprep.subr.bf16.mxu0 0
      %559 = vmatpush1.bf16.msra.mxu0 %v540
      %560 = vmatprep.subr.bf16.mxu0 0
      %561 = vmatpush1.bf16.msra.mxu0 %v541
      %562 = vmatprep.subr.bf16.mxu0 0
      %563 = vmatpush1.bf16.msra.mxu0 %v542
      %564 = vmatprep.subr.bf16.mxu0 0
      %565 = vmatpush1.bf16.msra.mxu0 %v543
      %566 = vmatprep.subr.bf16.mxu0 0
      %567 = vmatpush1.bf16.msra.mxu0 %v544
      %568 = vmatprep.subr.bf16.mxu0 0
      %569 = vmatpush1.bf16.msra.mxu0 %v545
      %570 = vmatprep.subr.bf16.mxu0 0
      %571 = vmatpush1.bf16.msra.mxu0 0
      %572 = vmatprep.subr.bf16.mxu0 0
      %573 = vmatpush1.bf16.msra.mxu0 0
      %574 = vmatprep.subr.bf16.mxu0 0
      %575 = vmatpush1.bf16.msra.mxu0 0
      %576 = vmatprep.subr.bf16.mxu0 0
      %577 = vmatpush1.bf16.msra.mxu0 0
      %578 = vmatprep.subr.bf16.mxu0 0
      %579 = vmatpush1.bf16.msra.mxu0 0
      %580 = vmatprep.subr.bf16.mxu0 0
      %581 = vmatpush1.bf16.msra.mxu0 0
      %582 = vmatprep.subr.bf16.mxu0 0
      %583 = vmatpush1.bf16.msra.mxu0 0
      %584 = vmatprep.subr.bf16.mxu0 0
      %585 = vmatpush1.bf16.msra.mxu0 0
      %586 = vmatprep.mubr.bf16.mxu0 0
      %587 = vmatmul.mubr.bf16.gmra.mrb[0].mxu0 %v498
      %v588 = vpop.f32.mrb[0].mxu0
      %v589 = vadd.f32 0.0, %v588
      %v590 = vpop.f32.mrb[0].mxu0
      %v591 = vpop.f32.mrb[0].mxu0
      %v592 = vadd.f32 0.0, %v591
      %v593 = vpop.f32.mrb[0].mxu0
      %594 = vmatprep.mubr.bf16.mxu0 0
      %595 = vmatmul.mubr.bf16.gmra.mrb[0].mxu0 %v499
      %v596 = vpop.f32.mrb[0].mxu0
      %v597 = vadd.f32 0.0, %v596
      %v598 = vpop.f32.mrb[0].mxu0
      %v599 = vpop.f32.mrb[0].mxu0
      %v600 = vadd.f32 0.0, %v599
      %v601 = vpop.f32.mrb[0].mxu0
      %602 = vmatprep.mubr.bf16.mxu0 0
      %603 = vmatmul.mubr.bf16.gmra.mrb[0].mxu0 %v500
      %v604 = vpop.f32.mrb[0].mxu0
      %v605 = vadd.f32 0.0, %v604
      %v606 = vpop.f32.mrb[0].mxu0
      %v607 = vpop.f32.mrb[0].mxu0
      %v608 = vadd.f32 0.0, %v607
      %v609 = vpop.f32.mrb[0].mxu0
      %610 = vmatprep.mubr.bf16.mxu0 0
      %611 = vmatmul.mubr.bf16.gmra.mrb[0].mxu0 %v501
      %v612 = vpop.f32.mrb[0].mxu0
      %v613 = vadd.f32 0.0, %v612
      %v614 = vpop.f32.mrb[0].mxu0
      %v615 = vpop.f32.mrb[0].mxu0
      %v616 = vadd.f32 0.0, %v615
      %v617 = vpop.f32.mrb[0].mxu0
      %618 = vdwg.mxu0
      %v619 = vadd.f32 %v448, %v589
      %v620 = vadd.f32 %v449, %v592
      %v621 = vadd.f32 %v450, %v597
      %v622 = vadd.f32 %v451, %v600
      %v623 = vadd.f32 %v452, %v605
      %v624 = vadd.f32 %v453, %v608
      %v625 = vadd.f32 %v454, %v613
      %v626 = vadd.f32 %v455, %v616
      %v627 = vld [vmem:[%s240] sm:$0xf]
      %v628 = vld [vmem:[%s240 + $0x4] sm:$0x1]
      %v629 = vld [vmem:[%s240 + $0x8] sm:$0xf]
      %v630 = vld [vmem:[%s240 + $0xc] sm:$0x1]
      %v631 = vld [vmem:[%s240 + $0x10] sm:$0xf]
      %v632 = vld [vmem:[%s240 + $0x14] sm:$0x1]
      %v633 = vld [vmem:[%s240 + $0x18] sm:$0xf]
      %v634 = vld [vmem:[%s240 + $0x1c] sm:$0x1]
      %v635 = vld [vmem:[%s240 + $0x20] sm:$0xf]
      %v636 = vld [vmem:[%s240 + $0x24] sm:$0x1]
      %v637 = vld [vmem:[%s240 + $0x28] sm:$0xf]
      %v638 = vld [vmem:[%s240 + $0x2c] sm:$0x1]
      %v639 = vld [vmem:[%s240 + $0x30] sm:$0xf]
      %v640 = vld [vmem:[%s240 + $0x34] sm:$0x1]
      %v641 = vld [vmem:[%s240 + $0x38] sm:$0xf]
      %v642 = vld [vmem:[%s240 + $0x3c] sm:$0x1]
      %vm643 = vsmask.f32 3328
      %vm644 = vsmask.f32 7440
      %vm645 = vmor %vm643, %vm644
      %v647 = vshrl.u32 %v627, 16
      %v649 = vrot.slane %v647, 4
      %v650 = vshll.u32 %v627, 16
      %v652 = vrot.slane %v650, 5
      %v653 = vor.u32 %v649, %v652
      %v654 = vrot.slane %v653, 4
      %v656 = vshll.u32 %v628, 16
      %v658 = vrot.slane %v656, 5
      %v659 = vsel %vm645, %v654, %v658
      %v661 = vshrl.u32 %v629, 16
      %v663 = vrot.slane %v661, 4
      %v664 = vshll.u32 %v629, 16
      %v666 = vrot.slane %v664, 5
      %v667 = vor.u32 %v663, %v666
      %v668 = vrot.slane %v667, 4
      %v670 = vshll.u32 %v630, 16
      %v672 = vrot.slane %v670, 5
      %v673 = vsel %vm645, %v668, %v672
      %v675 = vshrl.u32 %v631, 16
      %v677 = vrot.slane %v675, 4
      %v678 = vshll.u32 %v631, 16
      %v680 = vrot.slane %v678, 5
      %v681 = vor.u32 %v677, %v680
      %v682 = vrot.slane %v681, 4
      %v684 = vshll.u32 %v632, 16
      %v686 = vrot.slane %v684, 5
      %v687 = vsel %vm645, %v682, %v686
      %v689 = vshrl.u32 %v633, 16
      %v691 = vrot.slane %v689, 4
      %v692 = vshll.u32 %v633, 16
      %v694 = vrot.slane %v692, 5
      %v695 = vor.u32 %v691, %v694
      %v696 = vrot.slane %v695, 4
      %v698 = vshll.u32 %v634, 16
      %v700 = vrot.slane %v698, 5
      %v701 = vsel %vm645, %v696, %v700
      %v703 = vshrl.u32 %v635, 16
      %v705 = vrot.slane %v703, 4
      %v706 = vshll.u32 %v635, 16
      %v708 = vrot.slane %v706, 5
      %v709 = vor.u32 %v705, %v708
      %v710 = vrot.slane %v709, 4
      %v712 = vshll.u32 %v636, 16
      %v714 = vrot.slane %v712, 5
      %v715 = vsel %vm645, %v710, %v714
      %v717 = vshrl.u32 %v637, 16
      %v719 = vrot.slane %v717, 4
      %v720 = vshll.u32 %v637, 16
      %v722 = vrot.slane %v720, 5
      %v723 = vor.u32 %v719, %v722
      %v724 = vrot.slane %v723, 4
      %v726 = vshll.u32 %v638, 16
      %v728 = vrot.slane %v726, 5
      %v729 = vsel %vm645, %v724, %v728
      %v731 = vshrl.u32 %v639, 16
      %v733 = vrot.slane %v731, 4
      %v734 = vshll.u32 %v639, 16
      %v736 = vrot.slane %v734, 5
      %v737 = vor.u32 %v733, %v736
      %v738 = vrot.slane %v737, 4
      %v740 = vshll.u32 %v640, 16
      %v742 = vrot.slane %v740, 5
      %v743 = vsel %vm645, %v738, %v742
      %v745 = vshrl.u32 %v641, 16
      %v747 = vrot.slane %v745, 4
      %v748 = vshll.u32 %v641, 16
      %v750 = vrot.slane %v748, 5
      %v751 = vor.u32 %v747, %v750
      %v752 = vrot.slane %v751, 4
      %v754 = vshll.u32 %v642, 16
      %v756 = vrot.slane %v754, 5
      %v757 = vsel %vm645, %v752, %v756
      %s758 = scalar_lea.vmem %s249, 128
      %v759 = vld [vmem:[%s758] sm:$0xf]
      %v760 = vld [vmem:[%s758 + $0x4] sm:$0xf]
      %v761 = vld [vmem:[%s758 + $0x8] sm:$0xf]
      %v762 = vld [vmem:[%s758 + $0xc] sm:$0xf]
      %v763 = vld [vmem:[%s758 + $0x10] sm:$0xf]
      %v764 = vld [vmem:[%s758 + $0x14] sm:$0xf]
      %v765 = vld [vmem:[%s758 + $0x18] sm:$0xf]
      %v766 = vld [vmem:[%s758 + $0x1c] sm:$0xf]
      %v767 = vld [vmem:[%s758 + $0x20] sm:$0xf]
      %v768 = vld [vmem:[%s758 + $0x24] sm:$0xf]
      %v769 = vld [vmem:[%s758 + $0x28] sm:$0xf]
      %v770 = vld [vmem:[%s758 + $0x2c] sm:$0xf]
      %v771 = vld [vmem:[%s758 + $0x30] sm:$0xf]
      %v772 = vld [vmem:[%s758 + $0x34] sm:$0xf]
      %v773 = vld [vmem:[%s758 + $0x38] sm:$0xf]
      %v774 = vld [vmem:[%s758 + $0x3c] sm:$0xf]
      %v775 = vunpack.c.l.b16 %v659
      %v776 = vunpack.c.l.b16 %v673
      %v777 = vunpack.c.l.b16 %v687
      %v778 = vunpack.c.l.b16 %v701
      %v779 = vunpack.c.l.b16 %v715
      %v780 = vunpack.c.l.b16 %v729
      %v781 = vunpack.c.l.b16 %v743
      %v782 = vunpack.c.l.b16 %v757
      %v783 = vpack.c.b16 %v776, %v775
      %v784 = vpack.c.b16 %v778, %v777
      %v785 = vpack.c.b16 %v780, %v779
      %v786 = vpack.c.b16 %v782, %v781
      %v807 = vunpack.c.l.b16 %v759
      %v808 = vunpack.c.l.b16 %v760
      %v809 = vunpack.c.l.b16 %v761
      %v810 = vunpack.c.l.b16 %v762
      %v811 = vunpack.c.l.b16 %v763
      %v812 = vunpack.c.l.b16 %v764
      %v813 = vunpack.c.l.b16 %v765
      %v814 = vunpack.c.l.b16 %v766
      %v815 = vunpack.c.l.b16 %v767
      %v816 = vunpack.c.l.b16 %v768
      %v817 = vunpack.c.l.b16 %v769
      %v818 = vunpack.c.l.b16 %v770
      %v819 = vunpack.c.l.b16 %v771
      %v820 = vunpack.c.l.b16 %v772
      %v821 = vunpack.c.l.b16 %v773
      %v822 = vunpack.c.l.b16 %v774
      %v823 = vpack.c.b16 %v808, %v807
      %v824 = vpack.c.b16 %v810, %v809
      %v825 = vpack.c.b16 %v812, %v811
      %v826 = vpack.c.b16 %v814, %v813
      %v827 = vpack.c.b16 %v816, %v815
      %v828 = vpack.c.b16 %v818, %v817
      %v829 = vpack.c.b16 %v820, %v819
      %v830 = vpack.c.b16 %v822, %v821
      %839 = vmatprep.subr.bf16.mxu0 0
      %840 = vmatpush1.bf16.msra.mxu0 %v823
      %841 = vmatprep.subr.bf16.mxu0 0
      %842 = vmatpush1.bf16.msra.mxu0 %v824
      %843 = vmatprep.subr.bf16.mxu0 0
      %844 = vmatpush1.bf16.msra.mxu0 %v825
      %845 = vmatprep.subr.bf16.mxu0 0
      %846 = vmatpush1.bf16.msra.mxu0 %v826
      %847 = vmatprep.subr.bf16.mxu0 0
      %848 = vmatpush1.bf16.msra.mxu0 %v827
      %849 = vmatprep.subr.bf16.mxu0 0
      %850 = vmatpush1.bf16.msra.mxu0 %v828
      %851 = vmatprep.subr.bf16.mxu0 0
      %852 = vmatpush1.bf16.msra.mxu0 %v829
      %853 = vmatprep.subr.bf16.mxu0 0
      %854 = vmatpush1.bf16.msra.mxu0 %v830
      %855 = vmatprep.subr.bf16.mxu0 0
      %856 = vmatpush1.bf16.msra.mxu0 0
      %857 = vmatprep.subr.bf16.mxu0 0
      %858 = vmatpush1.bf16.msra.mxu0 0
      %859 = vmatprep.subr.bf16.mxu0 0
      %860 = vmatpush1.bf16.msra.mxu0 0
      %861 = vmatprep.subr.bf16.mxu0 0
      %862 = vmatpush1.bf16.msra.mxu0 0
      %863 = vmatprep.subr.bf16.mxu0 0
      %864 = vmatpush1.bf16.msra.mxu0 0
      %865 = vmatprep.subr.bf16.mxu0 0
      %866 = vmatpush1.bf16.msra.mxu0 0
      %867 = vmatprep.subr.bf16.mxu0 0
      %868 = vmatpush1.bf16.msra.mxu0 0
      %869 = vmatprep.subr.bf16.mxu0 0
      %870 = vmatpush1.bf16.msra.mxu0 0
      %871 = vmatprep.mubr.bf16.mxu0 0
      %872 = vmatmul.mubr.bf16.gmra.mrb[0].mxu0 %v783
      %v873 = vpop.f32.mrb[0].mxu0
      %v874 = vadd.f32 0.0, %v873
      %v875 = vpop.f32.mrb[0].mxu0
      %v876 = vpop.f32.mrb[0].mxu0
      %v877 = vadd.f32 0.0, %v876
      %v878 = vpop.f32.mrb[0].mxu0
      %879 = vmatprep.mubr.bf16.mxu0 0
      %880 = vmatmul.mubr.bf16.gmra.mrb[0].mxu0 %v784
      %v881 = vpop.f32.mrb[0].mxu0
      %v882 = vadd.f32 0.0, %v881
      %v883 = vpop.f32.mrb[0].mxu0
      %v884 = vpop.f32.mrb[0].mxu0
      %v885 = vadd.f32 0.0, %v884
      %v886 = vpop.f32.mrb[0].mxu0
      %887 = vmatprep.mubr.bf16.mxu0 0
      %888 = vmatmul.mubr.bf16.gmra.mrb[0].mxu0 %v785
      %v889 = vpop.f32.mrb[0].mxu0
      %v890 = vadd.f32 0.0, %v889
      %v891 = vpop.f32.mrb[0].mxu0
      %v892 = vpop.f32.mrb[0].mxu0
      %v893 = vadd.f32 0.0, %v892
      %v894 = vpop.f32.mrb[0].mxu0
      %895 = vmatprep.mubr.bf16.mxu0 0
      %896 = vmatmul.mubr.bf16.gmra.mrb[0].mxu0 %v786
      %v897 = vpop.f32.mrb[0].mxu0
      %v898 = vadd.f32 0.0, %v897
      %v899 = vpop.f32.mrb[0].mxu0
      %v900 = vpop.f32.mrb[0].mxu0
      %v901 = vadd.f32 0.0, %v900
      %v902 = vpop.f32.mrb[0].mxu0
      %903 = vdwg.mxu0
      %v904 = vadd.f32 %v619, %v874
      %v905 = vadd.f32 %v620, %v877
      %v906 = vadd.f32 %v621, %v882
      %v907 = vadd.f32 %v622, %v885
      %v908 = vadd.f32 %v623, %v890
      %v909 = vadd.f32 %v624, %v893
      %v910 = vadd.f32 %v625, %v898
      %v911 = vadd.f32 %v626, %v901
      %s912 = scalar_lea.vmem %s240, 144
      %v913 = vld [vmem:[%s912] sm:$0xf]
      %v914 = vld [vmem:[%s912 + $0x8] sm:$0xf]
      %v915 = vld [vmem:[%s912 + $0x10] sm:$0xf]
      %v916 = vld [vmem:[%s912 + $0x18] sm:$0xf]
      %v917 = vld [vmem:[%s912 + $0x20] sm:$0xf]
      %v918 = vld [vmem:[%s912 + $0x28] sm:$0xf]
      %v919 = vld [vmem:[%s912 + $0x30] sm:$0xf]
      %v920 = vld [vmem:[%s912 + $0x38] sm:$0xf]
      %s921 = scalar_lea.vmem %s249, 192
      %v922 = vld [vmem:[%s921] sm:$0xf]
      %v923 = vld [vmem:[%s921 + $0x4] sm:$0xf]
      %v924 = vld [vmem:[%s921 + $0x8] sm:$0xf]
      %v925 = vld [vmem:[%s921 + $0xc] sm:$0xf]
      %v926 = vld [vmem:[%s921 + $0x10] sm:$0xf]
      %v927 = vld [vmem:[%s921 + $0x14] sm:$0xf]
      %v928 = vld [vmem:[%s921 + $0x18] sm:$0xf]
      %v929 = vld [vmem:[%s921 + $0x1c] sm:$0xf]
      %v930 = vld [vmem:[%s921 + $0x20] sm:$0xf]
      %v931 = vld [vmem:[%s921 + $0x24] sm:$0xf]
      %v932 = vld [vmem:[%s921 + $0x28] sm:$0xf]
      %v933 = vld [vmem:[%s921 + $0x2c] sm:$0xf]
      %v934 = vld [vmem:[%s921 + $0x30] sm:$0xf]
      %v935 = vld [vmem:[%s921 + $0x34] sm:$0xf]
      %v936 = vld [vmem:[%s921 + $0x38] sm:$0xf]
      %v937 = vld [vmem:[%s921 + $0x3c] sm:$0xf]
      %v946 = vunpack.c.l.b16 %v913
      %v947 = vunpack.c.l.b16 %v914
      %v948 = vunpack.c.l.b16 %v915
      %v949 = vunpack.c.l.b16 %v916
      %v950 = vunpack.c.l.b16 %v917
      %v951 = vunpack.c.l.b16 %v918
      %v952 = vunpack.c.l.b16 %v919
      %v953 = vunpack.c.l.b16 %v920
      %v954 = vpack.c.b16 %v947, %v946
      %v955 = vpack.c.b16 %v949, %v948
      %v956 = vpack.c.b16 %v951, %v950
      %v957 = vpack.c.b16 %v953, %v952
      %v978 = vunpack.c.l.b16 %v922
      %v979 = vunpack.c.l.b16 %v923
      %v980 = vunpack.c.l.b16 %v924
      %v981 = vunpack.c.l.b16 %v925
      %v982 = vunpack.c.l.b16 %v926
      %v983 = vunpack.c.l.b16 %v927
      %v984 = vunpack.c.l.b16 %v928
      %v985 = vunpack.c.l.b16 %v929
      %v986 = vunpack.c.l.b16 %v930
      %v987 = vunpack.c.l.b16 %v931
      %v988 = vunpack.c.l.b16 %v932
      %v989 = vunpack.c.l.b16 %v933
      %v990 = vunpack.c.l.b16 %v934
      %v991 = vunpack.c.l.b16 %v935
      %v992 = vunpack.c.l.b16 %v936
      %v993 = vunpack.c.l.b16 %v937
      %v994 = vpack.c.b16 %v979, %v978
      %v995 = vpack.c.b16 %v981, %v980
      %v996 = vpack.c.b16 %v983, %v982
      %v997 = vpack.c.b16 %v985, %v984
      %v998 = vpack.c.b16 %v987, %v986
      %v999 = vpack.c.b16 %v989, %v988
      %v1000 = vpack.c.b16 %v991, %v990
      %v1001 = vpack.c.b16 %v993, %v992
      %1010 = vmatprep.subr.bf16.mxu0 0
      %1011 = vmatpush1.bf16.msra.mxu0 %v994
      %1012 = vmatprep.subr.bf16.mxu0 0
      %1013 = vmatpush1.bf16.msra.mxu0 %v995
      %1014 = vmatprep.subr.bf16.mxu0 0
      %1015 = vmatpush1.bf16.msra.mxu0 %v996
      %1016 = vmatprep.subr.bf16.mxu0 0
      %1017 = vmatpush1.bf16.msra.mxu0 %v997
      %1018 = vmatprep.subr.bf16.mxu0 0
      %1019 = vmatpush1.bf16.msra.mxu0 %v998
      %1020 = vmatprep.subr.bf16.mxu0 0
      %1021 = vmatpush1.bf16.msra.mxu0 %v999
      %1022 = vmatprep.subr.bf16.mxu0 0
      %1023 = vmatpush1.bf16.msra.mxu0 %v1000
      %1024 = vmatprep.subr.bf16.mxu0 0
      %1025 = vmatpush1.bf16.msra.mxu0 %v1001
      %1026 = vmatprep.subr.bf16.mxu0 0
      %1027 = vmatpush1.bf16.msra.mxu0 0
      %1028 = vmatprep.subr.bf16.mxu0 0
      %1029 = vmatpush1.bf16.msra.mxu0 0
      %1030 = vmatprep.subr.bf16.mxu0 0
      %1031 = vmatpush1.bf16.msra.mxu0 0
      %1032 = vmatprep.subr.bf16.mxu0 0
      %1033 = vmatpush1.bf16.msra.mxu0 0
      %1034 = vmatprep.subr.bf16.mxu0 0
      %1035 = vmatpush1.bf16.msra.mxu0 0
      %1036 = vmatprep.subr.bf16.mxu0 0
      %1037 = vmatpush1.bf16.msra.mxu0 0
      %1038 = vmatprep.subr.bf16.mxu0 0
      %1039 = vmatpush1.bf16.msra.mxu0 0
      %1040 = vmatprep.subr.bf16.mxu0 0
      %1041 = vmatpush1.bf16.msra.mxu0 0
      %1042 = vmatprep.mubr.bf16.mxu0 0
      %1043 = vmatmul.mubr.bf16.gmra.mrb[0].mxu0 %v954
      %v1044 = vpop.f32.mrb[0].mxu0
      %v1045 = vadd.f32 0.0, %v1044
      %v1046 = vpop.f32.mrb[0].mxu0
      %v1047 = vpop.f32.mrb[0].mxu0
      %v1048 = vadd.f32 0.0, %v1047
      %v1049 = vpop.f32.mrb[0].mxu0
      %1050 = vmatprep.mubr.bf16.mxu0 0
      %1051 = vmatmul.mubr.bf16.gmra.mrb[0].mxu0 %v955
      %v1052 = vpop.f32.mrb[0].mxu0
      %v1053 = vadd.f32 0.0, %v1052
      %v1054 = vpop.f32.mrb[0].mxu0
      %v1055 = vpop.f32.mrb[0].mxu0
      %v1056 = vadd.f32 0.0, %v1055
      %v1057 = vpop.f32.mrb[0].mxu0
      %1058 = vmatprep.mubr.bf16.mxu0 0
      %1059 = vmatmul.mubr.bf16.gmra.mrb[0].mxu0 %v956
      %v1060 = vpop.f32.mrb[0].mxu0
      %v1061 = vadd.f32 0.0, %v1060
      %v1062 = vpop.f32.mrb[0].mxu0
      %v1063 = vpop.f32.mrb[0].mxu0
      %v1064 = vadd.f32 0.0, %v1063
      %v1065 = vpop.f32.mrb[0].mxu0
      %1066 = vmatprep.mubr.bf16.mxu0 0
      %1067 = vmatmul.mubr.bf16.gmra.mrb[0].mxu0 %v957
      %v1068 = vpop.f32.mrb[0].mxu0
      %v1069 = vadd.f32 0.0, %v1068
      %v1070 = vpop.f32.mrb[0].mxu0
      %v1071 = vpop.f32.mrb[0].mxu0
      %v1072 = vadd.f32 0.0, %v1071
      %v1073 = vpop.f32.mrb[0].mxu0
      %1074 = vdwg.mxu0
      %v1075 = vadd.f32 %v904, %v1045
      %v1076 = vadd.f32 %v905, %v1048
      %v1077 = vadd.f32 %v906, %v1053
      %v1078 = vadd.f32 %v907, %v1056
      %v1079 = vadd.f32 %v908, %v1061
      %v1080 = vadd.f32 %v909, %v1064
      %v1081 = vadd.f32 %v910, %v1069
      %v1082 = vadd.f32 %v911, %v1072
      %s1083 = scalar_lea.vmem %s240, 216
      %v1084 = vld [vmem:[%s1083] sm:$0xf]
      %v1085 = vld [vmem:[%s1083 + $0x8] sm:$0xf]
      %v1086 = vld [vmem:[%s1083 + $0x10] sm:$0xf]
      %v1087 = vld [vmem:[%s1083 + $0x18] sm:$0xf]
      %v1088 = vld [vmem:[%s1083 + $0x20] sm:$0xf]
      %v1089 = vld [vmem:[%s1083 + $0x28] sm:$0xf]
      %v1090 = vld [vmem:[%s1083 + $0x30] sm:$0xf]
      %v1091 = vld [vmem:[%s1083 + $0x38] sm:$0xf]
      %s1092 = scalar_lea.vmem %s249, 256
      %v1093 = vld [vmem:[%s1092] sm:$0xf]
      %v1094 = vld [vmem:[%s1092 + $0x4] sm:$0xf]
      %v1095 = vld [vmem:[%s1092 + $0x8] sm:$0xf]
      %v1096 = vld [vmem:[%s1092 + $0xc] sm:$0xf]
      %v1097 = vld [vmem:[%s1092 + $0x10] sm:$0xf]
      %v1098 = vld [vmem:[%s1092 + $0x14] sm:$0xf]
      %v1099 = vld [vmem:[%s1092 + $0x18] sm:$0xf]
      %v1100 = vld [vmem:[%s1092 + $0x1c] sm:$0xf]
      %v1101 = vld [vmem:[%s1092 + $0x20] sm:$0xf]
      %v1102 = vld [vmem:[%s1092 + $0x24] sm:$0xf]
      %v1103 = vld [vmem:[%s1092 + $0x28] sm:$0xf]
      %v1104 = vld [vmem:[%s1092 + $0x2c] sm:$0xf]
      %v1105 = vld [vmem:[%s1092 + $0x30] sm:$0xf]
      %v1106 = vld [vmem:[%s1092 + $0x34] sm:$0xf]
      %v1107 = vld [vmem:[%s1092 + $0x38] sm:$0xf]
      %v1108 = vld [vmem:[%s1092 + $0x3c] sm:$0xf]
      %v1117 = vunpack.c.l.b16 %v1084
      %v1118 = vunpack.c.l.b16 %v1085
      %v1119 = vunpack.c.l.b16 %v1086
      %v1120 = vunpack.c.l.b16 %v1087
      %v1121 = vunpack.c.l.b16 %v1088
      %v1122 = vunpack.c.l.b16 %v1089
      %v1123 = vunpack.c.l.b16 %v1090
      %v1124 = vunpack.c.l.b16 %v1091
      %v1125 = vpack.c.b16 %v1118, %v1117
      %v1126 = vpack.c.b16 %v1120, %v1119
      %v1127 = vpack.c.b16 %v1122, %v1121
      %v1128 = vpack.c.b16 %v1124, %v1123
      %v1149 = vunpack.c.l.b16 %v1093
      %v1150 = vunpack.c.l.b16 %v1094
      %v1151 = vunpack.c.l.b16 %v1095
      %v1152 = vunpack.c.l.b16 %v1096
      %v1153 = vunpack.c.l.b16 %v1097
      %v1154 = vunpack.c.l.b16 %v1098
      %v1155 = vunpack.c.l.b16 %v1099
      %v1156 = vunpack.c.l.b16 %v1100
      %v1157 = vunpack.c.l.b16 %v1101
      %v1158 = vunpack.c.l.b16 %v1102
      %v1159 = vunpack.c.l.b16 %v1103
      %v1160 = vunpack.c.l.b16 %v1104
      %v1161 = vunpack.c.l.b16 %v1105
      %v1162 = vunpack.c.l.b16 %v1106
      %v1163 = vunpack.c.l.b16 %v1107
      %v1164 = vunpack.c.l.b16 %v1108
      %v1165 = vpack.c.b16 %v1150, %v1149
      %v1166 = vpack.c.b16 %v1152, %v1151
      %v1167 = vpack.c.b16 %v1154, %v1153
      %v1168 = vpack.c.b16 %v1156, %v1155
      %v1169 = vpack.c.b16 %v1158, %v1157
      %v1170 = vpack.c.b16 %v1160, %v1159
      %v1171 = vpack.c.b16 %v1162, %v1161
      %v1172 = vpack.c.b16 %v1164, %v1163
      %1181 = vmatprep.subr.bf16.mxu0 0
      %1182 = vmatpush1.bf16.msra.mxu0 %v1165
      %1183 = vmatprep.subr.bf16.mxu0 0
      %1184 = vmatpush1.bf16.msra.mxu0 %v1166
      %1185 = vmatprep.subr.bf16.mxu0 0
      %1186 = vmatpush1.bf16.msra.mxu0 %v1167
      %1187 = vmatprep.subr.bf16.mxu0 0
      %1188 = vmatpush1.bf16.msra.mxu0 %v1168
      %1189 = vmatprep.subr.bf16.mxu0 0
      %1190 = vmatpush1.bf16.msra.mxu0 %v1169
      %1191 = vmatprep.subr.bf16.mxu0 0
      %1192 = vmatpush1.bf16.msra.mxu0 %v1170
      %1193 = vmatprep.subr.bf16.mxu0 0
      %1194 = vmatpush1.bf16.msra.mxu0 %v1171
      %1195 = vmatprep.subr.bf16.mxu0 0
      %1196 = vmatpush1.bf16.msra.mxu0 %v1172
      %1197 = vmatprep.subr.bf16.mxu0 0
      %1198 = vmatpush1.bf16.msra.mxu0 0
      %1199 = vmatprep.subr.bf16.mxu0 0
      %1200 = vmatpush1.bf16.msra.mxu0 0
      %1201 = vmatprep.subr.bf16.mxu0 0
      %1202 = vmatpush1.bf16.msra.mxu0 0
      %1203 = vmatprep.subr.bf16.mxu0 0
      %1204 = vmatpush1.bf16.msra.mxu0 0
      %1205 = vmatprep.subr.bf16.mxu0 0
      %1206 = vmatpush1.bf16.msra.mxu0 0
      %1207 = vmatprep.subr.bf16.mxu0 0
      %1208 = vmatpush1.bf16.msra.mxu0 0
      %1209 = vmatprep.subr.bf16.mxu0 0
      %1210 = vmatpush1.bf16.msra.mxu0 0
      %1211 = vmatprep.subr.bf16.mxu0 0
      %1212 = vmatpush1.bf16.msra.mxu0 0
      %1213 = vmatprep.mubr.bf16.mxu0 0
      %1214 = vmatmul.mubr.bf16.gmra.mrb[0].mxu0 %v1125
      %v1215 = vpop.f32.mrb[0].mxu0
      %v1216 = vadd.f32 0.0, %v1215
      %v1217 = vpop.f32.mrb[0].mxu0
      %v1218 = vpop.f32.mrb[0].mxu0
      %v1219 = vadd.f32 0.0, %v1218
      %v1220 = vpop.f32.mrb[0].mxu0
      %1221 = vmatprep.mubr.bf16.mxu0 0
      %1222 = vmatmul.mubr.bf16.gmra.mrb[0].mxu0 %v1126
      %v1223 = vpop.f32.mrb[0].mxu0
      %v1224 = vadd.f32 0.0, %v1223
      %v1225 = vpop.f32.mrb[0].mxu0
      %v1226 = vpop.f32.mrb[0].mxu0
      %v1227 = vadd.f32 0.0, %v1226
      %v1228 = vpop.f32.mrb[0].mxu0
      %1229 = vmatprep.mubr.bf16.mxu0 0
      %1230 = vmatmul.mubr.bf16.gmra.mrb[0].mxu0 %v1127
      %v1231 = vpop.f32.mrb[0].mxu0
      %v1232 = vadd.f32 0.0, %v1231
      %v1233 = vpop.f32.mrb[0].mxu0
      %v1234 = vpop.f32.mrb[0].mxu0
      %v1235 = vadd.f32 0.0, %v1234
      %v1236 = vpop.f32.mrb[0].mxu0
      %1237 = vmatprep.mubr.bf16.mxu0 0
      %1238 = vmatmul.mubr.bf16.gmra.mrb[0].mxu0 %v1128
      %v1239 = vpop.f32.mrb[0].mxu0
      %v1240 = vadd.f32 0.0, %v1239
      %v1241 = vpop.f32.mrb[0].mxu0
      %v1242 = vpop.f32.mrb[0].mxu0
      %v1243 = vadd.f32 0.0, %v1242
      %v1244 = vpop.f32.mrb[0].mxu0
      %1245 = vdwg.mxu0
      %v1246 = vadd.f32 %v1075, %v1216
      %v1247 = vadd.f32 %v1076, %v1219
      %v1248 = vadd.f32 %v1077, %v1224
      %v1249 = vadd.f32 %v1078, %v1227
      %v1250 = vadd.f32 %v1079, %v1232
      %v1251 = vadd.f32 %v1080, %v1235
      %v1252 = vadd.f32 %v1081, %v1240
      %v1253 = vadd.f32 %v1082, %v1243
      %v1254 = vld [vmem:[%s912] sm:$0xf]
      %v1255 = vld [vmem:[%s912 + $0x4] sm:$0x1]
      %v1256 = vld [vmem:[%s912 + $0x8] sm:$0xf]
      %v1257 = vld [vmem:[%s912 + $0xc] sm:$0x1]
      %v1258 = vld [vmem:[%s912 + $0x10] sm:$0xf]
      %v1259 = vld [vmem:[%s912 + $0x14] sm:$0x1]
      %v1260 = vld [vmem:[%s912 + $0x18] sm:$0xf]
      %v1261 = vld [vmem:[%s912 + $0x1c] sm:$0x1]
      %v1262 = vld [vmem:[%s912 + $0x20] sm:$0xf]
      %v1263 = vld [vmem:[%s912 + $0x24] sm:$0x1]
      %v1264 = vld [vmem:[%s912 + $0x28] sm:$0xf]
      %v1265 = vld [vmem:[%s912 + $0x2c] sm:$0x1]
      %v1266 = vld [vmem:[%s912 + $0x30] sm:$0xf]
      %v1267 = vld [vmem:[%s912 + $0x34] sm:$0x1]
      %v1268 = vld [vmem:[%s912 + $0x38] sm:$0xf]
      %v1269 = vld [vmem:[%s912 + $0x3c] sm:$0x1]
      %v1271 = vshrl.u32 %v1254, 16
      %v1273 = vrot.slane %v1271, 4
      %v1274 = vshll.u32 %v1254, 16
      %v1276 = vrot.slane %v1274, 5
      %v1277 = vor.u32 %v1273, %v1276
      %v1278 = vrot.slane %v1277, 4
      %v1280 = vshll.u32 %v1255, 16
      %v1282 = vrot.slane %v1280, 5
      %v1283 = vsel %vm645, %v1278, %v1282
      %v1285 = vshrl.u32 %v1256, 16
      %v1287 = vrot.slane %v1285, 4
      %v1288 = vshll.u32 %v1256, 16
      %v1290 = vrot.slane %v1288, 5
      %v1291 = vor.u32 %v1287, %v1290
      %v1292 = vrot.slane %v1291, 4
      %v1294 = vshll.u32 %v1257, 16
      %v1296 = vrot.slane %v1294, 5
      %v1297 = vsel %vm645, %v1292, %v1296
      %v1299 = vshrl.u32 %v1258, 16
      %v1301 = vrot.slane %v1299, 4
      %v1302 = vshll.u32 %v1258, 16
      %v1304 = vrot.slane %v1302, 5
      %v1305 = vor.u32 %v1301, %v1304
      %v1306 = vrot.slane %v1305, 4
      %v1308 = vshll.u32 %v1259, 16
      %v1310 = vrot.slane %v1308, 5
      %v1311 = vsel %vm645, %v1306, %v1310
      %v1313 = vshrl.u32 %v1260, 16
      %v1315 = vrot.slane %v1313, 4
      %v1316 = vshll.u32 %v1260, 16
      %v1318 = vrot.slane %v1316, 5
      %v1319 = vor.u32 %v1315, %v1318
      %v1320 = vrot.slane %v1319, 4
      %v1322 = vshll.u32 %v1261, 16
      %v1324 = vrot.slane %v1322, 5
      %v1325 = vsel %vm645, %v1320, %v1324
      %v1327 = vshrl.u32 %v1262, 16
      %v1329 = vrot.slane %v1327, 4
      %v1330 = vshll.u32 %v1262, 16
      %v1332 = vrot.slane %v1330, 5
      %v1333 = vor.u32 %v1329, %v1332
      %v1334 = vrot.slane %v1333, 4
      %v1336 = vshll.u32 %v1263, 16
      %v1338 = vrot.slane %v1336, 5
      %v1339 = vsel %vm645, %v1334, %v1338
      %v1341 = vshrl.u32 %v1264, 16
      %v1343 = vrot.slane %v1341, 4
      %v1344 = vshll.u32 %v1264, 16
      %v1346 = vrot.slane %v1344, 5
      %v1347 = vor.u32 %v1343, %v1346
      %v1348 = vrot.slane %v1347, 4
      %v1350 = vshll.u32 %v1265, 16
      %v1352 = vrot.slane %v1350, 5
      %v1353 = vsel %vm645, %v1348, %v1352
      %v1355 = vshrl.u32 %v1266, 16
      %v1357 = vrot.slane %v1355, 4
      %v1358 = vshll.u32 %v1266, 16
      %v1360 = vrot.slane %v1358, 5
      %v1361 = vor.u32 %v1357, %v1360
      %v1362 = vrot.slane %v1361, 4
      %v1364 = vshll.u32 %v1267, 16
      %v1366 = vrot.slane %v1364, 5
      %v1367 = vsel %vm645, %v1362, %v1366
      %v1369 = vshrl.u32 %v1268, 16
      %v1371 = vrot.slane %v1369, 4
      %v1372 = vshll.u32 %v1268, 16
      %v1374 = vrot.slane %v1372, 5
      %v1375 = vor.u32 %v1371, %v1374
      %v1376 = vrot.slane %v1375, 4
      %v1378 = vshll.u32 %v1269, 16
      %v1380 = vrot.slane %v1378, 5
      %v1381 = vsel %vm645, %v1376, %v1380
      %s1382 = scalar_lea.vmem %s249, 320
      %v1383 = vld [vmem:[%s1382] sm:$0xf]
      %v1384 = vld [vmem:[%s1382 + $0x4] sm:$0xf]
      %v1385 = vld [vmem:[%s1382 + $0x8] sm:$0xf]
      %v1386 = vld [vmem:[%s1382 + $0xc] sm:$0xf]
      %v1387 = vld [vmem:[%s1382 + $0x10] sm:$0xf]
      %v1388 = vld [vmem:[%s1382 + $0x14] sm:$0xf]
      %v1389 = vld [vmem:[%s1382 + $0x18] sm:$0xf]
      %v1390 = vld [vmem:[%s1382 + $0x1c] sm:$0xf]
      %v1391 = vld [vmem:[%s1382 + $0x20] sm:$0xf]
      %v1392 = vld [vmem:[%s1382 + $0x24] sm:$0xf]
      %v1393 = vld [vmem:[%s1382 + $0x28] sm:$0xf]
      %v1394 = vld [vmem:[%s1382 + $0x2c] sm:$0xf]
      %v1395 = vld [vmem:[%s1382 + $0x30] sm:$0xf]
      %v1396 = vld [vmem:[%s1382 + $0x34] sm:$0xf]
      %v1397 = vld [vmem:[%s1382 + $0x38] sm:$0xf]
      %v1398 = vld [vmem:[%s1382 + $0x3c] sm:$0xf]
      %v1399 = vunpack.c.l.b16 %v1283
      %v1400 = vunpack.c.l.b16 %v1297
      %v1401 = vunpack.c.l.b16 %v1311
      %v1402 = vunpack.c.l.b16 %v1325
      %v1403 = vunpack.c.l.b16 %v1339
      %v1404 = vunpack.c.l.b16 %v1353
      %v1405 = vunpack.c.l.b16 %v1367
      %v1406 = vunpack.c.l.b16 %v1381
      %v1407 = vpack.c.b16 %v1400, %v1399
      %v1408 = vpack.c.b16 %v1402, %v1401
      %v1409 = vpack.c.b16 %v1404, %v1403
      %v1410 = vpack.c.b16 %v1406, %v1405
      %v1431 = vunpack.c.l.b16 %v1383
      %v1432 = vunpack.c.l.b16 %v1384
      %v1433 = vunpack.c.l.b16 %v1385
      %v1434 = vunpack.c.l.b16 %v1386
      %v1435 = vunpack.c.l.b16 %v1387
      %v1436 = vunpack.c.l.b16 %v1388
      %v1437 = vunpack.c.l.b16 %v1389
      %v1438 = vunpack.c.l.b16 %v1390
      %v1439 = vunpack.c.l.b16 %v1391
      %v1440 = vunpack.c.l.b16 %v1392
      %v1441 = vunpack.c.l.b16 %v1393
      %v1442 = vunpack.c.l.b16 %v1394
      %v1443 = vunpack.c.l.b16 %v1395
      %v1444 = vunpack.c.l.b16 %v1396
      %v1445 = vunpack.c.l.b16 %v1397
      %v1446 = vunpack.c.l.b16 %v1398
      %v1447 = vpack.c.b16 %v1432, %v1431
      %v1448 = vpack.c.b16 %v1434, %v1433
      %v1449 = vpack.c.b16 %v1436, %v1435
      %v1450 = vpack.c.b16 %v1438, %v1437
      %v1451 = vpack.c.b16 %v1440, %v1439
      %v1452 = vpack.c.b16 %v1442, %v1441
      %v1453 = vpack.c.b16 %v1444, %v1443
      %v1454 = vpack.c.b16 %v1446, %v1445
      %1463 = vmatprep.subr.bf16.mxu0 0
      %1464 = vmatpush1.bf16.msra.mxu0 %v1447
      %1465 = vmatprep.subr.bf16.mxu0 0
      %1466 = vmatpush1.bf16.msra.mxu0 %v1448
      %1467 = vmatprep.subr.bf16.mxu0 0
      %1468 = vmatpush1.bf16.msra.mxu0 %v1449
      %1469 = vmatprep.subr.bf16.mxu0 0
      %1470 = vmatpush1.bf16.msra.mxu0 %v1450
      %1471 = vmatprep.subr.bf16.mxu0 0
      %1472 = vmatpush1.bf16.msra.mxu0 %v1451
      %1473 = vmatprep.subr.bf16.mxu0 0
      %1474 = vmatpush1.bf16.msra.mxu0 %v1452
      %1475 = vmatprep.subr.bf16.mxu0 0
      %1476 = vmatpush1.bf16.msra.mxu0 %v1453
      %1477 = vmatprep.subr.bf16.mxu0 0
      %1478 = vmatpush1.bf16.msra.mxu0 %v1454
      %1479 = vmatprep.subr.bf16.mxu0 0
      %1480 = vmatpush1.bf16.msra.mxu0 0
      %1481 = vmatprep.subr.bf16.mxu0 0
      %1482 = vmatpush1.bf16.msra.mxu0 0
      %1483 = vmatprep.subr.bf16.mxu0 0
      %1484 = vmatpush1.bf16.msra.mxu0 0
      %1485 = vmatprep.subr.bf16.mxu0 0
      %1486 = vmatpush1.bf16.msra.mxu0 0
      %1487 = vmatprep.subr.bf16.mxu0 0
      %1488 = vmatpush1.bf16.msra.mxu0 0
      %1489 = vmatprep.subr.bf16.mxu0 0
      %1490 = vmatpush1.bf16.msra.mxu0 0
      %1491 = vmatprep.subr.bf16.mxu0 0
      %1492 = vmatpush1.bf16.msra.mxu0 0
      %1493 = vmatprep.subr.bf16.mxu0 0
      %1494 = vmatpush1.bf16.msra.mxu0 0
      %1495 = vmatprep.mubr.bf16.mxu0 0
      %1496 = vmatmul.mubr.bf16.gmra.mrb[0].mxu0 %v1407
      %v1497 = vpop.f32.mrb[0].mxu0
      %v1498 = vadd.f32 0.0, %v1497
      %v1499 = vpop.f32.mrb[0].mxu0
      %v1500 = vpop.f32.mrb[0].mxu0
      %v1501 = vadd.f32 0.0, %v1500
      %v1502 = vpop.f32.mrb[0].mxu0
      %1503 = vmatprep.mubr.bf16.mxu0 0
      %1504 = vmatmul.mubr.bf16.gmra.mrb[0].mxu0 %v1408
      %v1505 = vpop.f32.mrb[0].mxu0
      %v1506 = vadd.f32 0.0, %v1505
      %v1507 = vpop.f32.mrb[0].mxu0
      %v1508 = vpop.f32.mrb[0].mxu0
      %v1509 = vadd.f32 0.0, %v1508
      %v1510 = vpop.f32.mrb[0].mxu0
      %1511 = vmatprep.mubr.bf16.mxu0 0
      %1512 = vmatmul.mubr.bf16.gmra.mrb[0].mxu0 %v1409
      %v1513 = vpop.f32.mrb[0].mxu0
      %v1514 = vadd.f32 0.0, %v1513
      %v1515 = vpop.f32.mrb[0].mxu0
      %v1516 = vpop.f32.mrb[0].mxu0
      %v1517 = vadd.f32 0.0, %v1516
      %v1518 = vpop.f32.mrb[0].mxu0
      %1519 = vmatprep.mubr.bf16.mxu0 0
      %1520 = vmatmul.mubr.bf16.gmra.mrb[0].mxu0 %v1410
      %v1521 = vpop.f32.mrb[0].mxu0
      %v1522 = vadd.f32 0.0, %v1521
      %v1523 = vpop.f32.mrb[0].mxu0
      %v1524 = vpop.f32.mrb[0].mxu0
      %v1525 = vadd.f32 0.0, %v1524
      %v1526 = vpop.f32.mrb[0].mxu0
      %1527 = vdwg.mxu0
      %v1528 = vadd.f32 %v1246, %v1498
      %v1529 = vadd.f32 %v1247, %v1501
      %v1530 = vadd.f32 %v1248, %v1506
      %v1531 = vadd.f32 %v1249, %v1509
      %v1532 = vadd.f32 %v1250, %v1514
      %v1533 = vadd.f32 %v1251, %v1517
      %v1534 = vadd.f32 %v1252, %v1522
      %v1535 = vadd.f32 %v1253, %v1525
      %s1536 = scalar_lea.vmem %s240, 8
      %v1537 = vld [vmem:[%s1536] sm:$0xf]
      %v1538 = vld [vmem:[%s1536 + $0x8] sm:$0xf]
      %v1539 = vld [vmem:[%s1536 + $0x10] sm:$0xf]
      %v1540 = vld [vmem:[%s1536 + $0x18] sm:$0xf]
      %v1541 = vld [vmem:[%s1536 + $0x20] sm:$0xf]
      %v1542 = vld [vmem:[%s1536 + $0x28] sm:$0xf]
      %v1543 = vld [vmem:[%s1536 + $0x30] sm:$0xf]
      %v1544 = vld [vmem:[%s1536 + $0x38] sm:$0xf]
      %s1545 = scalar_lea.vmem %s249, 384
      %v1546 = vld [vmem:[%s1545] sm:$0xf]
      %v1547 = vld [vmem:[%s1545 + $0x4] sm:$0xf]
      %v1548 = vld [vmem:[%s1545 + $0x8] sm:$0xf]
      %v1549 = vld [vmem:[%s1545 + $0xc] sm:$0xf]
      %v1550 = vld [vmem:[%s1545 + $0x10] sm:$0xf]
      %v1551 = vld [vmem:[%s1545 + $0x14] sm:$0xf]
      %v1552 = vld [vmem:[%s1545 + $0x18] sm:$0xf]
      %v1553 = vld [vmem:[%s1545 + $0x1c] sm:$0xf]
      %v1554 = vld [vmem:[%s1545 + $0x20] sm:$0xf]
      %v1555 = vld [vmem:[%s1545 + $0x24] sm:$0xf]
      %v1556 = vld [vmem:[%s1545 + $0x28] sm:$0xf]
      %v1557 = vld [vmem:[%s1545 + $0x2c] sm:$0xf]
      %v1558 = vld [vmem:[%s1545 + $0x30] sm:$0xf]
      %v1559 = vld [vmem:[%s1545 + $0x34] sm:$0xf]
      %v1560 = vld [vmem:[%s1545 + $0x38] sm:$0xf]
      %v1561 = vld [vmem:[%s1545 + $0x3c] sm:$0xf]
      %v1570 = vunpack.c.l.b16 %v1537
      %v1571 = vunpack.c.l.b16 %v1538
      %v1572 = vunpack.c.l.b16 %v1539
      %v1573 = vunpack.c.l.b16 %v1540
      %v1574 = vunpack.c.l.b16 %v1541
      %v1575 = vunpack.c.l.b16 %v1542
      %v1576 = vunpack.c.l.b16 %v1543
      %v1577 = vunpack.c.l.b16 %v1544
      %v1578 = vpack.c.b16 %v1571, %v1570
      %v1579 = vpack.c.b16 %v1573, %v1572
      %v1580 = vpack.c.b16 %v1575, %v1574
      %v1581 = vpack.c.b16 %v1577, %v1576
      %v1602 = vunpack.c.l.b16 %v1546
      %v1603 = vunpack.c.l.b16 %v1547
      %v1604 = vunpack.c.l.b16 %v1548
      %v1605 = vunpack.c.l.b16 %v1549
      %v1606 = vunpack.c.l.b16 %v1550
      %v1607 = vunpack.c.l.b16 %v1551
      %v1608 = vunpack.c.l.b16 %v1552
      %v1609 = vunpack.c.l.b16 %v1553
      %v1610 = vunpack.c.l.b16 %v1554
      %v1611 = vunpack.c.l.b16 %v1555
      %v1612 = vunpack.c.l.b16 %v1556
      %v1613 = vunpack.c.l.b16 %v1557
      %v1614 = vunpack.c.l.b16 %v1558
      %v1615 = vunpack.c.l.b16 %v1559
      %v1616 = vunpack.c.l.b16 %v1560
      %v1617 = vunpack.c.l.b16 %v1561
      %v1618 = vpack.c.b16 %v1603, %v1602
      %v1619 = vpack.c.b16 %v1605, %v1604
      %v1620 = vpack.c.b16 %v1607, %v1606
      %v1621 = vpack.c.b16 %v1609, %v1608
      %v1622 = vpack.c.b16 %v1611, %v1610
      %v1623 = vpack.c.b16 %v1613, %v1612
      %v1624 = vpack.c.b16 %v1615, %v1614
      %v1625 = vpack.c.b16 %v1617, %v1616
      %1634 = vmatprep.subr.bf16.mxu0 0
      %1635 = vmatpush1.bf16.msra.mxu0 %v1618
      %1636 = vmatprep.subr.bf16.mxu0 0
      %1637 = vmatpush1.bf16.msra.mxu0 %v1619
      %1638 = vmatprep.subr.bf16.mxu0 0
      %1639 = vmatpush1.bf16.msra.mxu0 %v1620
      %1640 = vmatprep.subr.bf16.mxu0 0
      %1641 = vmatpush1.bf16.msra.mxu0 %v1621
      %1642 = vmatprep.subr.bf16.mxu0 0
      %1643 = vmatpush1.bf16.msra.mxu0 %v1622
      %1644 = vmatprep.subr.bf16.mxu0 0
      %1645 = vmatpush1.bf16.msra.mxu0 %v1623
      %1646 = vmatprep.subr.bf16.mxu0 0
      %1647 = vmatpush1.bf16.msra.mxu0 %v1624
      %1648 = vmatprep.subr.bf16.mxu0 0
      %1649 = vmatpush1.bf16.msra.mxu0 %v1625
      %1650 = vmatprep.subr.bf16.mxu0 0
      %1651 = vmatpush1.bf16.msra.mxu0 0
      %1652 = vmatprep.subr.bf16.mxu0 0
      %1653 = vmatpush1.bf16.msra.mxu0 0
      %1654 = vmatprep.subr.bf16.mxu0 0
      %1655 = vmatpush1.bf16.msra.mxu0 0
      %1656 = vmatprep.subr.bf16.mxu0 0
      %1657 = vmatpush1.bf16.msra.mxu0 0
      %1658 = vmatprep.subr.bf16.mxu0 0
      %1659 = vmatpush1.bf16.msra.mxu0 0
      %1660 = vmatprep.subr.bf16.mxu0 0
      %1661 = vmatpush1.bf16.msra.mxu0 0
      %1662 = vmatprep.subr.bf16.mxu0 0
      %1663 = vmatpush1.bf16.msra.mxu0 0
      %1664 = vmatprep.subr.bf16.mxu0 0
      %1665 = vmatpush1.bf16.msra.mxu0 0
      %1666 = vmatprep.mubr.bf16.mxu0 0
      %1667 = vmatmul.mubr.bf16.gmra.mrb[0].mxu0 %v1578
      %v1668 = vpop.f32.mrb[0].mxu0
      %v1669 = vadd.f32 0.0, %v1668
      %v1670 = vpop.f32.mrb[0].mxu0
      %v1671 = vpop.f32.mrb[0].mxu0
      %v1672 = vadd.f32 0.0, %v1671
      %v1673 = vpop.f32.mrb[0].mxu0
      %1674 = vmatprep.mubr.bf16.mxu0 0
      %1675 = vmatmul.mubr.bf16.gmra.mrb[0].mxu0 %v1579
      %v1676 = vpop.f32.mrb[0].mxu0
      %v1677 = vadd.f32 0.0, %v1676
      %v1678 = vpop.f32.mrb[0].mxu0
      %v1679 = vpop.f32.mrb[0].mxu0
      %v1680 = vadd.f32 0.0, %v1679
      %v1681 = vpop.f32.mrb[0].mxu0
      %1682 = vmatprep.mubr.bf16.mxu0 0
      %1683 = vmatmul.mubr.bf16.gmra.mrb[0].mxu0 %v1580
      %v1684 = vpop.f32.mrb[0].mxu0
      %v1685 = vadd.f32 0.0, %v1684
      %v1686 = vpop.f32.mrb[0].mxu0
      %v1687 = vpop.f32.mrb[0].mxu0
      %v1688 = vadd.f32 0.0, %v1687
      %v1689 = vpop.f32.mrb[0].mxu0
      %1690 = vmatprep.mubr.bf16.mxu0 0
      %1691 = vmatmul.mubr.bf16.gmra.mrb[0].mxu0 %v1581
      %v1692 = vpop.f32.mrb[0].mxu0
      %v1693 = vadd.f32 0.0, %v1692
      %v1694 = vpop.f32.mrb[0].mxu0
      %v1695 = vpop.f32.mrb[0].mxu0
      %v1696 = vadd.f32 0.0, %v1695
      %v1697 = vpop.f32.mrb[0].mxu0
      %1698 = vdwg.mxu0
      %v1699 = vadd.f32 %v1528, %v1669
      %v1700 = vadd.f32 %v1529, %v1672
      %v1701 = vadd.f32 %v1530, %v1677
      %v1702 = vadd.f32 %v1531, %v1680
      %v1703 = vadd.f32 %v1532, %v1685
      %v1704 = vadd.f32 %v1533, %v1688
      %v1705 = vadd.f32 %v1534, %v1693
      %v1706 = vadd.f32 %v1535, %v1696
      %s1707 = scalar_lea.vmem %s240, 80
      %v1708 = vld [vmem:[%s1707] sm:$0xf]
      %v1709 = vld [vmem:[%s1707 + $0x8] sm:$0xf]
      %v1710 = vld [vmem:[%s1707 + $0x10] sm:$0xf]
      %v1711 = vld [vmem:[%s1707 + $0x18] sm:$0xf]
      %v1712 = vld [vmem:[%s1707 + $0x20] sm:$0xf]
      %v1713 = vld [vmem:[%s1707 + $0x28] sm:$0xf]
      %v1714 = vld [vmem:[%s1707 + $0x30] sm:$0xf]
      %v1715 = vld [vmem:[%s1707 + $0x38] sm:$0xf]
      %s1716 = scalar_lea.vmem %s249, 448
      %v1717 = vld [vmem:[%s1716] sm:$0xf]
      %v1718 = vld [vmem:[%s1716 + $0x4] sm:$0xf]
      %v1719 = vld [vmem:[%s1716 + $0x8] sm:$0xf]
      %v1720 = vld [vmem:[%s1716 + $0xc] sm:$0xf]
      %v1721 = vld [vmem:[%s1716 + $0x10] sm:$0xf]
      %v1722 = vld [vmem:[%s1716 + $0x14] sm:$0xf]
      %v1723 = vld [vmem:[%s1716 + $0x18] sm:$0xf]
      %v1724 = vld [vmem:[%s1716 + $0x1c] sm:$0xf]
      %v1725 = vld [vmem:[%s1716 + $0x20] sm:$0xf]
      %v1726 = vld [vmem:[%s1716 + $0x24] sm:$0xf]
      %v1727 = vld [vmem:[%s1716 + $0x28] sm:$0xf]
      %v1728 = vld [vmem:[%s1716 + $0x2c] sm:$0xf]
      %v1729 = vld [vmem:[%s1716 + $0x30] sm:$0xf]
      %v1730 = vld [vmem:[%s1716 + $0x34] sm:$0xf]
      %v1731 = vld [vmem:[%s1716 + $0x38] sm:$0xf]
      %v1732 = vld [vmem:[%s1716 + $0x3c] sm:$0xf]
      %v1741 = vunpack.c.l.b16 %v1708
      %v1742 = vunpack.c.l.b16 %v1709
      %v1743 = vunpack.c.l.b16 %v1710
      %v1744 = vunpack.c.l.b16 %v1711
      %v1745 = vunpack.c.l.b16 %v1712
      %v1746 = vunpack.c.l.b16 %v1713
      %v1747 = vunpack.c.l.b16 %v1714
      %v1748 = vunpack.c.l.b16 %v1715
      %v1749 = vpack.c.b16 %v1742, %v1741
      %v1750 = vpack.c.b16 %v1744, %v1743
      %v1751 = vpack.c.b16 %v1746, %v1745
      %v1752 = vpack.c.b16 %v1748, %v1747
      %v1773 = vunpack.c.l.b16 %v1717
      %v1774 = vunpack.c.l.b16 %v1718
      %v1775 = vunpack.c.l.b16 %v1719
      %v1776 = vunpack.c.l.b16 %v1720
      %v1777 = vunpack.c.l.b16 %v1721
      %v1778 = vunpack.c.l.b16 %v1722
      %v1779 = vunpack.c.l.b16 %v1723
      %v1780 = vunpack.c.l.b16 %v1724
      %v1781 = vunpack.c.l.b16 %v1725
      %v1782 = vunpack.c.l.b16 %v1726
      %v1783 = vunpack.c.l.b16 %v1727
      %v1784 = vunpack.c.l.b16 %v1728
      %v1785 = vunpack.c.l.b16 %v1729
      %v1786 = vunpack.c.l.b16 %v1730
      %v1787 = vunpack.c.l.b16 %v1731
      %v1788 = vunpack.c.l.b16 %v1732
      %v1789 = vpack.c.b16 %v1774, %v1773
      %v1790 = vpack.c.b16 %v1776, %v1775
      %v1791 = vpack.c.b16 %v1778, %v1777
      %v1792 = vpack.c.b16 %v1780, %v1779
      %v1793 = vpack.c.b16 %v1782, %v1781
      %v1794 = vpack.c.b16 %v1784, %v1783
      %v1795 = vpack.c.b16 %v1786, %v1785
      %v1796 = vpack.c.b16 %v1788, %v1787
      %1805 = vmatprep.subr.bf16.mxu0 0
      %1806 = vmatpush1.bf16.msra.mxu0 %v1789
      %1807 = vmatprep.subr.bf16.mxu0 0
      %1808 = vmatpush1.bf16.msra.mxu0 %v1790
      %1809 = vmatprep.subr.bf16.mxu0 0
      %1810 = vmatpush1.bf16.msra.mxu0 %v1791
      %1811 = vmatprep.subr.bf16.mxu0 0
      %1812 = vmatpush1.bf16.msra.mxu0 %v1792
      %1813 = vmatprep.subr.bf16.mxu0 0
      %1814 = vmatpush1.bf16.msra.mxu0 %v1793
      %1815 = vmatprep.subr.bf16.mxu0 0
      %1816 = vmatpush1.bf16.msra.mxu0 %v1794
      %1817 = vmatprep.subr.bf16.mxu0 0
      %1818 = vmatpush1.bf16.msra.mxu0 %v1795
      %1819 = vmatprep.subr.bf16.mxu0 0
      %1820 = vmatpush1.bf16.msra.mxu0 %v1796
      %1821 = vmatprep.subr.bf16.mxu0 0
      %1822 = vmatpush1.bf16.msra.mxu0 0
      %1823 = vmatprep.subr.bf16.mxu0 0
      %1824 = vmatpush1.bf16.msra.mxu0 0
      %1825 = vmatprep.subr.bf16.mxu0 0
      %1826 = vmatpush1.bf16.msra.mxu0 0
      %1827 = vmatprep.subr.bf16.mxu0 0
      %1828 = vmatpush1.bf16.msra.mxu0 0
      %1829 = vmatprep.subr.bf16.mxu0 0
      %1830 = vmatpush1.bf16.msra.mxu0 0
      %1831 = vmatprep.subr.bf16.mxu0 0
      %1832 = vmatpush1.bf16.msra.mxu0 0
      %1833 = vmatprep.subr.bf16.mxu0 0
      %1834 = vmatpush1.bf16.msra.mxu0 0
      %1835 = vmatprep.subr.bf16.mxu0 0
      %1836 = vmatpush1.bf16.msra.mxu0 0
      %1837 = vmatprep.mubr.bf16.mxu0 0
      %1838 = vmatmul.mubr.bf16.gmra.mrb[0].mxu0 %v1749
      %v1839 = vpop.f32.mrb[0].mxu0
      %v1840 = vadd.f32 0.0, %v1839
      %v1841 = vpop.f32.mrb[0].mxu0
      %v1842 = vpop.f32.mrb[0].mxu0
      %v1843 = vadd.f32 0.0, %v1842
      %v1844 = vpop.f32.mrb[0].mxu0
      %1845 = vmatprep.mubr.bf16.mxu0 0
      %1846 = vmatmul.mubr.bf16.gmra.mrb[0].mxu0 %v1750
      %v1847 = vpop.f32.mrb[0].mxu0
      %v1848 = vadd.f32 0.0, %v1847
      %v1849 = vpop.f32.mrb[0].mxu0
      %v1850 = vpop.f32.mrb[0].mxu0
      %v1851 = vadd.f32 0.0, %v1850
      %v1852 = vpop.f32.mrb[0].mxu0
      %1853 = vmatprep.mubr.bf16.mxu0 0
      %1854 = vmatmul.mubr.bf16.gmra.mrb[0].mxu0 %v1751
      %v1855 = vpop.f32.mrb[0].mxu0
      %v1856 = vadd.f32 0.0, %v1855
      %v1857 = vpop.f32.mrb[0].mxu0
      %v1858 = vpop.f32.mrb[0].mxu0
      %v1859 = vadd.f32 0.0, %v1858
      %v1860 = vpop.f32.mrb[0].mxu0
      %1861 = vmatprep.mubr.bf16.mxu0 0
      %1862 = vmatmul.mubr.bf16.gmra.mrb[0].mxu0 %v1752
      %v1863 = vpop.f32.mrb[0].mxu0
      %v1864 = vadd.f32 0.0, %v1863
      %v1865 = vpop.f32.mrb[0].mxu0
      %v1866 = vpop.f32.mrb[0].mxu0
      %v1867 = vadd.f32 0.0, %v1866
      %v1868 = vpop.f32.mrb[0].mxu0
      %1869 = vdwg.mxu0
      %v1870 = vadd.f32 %v1699, %v1840
      %v1871 = vadd.f32 %v1700, %v1843
      %v1872 = vadd.f32 %v1701, %v1848
      %v1873 = vadd.f32 %v1702, %v1851
      %v1874 = vadd.f32 %v1703, %v1856
      %v1875 = vadd.f32 %v1704, %v1859
      %v1876 = vadd.f32 %v1705, %v1864
      %v1877 = vadd.f32 %v1706, %v1867
      %v1878 = vld [vmem:[%s1536] sm:$0xf]
      %v1879 = vld [vmem:[%s1536 + $0x4] sm:$0x1]
      %v1880 = vld [vmem:[%s1536 + $0x8] sm:$0xf]
      %v1881 = vld [vmem:[%s1536 + $0xc] sm:$0x1]
      %v1882 = vld [vmem:[%s1536 + $0x10] sm:$0xf]
      %v1883 = vld [vmem:[%s1536 + $0x14] sm:$0x1]
      %v1884 = vld [vmem:[%s1536 + $0x18] sm:$0xf]
      %v1885 = vld [vmem:[%s1536 + $0x1c] sm:$0x1]
      %v1886 = vld [vmem:[%s1536 + $0x20] sm:$0xf]
      %v1887 = vld [vmem:[%s1536 + $0x24] sm:$0x1]
      %v1888 = vld [vmem:[%s1536 + $0x28] sm:$0xf]
      %v1889 = vld [vmem:[%s1536 + $0x2c] sm:$0x1]
      %v1890 = vld [vmem:[%s1536 + $0x30] sm:$0xf]
      %v1891 = vld [vmem:[%s1536 + $0x34] sm:$0x1]
      %v1892 = vld [vmem:[%s1536 + $0x38] sm:$0xf]
      %v1893 = vld [vmem:[%s1536 + $0x3c] sm:$0x1]
      %v1895 = vshrl.u32 %v1878, 16
      %v1897 = vrot.slane %v1895, 4
      %v1898 = vshll.u32 %v1878, 16
      %v1900 = vrot.slane %v1898, 5
      %v1901 = vor.u32 %v1897, %v1900
      %v1902 = vrot.slane %v1901, 4
      %v1904 = vshll.u32 %v1879, 16
      %v1906 = vrot.slane %v1904, 5
      %v1907 = vsel %vm645, %v1902, %v1906
      %v1909 = vshrl.u32 %v1880, 16
      %v1911 = vrot.slane %v1909, 4
      %v1912 = vshll.u32 %v1880, 16
      %v1914 = vrot.slane %v1912, 5
      %v1915 = vor.u32 %v1911, %v1914
      %v1916 = vrot.slane %v1915, 4
      %v1918 = vshll.u32 %v1881, 16
      %v1920 = vrot.slane %v1918, 5
      %v1921 = vsel %vm645, %v1916, %v1920
      %v1923 = vshrl.u32 %v1882, 16
      %v1925 = vrot.slane %v1923, 4
      %v1926 = vshll.u32 %v1882, 16
      %v1928 = vrot.slane %v1926, 5
      %v1929 = vor.u32 %v1925, %v1928
      %v1930 = vrot.slane %v1929, 4
      %v1932 = vshll.u32 %v1883, 16
      %v1934 = vrot.slane %v1932, 5
      %v1935 = vsel %vm645, %v1930, %v1934
      %v1937 = vshrl.u32 %v1884, 16
      %v1939 = vrot.slane %v1937, 4
      %v1940 = vshll.u32 %v1884, 16
      %v1942 = vrot.slane %v1940, 5
      %v1943 = vor.u32 %v1939, %v1942
      %v1944 = vrot.slane %v1943, 4
      %v1946 = vshll.u32 %v1885, 16
      %v1948 = vrot.slane %v1946, 5
      %v1949 = vsel %vm645, %v1944, %v1948
      %v1951 = vshrl.u32 %v1886, 16
      %v1953 = vrot.slane %v1951, 4
      %v1954 = vshll.u32 %v1886, 16
      %v1956 = vrot.slane %v1954, 5
      %v1957 = vor.u32 %v1953, %v1956
      %v1958 = vrot.slane %v1957, 4
      %v1960 = vshll.u32 %v1887, 16
      %v1962 = vrot.slane %v1960, 5
      %v1963 = vsel %vm645, %v1958, %v1962
      %v1965 = vshrl.u32 %v1888, 16
      %v1967 = vrot.slane %v1965, 4
      %v1968 = vshll.u32 %v1888, 16
      %v1970 = vrot.slane %v1968, 5
      %v1971 = vor.u32 %v1967, %v1970
      %v1972 = vrot.slane %v1971, 4
      %v1974 = vshll.u32 %v1889, 16
      %v1976 = vrot.slane %v1974, 5
      %v1977 = vsel %vm645, %v1972, %v1976
      %v1979 = vshrl.u32 %v1890, 16
      %v1981 = vrot.slane %v1979, 4
      %v1982 = vshll.u32 %v1890, 16
      %v1984 = vrot.slane %v1982, 5
      %v1985 = vor.u32 %v1981, %v1984
      %v1986 = vrot.slane %v1985, 4
      %v1988 = vshll.u32 %v1891, 16
      %v1990 = vrot.slane %v1988, 5
      %v1991 = vsel %vm645, %v1986, %v1990
      %v1993 = vshrl.u32 %v1892, 16
      %v1995 = vrot.slane %v1993, 4
      %v1996 = vshll.u32 %v1892, 16
      %v1998 = vrot.slane %v1996, 5
      %v1999 = vor.u32 %v1995, %v1998
      %v2000 = vrot.slane %v1999, 4
      %v2002 = vshll.u32 %v1893, 16
      %v2004 = vrot.slane %v2002, 5
      %v2005 = vsel %vm645, %v2000, %v2004
      %s2006 = scalar_lea.vmem %s249, 512
      %v2007 = vld [vmem:[%s2006] sm:$0xf]
      %v2008 = vld [vmem:[%s2006 + $0x4] sm:$0xf]
      %v2009 = vld [vmem:[%s2006 + $0x8] sm:$0xf]
      %v2010 = vld [vmem:[%s2006 + $0xc] sm:$0xf]
      %v2011 = vld [vmem:[%s2006 + $0x10] sm:$0xf]
      %v2012 = vld [vmem:[%s2006 + $0x14] sm:$0xf]
      %v2013 = vld [vmem:[%s2006 + $0x18] sm:$0xf]
      %v2014 = vld [vmem:[%s2006 + $0x1c] sm:$0xf]
      %v2015 = vld [vmem:[%s2006 + $0x20] sm:$0xf]
      %v2016 = vld [vmem:[%s2006 + $0x24] sm:$0xf]
      %v2017 = vld [vmem:[%s2006 + $0x28] sm:$0xf]
      %v2018 = vld [vmem:[%s2006 + $0x2c] sm:$0xf]
      %v2019 = vld [vmem:[%s2006 + $0x30] sm:$0xf]
      %v2020 = vld [vmem:[%s2006 + $0x34] sm:$0xf]
      %v2021 = vld [vmem:[%s2006 + $0x38] sm:$0xf]
      %v2022 = vld [vmem:[%s2006 + $0x3c] sm:$0xf]
      %v2023 = vunpack.c.l.b16 %v1907
      %v2024 = vunpack.c.l.b16 %v1921
      %v2025 = vunpack.c.l.b16 %v1935
      %v2026 = vunpack.c.l.b16 %v1949
      %v2027 = vunpack.c.l.b16 %v1963
      %v2028 = vunpack.c.l.b16 %v1977
      %v2029 = vunpack.c.l.b16 %v1991
      %v2030 = vunpack.c.l.b16 %v2005
      %v2031 = vpack.c.b16 %v2024, %v2023
      %v2032 = vpack.c.b16 %v2026, %v2025
      %v2033 = vpack.c.b16 %v2028, %v2027
      %v2034 = vpack.c.b16 %v2030, %v2029
      %v2055 = vunpack.c.l.b16 %v2007
      %v2056 = vunpack.c.l.b16 %v2008
      %v2057 = vunpack.c.l.b16 %v2009
      %v2058 = vunpack.c.l.b16 %v2010
      %v2059 = vunpack.c.l.b16 %v2011
      %v2060 = vunpack.c.l.b16 %v2012
      %v2061 = vunpack.c.l.b16 %v2013
      %v2062 = vunpack.c.l.b16 %v2014
      %v2063 = vunpack.c.l.b16 %v2015
      %v2064 = vunpack.c.l.b16 %v2016
      %v2065 = vunpack.c.l.b16 %v2017
      %v2066 = vunpack.c.l.b16 %v2018
      %v2067 = vunpack.c.l.b16 %v2019
      %v2068 = vunpack.c.l.b16 %v2020
      %v2069 = vunpack.c.l.b16 %v2021
      %v2070 = vunpack.c.l.b16 %v2022
      %v2071 = vpack.c.b16 %v2056, %v2055
      %v2072 = vpack.c.b16 %v2058, %v2057
      %v2073 = vpack.c.b16 %v2060, %v2059
      %v2074 = vpack.c.b16 %v2062, %v2061
      %v2075 = vpack.c.b16 %v2064, %v2063
      %v2076 = vpack.c.b16 %v2066, %v2065
      %v2077 = vpack.c.b16 %v2068, %v2067
      %v2078 = vpack.c.b16 %v2070, %v2069
      %2087 = vmatprep.subr.bf16.mxu0 0
      %2088 = vmatpush1.bf16.msra.mxu0 %v2071
      %2089 = vmatprep.subr.bf16.mxu0 0
      %2090 = vmatpush1.bf16.msra.mxu0 %v2072
      %2091 = vmatprep.subr.bf16.mxu0 0
      %2092 = vmatpush1.bf16.msra.mxu0 %v2073
      %2093 = vmatprep.subr.bf16.mxu0 0
      %2094 = vmatpush1.bf16.msra.mxu0 %v2074
      %2095 = vmatprep.subr.bf16.mxu0 0
      %2096 = vmatpush1.bf16.msra.mxu0 %v2075
      %2097 = vmatprep.subr.bf16.mxu0 0
      %2098 = vmatpush1.bf16.msra.mxu0 %v2076
      %2099 = vmatprep.subr.bf16.mxu0 0
      %2100 = vmatpush1.bf16.msra.mxu0 %v2077
      %2101 = vmatprep.subr.bf16.mxu0 0
      %2102 = vmatpush1.bf16.msra.mxu0 %v2078
      %2103 = vmatprep.subr.bf16.mxu0 0
      %2104 = vmatpush1.bf16.msra.mxu0 0
      %2105 = vmatprep.subr.bf16.mxu0 0
      %2106 = vmatpush1.bf16.msra.mxu0 0
      %2107 = vmatprep.subr.bf16.mxu0 0
      %2108 = vmatpush1.bf16.msra.mxu0 0
      %2109 = vmatprep.subr.bf16.mxu0 0
      %2110 = vmatpush1.bf16.msra.mxu0 0
      %2111 = vmatprep.subr.bf16.mxu0 0
      %2112 = vmatpush1.bf16.msra.mxu0 0
      %2113 = vmatprep.subr.bf16.mxu0 0
      %2114 = vmatpush1.bf16.msra.mxu0 0
      %2115 = vmatprep.subr.bf16.mxu0 0
      %2116 = vmatpush1.bf16.msra.mxu0 0
      %2117 = vmatprep.subr.bf16.mxu0 0
      %2118 = vmatpush1.bf16.msra.mxu0 0
      %2119 = vmatprep.mubr.bf16.mxu0 0
      %2120 = vmatmul.mubr.bf16.gmra.mrb[0].mxu0 %v2031
      %v2121 = vpop.f32.mrb[0].mxu0
      %v2122 = vadd.f32 0.0, %v2121
      %v2123 = vpop.f32.mrb[0].mxu0
      %v2124 = vpop.f32.mrb[0].mxu0
      %v2125 = vadd.f32 0.0, %v2124
      %v2126 = vpop.f32.mrb[0].mxu0
      %2127 = vmatprep.mubr.bf16.mxu0 0
      %2128 = vmatmul.mubr.bf16.gmra.mrb[0].mxu0 %v2032
      %v2129 = vpop.f32.mrb[0].mxu0
      %v2130 = vadd.f32 0.0, %v2129
      %v2131 = vpop.f32.mrb[0].mxu0
      %v2132 = vpop.f32.mrb[0].mxu0
      %v2133 = vadd.f32 0.0, %v2132
      %v2134 = vpop.f32.mrb[0].mxu0
      %2135 = vmatprep.mubr.bf16.mxu0 0
      %2136 = vmatmul.mubr.bf16.gmra.mrb[0].mxu0 %v2033
      %v2137 = vpop.f32.mrb[0].mxu0
      %v2138 = vadd.f32 0.0, %v2137
      %v2139 = vpop.f32.mrb[0].mxu0
      %v2140 = vpop.f32.mrb[0].mxu0
      %v2141 = vadd.f32 0.0, %v2140
      %v2142 = vpop.f32.mrb[0].mxu0
      %2143 = vmatprep.mubr.bf16.mxu0 0
      %2144 = vmatmul.mubr.bf16.gmra.mrb[0].mxu0 %v2034
      %v2145 = vpop.f32.mrb[0].mxu0
      %v2146 = vadd.f32 0.0, %v2145
      %v2147 = vpop.f32.mrb[0].mxu0
      %v2148 = vpop.f32.mrb[0].mxu0
      %v2149 = vadd.f32 0.0, %v2148
      %v2150 = vpop.f32.mrb[0].mxu0
      %2151 = vdwg.mxu0
      %v2152 = vadd.f32 %v1870, %v2122
      %v2153 = vadd.f32 %v1871, %v2125
      %v2154 = vadd.f32 %v1872, %v2130
      %v2155 = vadd.f32 %v1873, %v2133
      %v2156 = vadd.f32 %v1874, %v2138
      %v2157 = vadd.f32 %v1875, %v2141
      %v2158 = vadd.f32 %v1876, %v2146
      %v2159 = vadd.f32 %v1877, %v2149
      %2160 = vst [vmem:[#allocation2] sm:$0xff] %v2152
      %2161 = vst [vmem:[#allocation2 + $0x8] sm:$0xff] %v2153
      %2162 = vst [vmem:[#allocation2 + $0x10] sm:$0xff] %v2154
      %2163 = vst [vmem:[#allocation2 + $0x18] sm:$0xff] %v2155
      %2164 = vst [vmem:[#allocation2 + $0x20] sm:$0xff] %v2156
      %2165 = vst [vmem:[#allocation2 + $0x28] sm:$0xff] %v2157
      %2166 = vst [vmem:[#allocation2 + $0x30] sm:$0xff] %v2158
      %2167 = vst [vmem:[#allocation2 + $0x38] sm:$0xff] %v2159
      // Predicated region
      $region33: #{_lambda_.9} parent=27 // pred_check
        %p2168 = pneg %p267
      $region34: #{_lambda_.9} parent=27 // pred_check_branch
        %2170 = sbr.rel (%p2168) target = $region36
      $region35: #{_lambda_.9} parent=27 // pred_region
        %v2171 = vpack.c.bf16 %v2152, %v2152
        %v2172 = vpack.c.bf16 %v2153, %v2153
        %v2173 = vpack.c.bf16 %v2154, %v2154
        %v2174 = vpack.c.bf16 %v2155, %v2155
        %v2175 = vpack.c.bf16 %v2156, %v2156
        %v2176 = vpack.c.bf16 %v2157, %v2157
        %v2177 = vpack.c.bf16 %v2158, %v2158
        %v2178 = vpack.c.bf16 %v2159, %v2159
        %2179 = vst [vmem:[%s258] sm:$0xf] %v2171
        %2180 = vst [vmem:[%s258 + $0x4] sm:$0xf] %v2172
        %2181 = vst [vmem:[%s258 + $0x8] sm:$0xf] %v2173
        %2182 = vst [vmem:[%s258 + $0xc] sm:$0xf] %v2174
        %2183 = vst [vmem:[%s258 + $0x10] sm:$0xf] %v2175
        %2184 = vst [vmem:[%s258 + $0x14] sm:$0xf] %v2176
        %2185 = vst [vmem:[%s258 + $0x18] sm:$0xf] %v2177
        %2186 = vst [vmem:[%s258 + $0x1c] sm:$0xf] %v2178
        %v2187 = vadd.f32 %v2152, %v2153
        %v2188 = vadd.f32 %v2187, %v2154
        %v2189 = vadd.f32 %v2188, %v2155
        %v2190 = vadd.f32 %v2189, %v2156
        %v2191 = vadd.f32 %v2190, %v2157
        %v2192 = vadd.f32 %v2191, %v2158
        %v2193 = vadd.f32 %v2192, %v2159
        %v2194 = vrot.slane %v2193, 4
        %v2195 = vadd.f32 %v2193, %v2194
        %v2196 = vrot.slane %v2195, 2
        %v2197 = vadd.f32 %v2195, %v2196
        %v2198 = vrot.slane %v2197, 1
        %v2199 = vadd.f32 %v2197, %v2198
        %2200 = vst [vmem:[%s265] sm:$0x1] %v2199
        %v2201 = vmul.f32 %v2152, %v2152
        %v2202 = vmul.f32 %v2153, %v2153
        %v2203 = vmul.f32 %v2154, %v2154
        %v2204 = vmul.f32 %v2155, %v2155
        %v2205 = vmul.f32 %v2156, %v2156
        %v2206 = vmul.f32 %v2157, %v2157
        %v2207 = vmul.f32 %v2158, %v2158
        %v2208 = vmul.f32 %v2159, %v2159
        %v2209 = vadd.f32 %v2201, %v2202
        %v2210 = vadd.f32 %v2209, %v2203
        %v2211 = vadd.f32 %v2210, %v2204
        %v2212 = vadd.f32 %v2211, %v2205
        %v2213 = vadd.f32 %v2212, %v2206
        %v2214 = vadd.f32 %v2213, %v2207
        %v2215 = vadd.f32 %v2214, %v2208
        %v2216 = vrot.slane %v2215, 4
        %v2217 = vadd.f32 %v2215, %v2216
        %v2218 = vrot.slane %v2217, 2
        %v2219 = vadd.f32 %v2217, %v2218
        %v2220 = vrot.slane %v2219, 1
        %v2221 = vadd.f32 %v2219, %v2220
        %2222 = vst [vmem:[%s265 + $0x1] sm:$0x1] %v2221
      $region36: #{_lambda_.9} parent=27 // pred_fallthru
        _
      %p2223 = scmp.lt.s32.totalorder %s20, 1
      %s2224 = scalar_select %p2223, %s20, 1
      %p2225 = scmp.lt.s32.totalorder %s21, 0
      %s2226 = scalar_select %p2225, %s21, 0
      %s2227 = smul.addr %s2224, 8
      %s2228 = sadd.s32 %s2226, %s2227
      %s2229 = smul.addr %s2228, 4
      %s2230 = scalar_lea.vmem %s2, %s2229
      %p2231 = scmp.lt.s32.totalorder %s20, 1
      %s2232 = scalar_select %p2231, %s20, 1
      %p2233 = scmp.lt.s32.totalorder %s21, 0
      %s2234 = scalar_select %p2233, %s21, 0
      %s2235 = sadd.s32 %s2234, %s2232
      %s2236 = smul.addr %s2235, 2
      %s2237 = scalar_lea.vmem %s3, %s2236
      // Predicated region
      $region37: #{_lambda_.9} parent=27 // pred_check
        %p2238 = pneg %p110
      $region38: #{_lambda_.9} parent=27 // pred_check_branch
        %2240 = sbr.rel (%p2238) target = $region40
      $region39: #{_lambda_.9} parent=27 // pred_region
        _
      $region40: #{_lambda_.9} parent=27 // pred_fallthru
        _
      // Predicated region
      $region41: #{_lambda_.9} parent=27 // pred_check
        %p2241 = pneg %p138
      $region42: #{_lambda_.9} parent=27 // pred_check_branch
        %2243 = sbr.rel (%p2241) target = $region44
      $region43: #{_lambda_.9} parent=27 // pred_region
        _
      $region44: #{_lambda_.9} parent=27 // pred_fallthru
        _
    $region28: #{_lambda_.9} parent=5 // pred_fallthru
      _
    %p2244 = scmp.le.s32.totalorder 2, %s10
    // Predicated region
    $region45: #{_lambda_.9} parent=5 // pred_check
      %p2245 = pneg %p2244
    $region46: #{_lambda_.9} parent=5 // pred_check_branch
      %2247 = sbr.rel (%p2245) target = $region48
    $region47: #{_lambda_.9} parent=5 // pred_region
      %s2248 = ssub.s32 %s10, 2
      // Predicated region
      $region49: #{_lambda_.9} parent=47 // pred_check
        %p2249 = pneg %p116
      $region50: #{_lambda_.9} parent=47 // pred_check_branch
        %2251 = sbr.rel (%p2249) target = $region52
      $region51: #{_lambda_.9} parent=47 // pred_region
        %p2252 = scmp.lt.s32.totalorder %s23, 1
        %s2253 = scalar_select %p2252, %s23, 1
        %p2254 = scmp.lt.s32.totalorder %s24, 0
        %s2255 = scalar_select %p2254, %s24, 0
        %s2256 = smul.addr %s2253, 8
        %s2257 = sadd.s32 %s2255, %s2256
        %s2258 = smul.addr %s2257, 4
        %s2259 = scalar_lea.vmem %s2, %s2258
      $region52: #{_lambda_.9} parent=47 // pred_fallthru
        _
      // Predicated region
      $region53: #{_lambda_.9} parent=47 // pred_check
        %p2260 = pneg %p144
      $region54: #{_lambda_.9} parent=47 // pred_check_branch
        %2262 = sbr.rel (%p2260) target = $region56
      $region55: #{_lambda_.9} parent=47 // pred_region
        %p2263 = scmp.lt.s32.totalorder %s23, 1
        %s2264 = scalar_select %p2263, %s23, 1
        %p2265 = scmp.lt.s32.totalorder %s24, 0
        %s2266 = scalar_select %p2265, %s24, 0
        %s2267 = sadd.s32 %s2266, %s2264
        %s2268 = smul.addr %s2267, 2
        %s2269 = scalar_lea.vmem %s3, %s2268
      $region56: #{_lambda_.9} parent=47 // pred_fallthru
        _
    $region48: #{_lambda_.9} parent=5 // pred_fallthru
      _
  $region6: #{_lambda_.9} parent=0 // loop_footer
    %s14 = sadd.s32 1, %s10
  $region7: #{_lambda_.9} parent=0 // loop_footer_branch
    %9 = sbr.rel target = $region3
  $region8: #{_lambda_.9} parent=0 // loop_exit
    _

// kernel: _lambda_.11
$region0: #{_lambda_.11}
  #allocation0 [shape = 'u32[]', space=smem, size = 0x4, offset = 0x4, fixed_abs, tag = 'smem constant byte address 0x4 - core index']
  #allocation1 [shape = 'u32[144,128]{1,0:T(1,128)}', space=vmem, size = 0x12000, scoped, tag = 'internal scratch']
  #allocation2 [shape = 'f32[64,128]{1,0:T(8,128)}', space=vmem, size = 0x8000, scoped, tag = 'scratch operand']
  %s0 = inlined_call_operand.vmem [shape: bf16[2,10,10,128], index: 0, kind: input, shape index: {}]
  %s1 = inlined_call_operand.vmem [shape: bf16[9,128,128], index: 1, kind: input, shape index: {}]
  %s2 = inlined_call_operand.vmem [shape: bf16[2,8,8,128], index: 2, kind: output, shape index: {0}]
  %s3 = inlined_call_operand.vmem [shape: f32[2,2,128], index: 3, kind: output, shape index: {1}]
  %4 = xla_tuple %s2, %s3
  %s5 = sld [smem:[#allocation0]]
  $region57: #{_lambda_.11} parent=0
    _
  %s7 = ssub.s32 1, %s5
  %s8 = scalar_select 0, %s7, %s5
  loop: start=0, step=1, limit=4
  $region2: #{_lambda_.11} parent=0 // loop_pre_header
    _
  $region3: #{_lambda_.11} parent=0 // loop_header
    %s10 = sphi 0, %s14
    %p11 = scmp.ge.s32.totalorder %s10, 4
    %s17 = sphi 0, %s36
    %s18 = sphi 0, %s32
    %s19 = sphi 0, %s28
    %s20 = sphi 0, %s17
    %s21 = sphi 0, %s18
    %s22 = sphi 0, %s19
    %s23 = sphi 0, %s20
    %s24 = sphi 0, %s21
    %s25 = sphi 0, %s22
    %s41 = sphi 0, %s43
    %s44 = sphi 0, %s41
    %s45 = sphi 0, %s44
    %s61 = sphi 0, %s45
    %s69 = sphi 0, %s71
    %s72 = sphi 0, %s69
    %s73 = sphi 0, %s72
    %s89 = sphi 0, %s73
    %s97 = sphi 0, %s99
    %s100 = sphi 0, %s97
    %s101 = sphi 0, %s100
    %s117 = sphi 0, %s101
    %s125 = sphi 0, %s127
    %s128 = sphi 0, %s125
    %s129 = sphi 0, %s128
    %s145 = sphi 0, %s129
  $region4: #{_lambda_.11} parent=0 // loop_header_branch
    %13 = sbr.rel (%p11) target = $region8
  $region5: #{_lambda_.11} parent=0 // loop_body
    %s15 = ssub.s32 %s10, 1
    %s16 = ssub.s32 %s10, 2
    %s26 = sadd.s32 1, %s19
    %p27 = scmp.ge.s32.totalorder %s26, 1
    %s28 = scalar_select %p27, 0, %s26
    %s29 = sadd.s32 1, %s18
    %s30 = scalar_select %p27, %s29, %s18
    %p31 = scmp.ge.s32.totalorder %s30, 1
    %s32 = scalar_select %p31, 0, %s30
    %s33 = sadd.s32 1, %s17
    %s34 = scalar_select %p31, %s33, %s17
    %p35 = scmp.ge.s32.totalorder %s34, 2
    %s36 = scalar_select %p35, 0, %s34
    %s37 = ssub.s32 %s17, %s36
    %s38 = ssub.s32 %s19, %s28
    %s39 = sor.u32 %s37, %s38
    %p40 = scmp.eq.s32.totalorder %s39, 0
    %s42 = sadd.s32 %s41, 1
    %s43 = scalar_select %p40, %s41, %s42
    %p46 = pneg %p40
    %p47 = scmp.eq.s32.totalorder %s10, 1
    %p48 = por %p46, %p47
    %p49 = scmp.ne.s32.totalorder %s41, %s44
    %p50 = scmp.eq.s32.totalorder %s10, 0
    %p51 = por %p49, %p50
    %p52 = scmp.ne.s32.totalorder %s41, %s44
    %p53 = scmp.eq.s32.totalorder %s15, 1
    %p54 = por %p52, %p53
    %p55 = scmp.ne.s32.totalorder %s44, %s45
    %p56 = scmp.eq.s32.totalorder %s15, 0
    %p57 = por %p55, %p56
    %p58 = scmp.ne.s32.totalorder %s44, %s45
    %p59 = scmp.eq.s32.totalorder %s16, 1
    %p60 = por %p58, %p59
    %p62 = scmp.ne.s32.totalorder %s45, %s61
    %p63 = scmp.eq.s32.totalorder %s16, 0
    %p64 = por %p62, %p63
    %s65 = ssub.s32 %s19, %s28
    %s66 = ssub.s32 %s18, %s32
    %s67 = sor.u32 %s65, %s66
    %p68 = scmp.eq.s32.totalorder %s67, 0
    %s70 = sadd.s32 %s69, 1
    %s71 = scalar_select %p68, %s69, %s70
    %p74 = pneg %p68
    %p75 = scmp.eq.s32.totalorder %s10, 1
    %p76 = por %p74, %p75
    %p77 = scmp.ne.s32.totalorder %s69, %s72
    %p78 = scmp.eq.s32.totalorder %s10, 0
    %p79 = por %p77, %p78
    %p80 = scmp.ne.s32.totalorder %s69, %s72
    %p81 = scmp.eq.s32.totalorder %s15, 1
    %p82 = por %p80, %p81
    %p83 = scmp.ne.s32.totalorder %s72, %s73
    %p84 = scmp.eq.s32.totalorder %s15, 0
    %p85 = por %p83, %p84
    %p86 = scmp.ne.s32.totalorder %s72, %s73
    %p87 = scmp.eq.s32.totalorder %s16, 1
    %p88 = por %p86, %p87
    %p90 = scmp.ne.s32.totalorder %s73, %s89
    %p91 = scmp.eq.s32.totalorder %s16, 0
    %p92 = por %p90, %p91
    %s93 = ssub.s32 %s17, %s36
    %s94 = ssub.s32 %s18, %s32
    %s95 = sor.u32 %s93, %s94
    %p96 = scmp.eq.s32.totalorder %s95, 0
    %s98 = sadd.s32 %s97, 1
    %s99 = scalar_select %p96, %s97, %s98
    %p102 = pneg %p96
    %p103 = scmp.eq.s32.totalorder %s10, 1
    %p104 = por %p102, %p103
    %p105 = scmp.ne.s32.totalorder %s97, %s100
    %p106 = scmp.eq.s32.totalorder %s10, 0
    %p107 = por %p105, %p106
    %p108 = scmp.ne.s32.totalorder %s97, %s100
    %p109 = scmp.eq.s32.totalorder %s15, 1
    %p110 = por %p108, %p109
    %p111 = scmp.ne.s32.totalorder %s100, %s101
    %p112 = scmp.eq.s32.totalorder %s15, 0
    %p113 = por %p111, %p112
    %p114 = scmp.ne.s32.totalorder %s100, %s101
    %p115 = scmp.eq.s32.totalorder %s16, 1
    %p116 = por %p114, %p115
    %p118 = scmp.ne.s32.totalorder %s101, %s117
    %p119 = scmp.eq.s32.totalorder %s16, 0
    %p120 = por %p118, %p119
    %s121 = ssub.s32 %s17, %s36
    %s122 = ssub.s32 %s18, %s32
    %s123 = sor.u32 %s121, %s122
    %p124 = scmp.eq.s32.totalorder %s123, 0
    %s126 = sadd.s32 %s125, 1
    %s127 = scalar_select %p124, %s125, %s126
    %p130 = pneg %p124
    %p131 = scmp.eq.s32.totalorder %s10, 1
    %p132 = por %p130, %p131
    %p133 = scmp.ne.s32.totalorder %s125, %s128
    %p134 = scmp.eq.s32.totalorder %s10, 0
    %p135 = por %p133, %p134
    %p136 = scmp.ne.s32.totalorder %s125, %s128
    %p137 = scmp.eq.s32.totalorder %s15, 1
    %p138 = por %p136, %p137
    %p139 = scmp.ne.s32.totalorder %s128, %s129
    %p140 = scmp.eq.s32.totalorder %s15, 0
    %p141 = por %p139, %p140
    %p142 = scmp.ne.s32.totalorder %s128, %s129
    %p143 = scmp.eq.s32.totalorder %s16, 1
    %p144 = por %p142, %p143
    %p146 = scmp.ne.s32.totalorder %s129, %s145
    %p147 = scmp.eq.s32.totalorder %s16, 0
    %p148 = por %p146, %p147
    %p149 = scmp.le.s32.totalorder 1, %s10
    %p150 = scmp.lt.s32.totalorder %s10, 3
    %p151 = pnand %p149, %p150
    %p152 = pneg %p151
    // Predicated region
    $region9: #{_lambda_.11} parent=5 // pred_check
      _
    $region10: #{_lambda_.11} parent=5 // pred_check_branch
      %154 = sbr.rel (%p151) target = $region12
    $region11: #{_lambda_.11} parent=5 // pred_region
      %s155 = ssub.s32 %s10, 1
      // Predicated region
      $region13: #{_lambda_.11} parent=11 // pred_check
        %p156 = pneg %p85
      $region14: #{_lambda_.11} parent=11 // pred_check_branch
        %158 = sbr.rel (%p156) target = $region16
      $region15: #{_lambda_.11} parent=11 // pred_region
        %s159 = smul.u32 16, %s22
        %p160 = scmp.lt.s32.totalorder %s159, 15
        %s161 = scalar_select %p160, %s159, 15
        %p162 = scmp.lt.s32.totalorder %s21, 0
        %s163 = scalar_select %p162, %s21, 0
        %s164 = sadd.s32 %s163, %s161
        %s165 = smul.addr %s164, 4
        %s166 = scalar_lea.vmem %s1, %s165
        %s167 = smul.u32 16, %s22
      $region16: #{_lambda_.11} parent=11 // pred_fallthru
        _
    $region12: #{_lambda_.11} parent=5 // pred_fallthru
      _
    %p168 = scmp.lt.s32.totalorder %s10, 2
    // Predicated region
    $region17: #{_lambda_.11} parent=5 // pred_check
      %p169 = pneg %p168
    $region18: #{_lambda_.11} parent=5 // pred_check_branch
      %171 = sbr.rel (%p169) target = $region20
    $region19: #{_lambda_.11} parent=5 // pred_region
      // Predicated region
      $region21: #{_lambda_.11} parent=19 // pred_check
        %p172 = pneg %p51
      $region22: #{_lambda_.11} parent=19 // pred_check_branch
        %174 = sbr.rel (%p172) target = $region24
      $region23: #{_lambda_.11} parent=19 // pred_region
        %p175 = scmp.lt.s32.totalorder %s17, 1
        %s176 = scalar_select %p175, %s17, 1
        %p177 = scmp.lt.s32.totalorder %s19, 0
        %s178 = scalar_select %p177, %s19, 0
        %s179 = smul.addr %s176, 20
        %s180 = sadd.s32 %s178, %s179
        %s181 = smul.addr %s180, 4
        %s182 = scalar_lea.vmem %s0, %s181
      $region24: #{_lambda_.11} parent=19 // pred_fallthru
        _
    $region20: #{_lambda_.11} parent=5 // pred_fallthru
      _
    %p183 = scmp.le.s32.totalorder 1, %s10
    %p184 = scmp.lt.s32.totalorder %s10, 3
    %p185 = pnand %p183, %p184
    %p186 = pneg %p185
    // Predicated region
    $region25: #{_lambda_.11} parent=5 // pred_check
      _
    $region26: #{_lambda_.11} parent=5 // pred_check_branch
      %188 = sbr.rel (%p185) target = $region28
    $region27: #{_lambda_.11} parent=5 // pred_region
      %s189 = ssub.s32 %s10, 1
      %p190 = scmp.lt.s32.totalorder %s20, 1
      %s191 = scalar_select %p190, %s20, 1
      %p192 = scmp.lt.s32.totalorder %s22, 0
      %s193 = scalar_select %p192, %s22, 0
      %s194 = smul.addr %s191, 20
      %s195 = sadd.s32 %s193, %s194
      %s196 = smul.addr %s195, 4
      %s197 = scalar_lea.vmem %s0, %s196
      %p198 = pneg %p57
      %p199 = pneg %p54
      %s200 = smul.u32 16, %s22
      %p201 = scmp.lt.s32.totalorder %s200, 15
      %s202 = scalar_select %p201, %s200, 15
      %p203 = scmp.lt.s32.totalorder %s21, 0
      %s204 = scalar_select %p203, %s21, 0
      %s205 = sadd.s32 %s204, %s202
      %s206 = smul.addr %s205, 4
      %s207 = scalar_lea.vmem %s1, %s206
      %p208 = pneg %p85
      %p209 = pneg %p82
      %p210 = pneg %p113
      %p211 = pneg %p110
      %p212 = scmp.lt.s32.totalorder %s20, 1
      %s213 = scalar_select %p212, %s20, 1
      %p214 = scmp.lt.s32.totalorder %s21, 0
      %s215 = scalar_select %p214, %s21, 0
      %s216 = smul.addr %s213, 8
      %s217 = sadd.s32 %s215, %s216
      %s218 = smul.addr %s217, 4
      %s219 = scalar_lea.vmem %s2, %s218
      %p220 = pneg %p141
      %p221 = pneg %p138
      %p222 = scmp.lt.s32.totalorder %s20, 1
      %s223 = scalar_select %p222, %s20, 1
      %p224 = scmp.lt.s32.totalorder %s21, 0
      %s225 = scalar_select %p224, %s21, 0
      %s226 = sadd.s32 %s225, %s223
      %s227 = smul.addr %s226, 2
      %s228 = scalar_lea.vmem %s3, %s227
      %p229 = scmp.lt.s32.totalorder %s20, 1
      %s230 = scalar_select %p229, %s20, 1
      %p231 = scmp.lt.s32.totalorder %s22, 0
      %s232 = scalar_select %p231, %s22, 0
      %s233 = smul.addr %s230, 20
      %s234 = sadd.s32 %s232, %s233
      %s235 = smul.addr %s234, 4
      %s236 = scalar_lea.vmem %s0, %s235
      %s237 = smul.u32 16, %s22
      %p238 = scmp.lt.s32.totalorder %s237, 15
      %s239 = scalar_select %p238, %s237, 15
      %p240 = scmp.lt.s32.totalorder %s21, 0
      %s241 = scalar_select %p240, %s21, 0
      %s242 = sadd.s32 %s241, %s239
      %s243 = smul.addr %s242, 4
      %s244 = scalar_lea.vmem %s1, %s243
      %s245 = smul.u32 16, %s22
      %p246 = scmp.lt.s32.totalorder %s20, 1
      %s247 = scalar_select %p246, %s20, 1
      %p248 = scmp.lt.s32.totalorder %s21, 0
      %s249 = scalar_select %p248, %s21, 0
      %s250 = smul.addr %s247, 8
      %s251 = sadd.s32 %s249, %s250
      %s252 = smul.addr %s251, 4
      %s253 = scalar_lea.vmem %s2, %s252
      %p254 = scmp.lt.s32.totalorder %s20, 1
      %s255 = scalar_select %p254, %s20, 1
      %p256 = scmp.lt.s32.totalorder %s21, 0
      %s257 = scalar_select %p256, %s21, 0
      %s258 = sadd.s32 %s257, %s255
      %s259 = smul.addr %s258, 2
      %s260 = scalar_lea.vmem %s3, %s259
      %p262 = scmp.eq.s32.totalorder %s22, 0
      // Predicated region
      $region29: #{_lambda_.11} parent=27 // pred_check
        %p263 = pneg %p262
      $region30: #{_lambda_.11} parent=27 // pred_check_branch
        %265 = sbr.rel (%p263) target = $region32
      $region31: #{_lambda_.11} parent=27 // pred_region
        %266 = vst [vmem:[#allocation2] sm:$0xff] 0.0
        %267 = vst [vmem:[#allocation2 + $0x8] sm:$0xff] 0.0
        %268 = vst [vmem:[#allocation2 + $0x10] sm:$0xff] 0.0
        %269 = vst [vmem:[#allocation2 + $0x18] sm:$0xff] 0.0
        %270 = vst [vmem:[#allocation2 + $0x20] sm:$0xff] 0.0
        %271 = vst [vmem:[#allocation2 + $0x28] sm:$0xff] 0.0
        %272 = vst [vmem:[#allocation2 + $0x30] sm:$0xff] 0.0
        %273 = vst [vmem:[#allocation2 + $0x38] sm:$0xff] 0.0
      $region32: #{_lambda_.11} parent=27 // pred_fallthru
        _
      %v274 = vld [vmem:[#allocation2] sm:$0xff]
      %v275 = vld [vmem:[#allocation2 + $0x8] sm:$0xff]
      %v276 = vld [vmem:[#allocation2 + $0x10] sm:$0xff]
      %v277 = vld [vmem:[#allocation2 + $0x18] sm:$0xff]
      %v278 = vld [vmem:[#allocation2 + $0x20] sm:$0xff]
      %v279 = vld [vmem:[#allocation2 + $0x28] sm:$0xff]
      %v280 = vld [vmem:[#allocation2 + $0x30] sm:$0xff]
      %v281 = vld [vmem:[#allocation2 + $0x38] sm:$0xff]
      %v282 = vld [vmem:[%s236] sm:$0xf]
      %v283 = vld [vmem:[%s236 + $0x8] sm:$0xf]
      %v284 = vld [vmem:[%s236 + $0x10] sm:$0xf]
      %v285 = vld [vmem:[%s236 + $0x18] sm:$0xf]
      %v286 = vld [vmem:[%s236 + $0x20] sm:$0xf]
      %v287 = vld [vmem:[%s236 + $0x28] sm:$0xf]
      %v288 = vld [vmem:[%s236 + $0x30] sm:$0xf]
      %v289 = vld [vmem:[%s236 + $0x38] sm:$0xf]
      %v290 = vld [vmem:[%s244] sm:$0xf]
      %v291 = vld [vmem:[%s244 + $0x4] sm:$0xf]
      %v292 = vld [vmem:[%s244 + $0x8] sm:$0xf]
      %v293 = vld [vmem:[%s244 + $0xc] sm:$0xf]
      %v294 = vld [vmem:[%s244 + $0x10] sm:$0xf]
      %v295 = vld [vmem:[%s244 + $0x14] sm:$0xf]
      %v296 = vld [vmem:[%s244 + $0x18] sm:$0xf]
      %v297 = vld [vmem:[%s244 + $0x1c] sm:$0xf]
      %v298 = vld [vmem:[%s244 + $0x20] sm:$0xf]
      %v299 = vld [vmem:[%s244 + $0x24] sm:$0xf]
      %v300 = vld [vmem:[%s244 + $0x28] sm:$0xf]
      %v301 = vld [vmem:[%s244 + $0x2c] sm:$0xf]
      %v302 = vld [vmem:[%s244 + $0x30] sm:$0xf]
      %v303 = vld [vmem:[%s244 + $0x34] sm:$0xf]
      %v304 = vld [vmem:[%s244 + $0x38] sm:$0xf]
      %v305 = vld [vmem:[%s244 + $0x3c] sm:$0xf]
      %v314 = vunpack.c.l.b16 %v282
      %v315 = vunpack.c.l.b16 %v283
      %v316 = vunpack.c.l.b16 %v284
      %v317 = vunpack.c.l.b16 %v285
      %v318 = vunpack.c.l.b16 %v286
      %v319 = vunpack.c.l.b16 %v287
      %v320 = vunpack.c.l.b16 %v288
      %v321 = vunpack.c.l.b16 %v289
      %v322 = vpack.c.b16 %v315, %v314
      %v323 = vpack.c.b16 %v317, %v316
      %v324 = vpack.c.b16 %v319, %v318
      %v325 = vpack.c.b16 %v321, %v320
      %v346 = vunpack.c.l.b16 %v290
      %v347 = vunpack.c.l.b16 %v291
      %v348 = vunpack.c.l.b16 %v292
      %v349 = vunpack.c.l.b16 %v293
      %v350 = vunpack.c.l.b16 %v294
      %v351 = vunpack.c.l.b16 %v295
      %v352 = vunpack.c.l.b16 %v296
      %v353 = vunpack.c.l.b16 %v297
      %v354 = vunpack.c.l.b16 %v298
      %v355 = vunpack.c.l.b16 %v299
      %v356 = vunpack.c.l.b16 %v300
      %v357 = vunpack.c.l.b16 %v301
      %v358 = vunpack.c.l.b16 %v302
      %v359 = vunpack.c.l.b16 %v303
      %v360 = vunpack.c.l.b16 %v304
      %v361 = vunpack.c.l.b16 %v305
      %v362 = vpack.c.b16 %v347, %v346
      %v363 = vpack.c.b16 %v349, %v348
      %v364 = vpack.c.b16 %v351, %v350
      %v365 = vpack.c.b16 %v353, %v352
      %v366 = vpack.c.b16 %v355, %v354
      %v367 = vpack.c.b16 %v357, %v356
      %v368 = vpack.c.b16 %v359, %v358
      %v369 = vpack.c.b16 %v361, %v360
      %378 = vmatprep.subr.bf16.mxu0 0
      %379 = vmatpush1.bf16.msra.mxu0 %v362
      %380 = vmatprep.subr.bf16.mxu0 0
      %381 = vmatpush1.bf16.msra.mxu0 %v363
      %382 = vmatprep.subr.bf16.mxu0 0
      %383 = vmatpush1.bf16.msra.mxu0 %v364
      %384 = vmatprep.subr.bf16.mxu0 0
      %385 = vmatpush1.bf16.msra.mxu0 %v365
      %386 = vmatprep.subr.bf16.mxu0 0
      %387 = vmatpush1.bf16.msra.mxu0 %v366
      %388 = vmatprep.subr.bf16.mxu0 0
      %389 = vmatpush1.bf16.msra.mxu0 %v367
      %390 = vmatprep.subr.bf16.mxu0 0
      %391 = vmatpush1.bf16.msra.mxu0 %v368
      %392 = vmatprep.subr.bf16.mxu0 0
      %393 = vmatpush1.bf16.msra.mxu0 %v369
      %394 = vmatprep.subr.bf16.mxu0 0
      %395 = vmatpush1.bf16.msra.mxu0 0
      %396 = vmatprep.subr.bf16.mxu0 0
      %397 = vmatpush1.bf16.msra.mxu0 0
      %398 = vmatprep.subr.bf16.mxu0 0
      %399 = vmatpush1.bf16.msra.mxu0 0
      %400 = vmatprep.subr.bf16.mxu0 0
      %401 = vmatpush1.bf16.msra.mxu0 0
      %402 = vmatprep.subr.bf16.mxu0 0
      %403 = vmatpush1.bf16.msra.mxu0 0
      %404 = vmatprep.subr.bf16.mxu0 0
      %405 = vmatpush1.bf16.msra.mxu0 0
      %406 = vmatprep.subr.bf16.mxu0 0
      %407 = vmatpush1.bf16.msra.mxu0 0
      %408 = vmatprep.subr.bf16.mxu0 0
      %409 = vmatpush1.bf16.msra.mxu0 0
      %410 = vmatprep.mubr.bf16.mxu0 0
      %411 = vmatmul.mubr.bf16.gmra.mrb[0].mxu0 %v322
      %v412 = vpop.f32.mrb[0].mxu0
      %v413 = vadd.f32 0.0, %v412
      %v414 = vpop.f32.mrb[0].mxu0
      %v415 = vpop.f32.mrb[0].mxu0
      %v416 = vadd.f32 0.0, %v415
      %v417 = vpop.f32.mrb[0].mxu0
      %418 = vmatprep.mubr.bf16.mxu0 0
      %419 = vmatmul.mubr.bf16.gmra.mrb[0].mxu0 %v323
      %v420 = vpop.f32.mrb[0].mxu0
      %v421 = vadd.f32 0.0, %v420
      %v422 = vpop.f32.mrb[0].mxu0
      %v423 = vpop.f32.mrb[0].mxu0
      %v424 = vadd.f32 0.0, %v423
      %v425 = vpop.f32.mrb[0].mxu0
      %426 = vmatprep.mubr.bf16.mxu0 0
      %427 = vmatmul.mubr.bf16.gmra.mrb[0].mxu0 %v324
      %v428 = vpop.f32.mrb[0].mxu0
      %v429 = vadd.f32 0.0, %v428
      %v430 = vpop.f32.mrb[0].mxu0
      %v431 = vpop.f32.mrb[0].mxu0
      %v432 = vadd.f32 0.0, %v431
      %v433 = vpop.f32.mrb[0].mxu0
      %434 = vmatprep.mubr.bf16.mxu0 0
      %435 = vmatmul.mubr.bf16.gmra.mrb[0].mxu0 %v325
      %v436 = vpop.f32.mrb[0].mxu0
      %v437 = vadd.f32 0.0, %v436
      %v438 = vpop.f32.mrb[0].mxu0
      %v439 = vpop.f32.mrb[0].mxu0
      %v440 = vadd.f32 0.0, %v439
      %v441 = vpop.f32.mrb[0].mxu0
      %442 = vdwg.mxu0
      %v443 = vadd.f32 %v274, %v413
      %v444 = vadd.f32 %v275, %v416
      %v445 = vadd.f32 %v276, %v421
      %v446 = vadd.f32 %v277, %v424
      %v447 = vadd.f32 %v278, %v429
      %v448 = vadd.f32 %v279, %v432
      %v449 = vadd.f32 %v280, %v437
      %v450 = vadd.f32 %v281, %v440
      %v451 = vld [vmem:[%s236] sm:$0xf]
      %v452 = vld [vmem:[%s236 + $0x4] sm:$0x1]
      %v453 = vld [vmem:[%s236 + $0x8] sm:$0xf]
      %v454 = vld [vmem:[%s236 + $0xc] sm:$0x1]
      %v455 = vld [vmem:[%s236 + $0x10] sm:$0xf]
      %v456 = vld [vmem:[%s236 + $0x14] sm:$0x1]
      %v457 = vld [vmem:[%s236 + $0x18] sm:$0xf]
      %v458 = vld [vmem:[%s236 + $0x1c] sm:$0x1]
      %v459 = vld [vmem:[%s236 + $0x20] sm:$0xf]
      %v460 = vld [vmem:[%s236 + $0x24] sm:$0x1]
      %v461 = vld [vmem:[%s236 + $0x28] sm:$0xf]
      %v462 = vld [vmem:[%s236 + $0x2c] sm:$0x1]
      %v463 = vld [vmem:[%s236 + $0x30] sm:$0xf]
      %v464 = vld [vmem:[%s236 + $0x34] sm:$0x1]
      %v465 = vld [vmem:[%s236 + $0x38] sm:$0xf]
      %v466 = vld [vmem:[%s236 + $0x3c] sm:$0x1]
      %vm467 = vsmask.f32 3328
      %vm468 = vsmask.f32 7440
      %vm469 = vmor %vm467, %vm468
      %v471 = vshrl.u32 %v451, 16
      %v473 = vrot.slane %v471, 4
      %v474 = vshll.u32 %v451, 16
      %v476 = vrot.slane %v474, 5
      %v477 = vor.u32 %v473, %v476
      %v478 = vrot.slane %v477, 4
      %v480 = vshll.u32 %v452, 16
      %v482 = vrot.slane %v480, 5
      %v483 = vsel %vm469, %v478, %v482
      %v485 = vshrl.u32 %v453, 16
      %v487 = vrot.slane %v485, 4
      %v488 = vshll.u32 %v453, 16
      %v490 = vrot.slane %v488, 5
      %v491 = vor.u32 %v487, %v490
      %v492 = vrot.slane %v491, 4
      %v494 = vshll.u32 %v454, 16
      %v496 = vrot.slane %v494, 5
      %v497 = vsel %vm469, %v492, %v496
      %v499 = vshrl.u32 %v455, 16
      %v501 = vrot.slane %v499, 4
      %v502 = vshll.u32 %v455, 16
      %v504 = vrot.slane %v502, 5
      %v505 = vor.u32 %v501, %v504
      %v506 = vrot.slane %v505, 4
      %v508 = vshll.u32 %v456, 16
      %v510 = vrot.slane %v508, 5
      %v511 = vsel %vm469, %v506, %v510
      %v513 = vshrl.u32 %v457, 16
      %v515 = vrot.slane %v513, 4
      %v516 = vshll.u32 %v457, 16
      %v518 = vrot.slane %v516, 5
      %v519 = vor.u32 %v515, %v518
      %v520 = vrot.slane %v519, 4
      %v522 = vshll.u32 %v458, 16
      %v524 = vrot.slane %v522, 5
      %v525 = vsel %vm469, %v520, %v524
      %v527 = vshrl.u32 %v459, 16
      %v529 = vrot.slane %v527, 4
      %v530 = vshll.u32 %v459, 16
      %v532 = vrot.slane %v530, 5
      %v533 = vor.u32 %v529, %v532
      %v534 = vrot.slane %v533, 4
      %v536 = vshll.u32 %v460, 16
      %v538 = vrot.slane %v536, 5
      %v539 = vsel %vm469, %v534, %v538
      %v541 = vshrl.u32 %v461, 16
      %v543 = vrot.slane %v541, 4
      %v544 = vshll.u32 %v461, 16
      %v546 = vrot.slane %v544, 5
      %v547 = vor.u32 %v543, %v546
      %v548 = vrot.slane %v547, 4
      %v550 = vshll.u32 %v462, 16
      %v552 = vrot.slane %v550, 5
      %v553 = vsel %vm469, %v548, %v552
      %v555 = vshrl.u32 %v463, 16
      %v557 = vrot.slane %v555, 4
      %v558 = vshll.u32 %v463, 16
      %v560 = vrot.slane %v558, 5
      %v561 = vor.u32 %v557, %v560
      %v562 = vrot.slane %v561, 4
      %v564 = vshll.u32 %v464, 16
      %v566 = vrot.slane %v564, 5
      %v567 = vsel %vm469, %v562, %v566
      %v569 = vshrl.u32 %v465, 16
      %v571 = vrot.slane %v569, 4
      %v572 = vshll.u32 %v465, 16
      %v574 = vrot.slane %v572, 5
      %v575 = vor.u32 %v571, %v574
      %v576 = vrot.slane %v575, 4
      %v578 = vshll.u32 %v466, 16
      %v580 = vrot.slane %v578, 5
      %v581 = vsel %vm469, %v576, %v580
      %s582 = scalar_lea.vmem %s244, 64
      %v583 = vld [vmem:[%s582] sm:$0xf]
      %v584 = vld [vmem:[%s582 + $0x4] sm:$0xf]
      %v585 = vld [vmem:[%s582 + $0x8] sm:$0xf]
      %v586 = vld [vmem:[%s582 + $0xc] sm:$0xf]
      %v587 = vld [vmem:[%s582 + $0x10] sm:$0xf]
      %v588 = vld [vmem:[%s582 + $0x14] sm:$0xf]
      %v589 = vld [vmem:[%s582 + $0x18] sm:$0xf]
      %v590 = vld [vmem:[%s582 + $0x1c] sm:$0xf]
      %v591 = vld [vmem:[%s582 + $0x20] sm:$0xf]
      %v592 = vld [vmem:[%s582 + $0x24] sm:$0xf]
      %v593 = vld [vmem:[%s582 + $0x28] sm:$0xf]
      %v594 = vld [vmem:[%s582 + $0x2c] sm:$0xf]
      %v595 = vld [vmem:[%s582 + $0x30] sm:$0xf]
      %v596 = vld [vmem:[%s582 + $0x34] sm:$0xf]
      %v597 = vld [vmem:[%s582 + $0x38] sm:$0xf]
      %v598 = vld [vmem:[%s582 + $0x3c] sm:$0xf]
      %v599 = vunpack.c.l.b16 %v483
      %v600 = vunpack.c.l.b16 %v497
      %v601 = vunpack.c.l.b16 %v511
      %v602 = vunpack.c.l.b16 %v525
      %v603 = vunpack.c.l.b16 %v539
      %v604 = vunpack.c.l.b16 %v553
      %v605 = vunpack.c.l.b16 %v567
      %v606 = vunpack.c.l.b16 %v581
      %v607 = vpack.c.b16 %v600, %v599
      %v608 = vpack.c.b16 %v602, %v601
      %v609 = vpack.c.b16 %v604, %v603
      %v610 = vpack.c.b16 %v606, %v605
      %v631 = vunpack.c.l.b16 %v583
      %v632 = vunpack.c.l.b16 %v584
      %v633 = vunpack.c.l.b16 %v585
      %v634 = vunpack.c.l.b16 %v586
      %v635 = vunpack.c.l.b16 %v587
      %v636 = vunpack.c.l.b16 %v588
      %v637 = vunpack.c.l.b16 %v589
      %v638 = vunpack.c.l.b16 %v590
      %v639 = vunpack.c.l.b16 %v591
      %v640 = vunpack.c.l.b16 %v592
      %v641 = vunpack.c.l.b16 %v593
      %v642 = vunpack.c.l.b16 %v594
      %v643 = vunpack.c.l.b16 %v595
      %v644 = vunpack.c.l.b16 %v596
      %v645 = vunpack.c.l.b16 %v597
      %v646 = vunpack.c.l.b16 %v598
      %v647 = vpack.c.b16 %v632, %v631
      %v648 = vpack.c.b16 %v634, %v633
      %v649 = vpack.c.b16 %v636, %v635
      %v650 = vpack.c.b16 %v638, %v637
      %v651 = vpack.c.b16 %v640, %v639
      %v652 = vpack.c.b16 %v642, %v641
      %v653 = vpack.c.b16 %v644, %v643
      %v654 = vpack.c.b16 %v646, %v645
      %663 = vmatprep.subr.bf16.mxu0 0
      %664 = vmatpush1.bf16.msra.mxu0 %v647
      %665 = vmatprep.subr.bf16.mxu0 0
      %666 = vmatpush1.bf16.msra.mxu0 %v648
      %667 = vmatprep.subr.bf16.mxu0 0
      %668 = vmatpush1.bf16.msra.mxu0 %v649
      %669 = vmatprep.subr.bf16.mxu0 0
      %670 = vmatpush1.bf16.msra.mxu0 %v650
      %671 = vmatprep.subr.bf16.mxu0 0
      %672 = vmatpush1.bf16.msra.mxu0 %v651
      %673 = vmatprep.subr.bf16.mxu0 0
      %674 = vmatpush1.bf16.msra.mxu0 %v652
      %675 = vmatprep.subr.bf16.mxu0 0
      %676 = vmatpush1.bf16.msra.mxu0 %v653
      %677 = vmatprep.subr.bf16.mxu0 0
      %678 = vmatpush1.bf16.msra.mxu0 %v654
      %679 = vmatprep.subr.bf16.mxu0 0
      %680 = vmatpush1.bf16.msra.mxu0 0
      %681 = vmatprep.subr.bf16.mxu0 0
      %682 = vmatpush1.bf16.msra.mxu0 0
      %683 = vmatprep.subr.bf16.mxu0 0
      %684 = vmatpush1.bf16.msra.mxu0 0
      %685 = vmatprep.subr.bf16.mxu0 0
      %686 = vmatpush1.bf16.msra.mxu0 0
      %687 = vmatprep.subr.bf16.mxu0 0
      %688 = vmatpush1.bf16.msra.mxu0 0
      %689 = vmatprep.subr.bf16.mxu0 0
      %690 = vmatpush1.bf16.msra.mxu0 0
      %691 = vmatprep.subr.bf16.mxu0 0
      %692 = vmatpush1.bf16.msra.mxu0 0
      %693 = vmatprep.subr.bf16.mxu0 0
      %694 = vmatpush1.bf16.msra.mxu0 0
      %695 = vmatprep.mubr.bf16.mxu0 0
      %696 = vmatmul.mubr.bf16.gmra.mrb[0].mxu0 %v607
      %v697 = vpop.f32.mrb[0].mxu0
      %v698 = vadd.f32 0.0, %v697
      %v699 = vpop.f32.mrb[0].mxu0
      %v700 = vpop.f32.mrb[0].mxu0
      %v701 = vadd.f32 0.0, %v700
      %v702 = vpop.f32.mrb[0].mxu0
      %703 = vmatprep.mubr.bf16.mxu0 0
      %704 = vmatmul.mubr.bf16.gmra.mrb[0].mxu0 %v608
      %v705 = vpop.f32.mrb[0].mxu0
      %v706 = vadd.f32 0.0, %v705
      %v707 = vpop.f32.mrb[0].mxu0
      %v708 = vpop.f32.mrb[0].mxu0
      %v709 = vadd.f32 0.0, %v708
      %v710 = vpop.f32.mrb[0].mxu0
      %711 = vmatprep.mubr.bf16.mxu0 0
      %712 = vmatmul.mubr.bf16.gmra.mrb[0].mxu0 %v609
      %v713 = vpop.f32.mrb[0].mxu0
      %v714 = vadd.f32 0.0, %v713
      %v715 = vpop.f32.mrb[0].mxu0
      %v716 = vpop.f32.mrb[0].mxu0
      %v717 = vadd.f32 0.0, %v716
      %v718 = vpop.f32.mrb[0].mxu0
      %719 = vmatprep.mubr.bf16.mxu0 0
      %720 = vmatmul.mubr.bf16.gmra.mrb[0].mxu0 %v610
      %v721 = vpop.f32.mrb[0].mxu0
      %v722 = vadd.f32 0.0, %v721
      %v723 = vpop.f32.mrb[0].mxu0
      %v724 = vpop.f32.mrb[0].mxu0
      %v725 = vadd.f32 0.0, %v724
      %v726 = vpop.f32.mrb[0].mxu0
      %727 = vdwg.mxu0
      %v728 = vadd.f32 %v443, %v698
      %v729 = vadd.f32 %v444, %v701
      %v730 = vadd.f32 %v445, %v706
      %v731 = vadd.f32 %v446, %v709
      %v732 = vadd.f32 %v447, %v714
      %v733 = vadd.f32 %v448, %v717
      %v734 = vadd.f32 %v449, %v722
      %v735 = vadd.f32 %v450, %v725
      %v736 = vld [vmem:[%s236] sm:$0xe]
      %v737 = vld [vmem:[%s236 + $0x8] sm:$0xe]
      %v738 = vld [vmem:[%s236 + $0x10] sm:$0xe]
      %v739 = vld [vmem:[%s236 + $0x18] sm:$0xe]
      %v740 = vld [vmem:[%s236 + $0x20] sm:$0xe]
      %v741 = vld [vmem:[%s236 + $0x28] sm:$0xe]
      %v742 = vld [vmem:[%s236 + $0x30] sm:$0xe]
      %v743 = vld [vmem:[%s236 + $0x38] sm:$0xe]
      %vm760 = vcmask 1042432
      %vm761 = vcmask 1046532
      %vm762 = vmor %vm760, %vm761
      %v763 = vrot.slane %v736, 5
      %v764 = vrot.slane %v763, 4
      %v765 = vrot.slane %v452, 5
      %v766 = vsel %vm762, %v764, %v765
      %v767 = vrot.slane %v737, 5
      %v768 = vrot.slane %v767, 4
      %v769 = vrot.slane %v454, 5
      %v770 = vsel %vm762, %v768, %v769
      %v771 = vrot.slane %v738, 5
      %v772 = vrot.slane %v771, 4
      %v773 = vrot.slane %v456, 5
      %v774 = vsel %vm762, %v772, %v773
      %v775 = vrot.slane %v739, 5
      %v776 = vrot.slane %v775, 4
      %v777 = vrot.slane %v458, 5
      %v778 = vsel %vm762, %v776, %v777
      %v779 = vrot.slane %v740, 5
      %v780 = vrot.slane %v779, 4
      %v781 = vrot.slane %v460, 5
      %v782 = vsel %vm762, %v780, %v781
      %v783 = vrot.slane %v741, 5
      %v784 = vrot.slane %v783, 4
      %v785 = vrot.slane %v462, 5
      %v786 = vsel %vm762, %v784, %v785
      %v787 = vrot.slane %v742, 5
      %v788 = vrot.slane %v787, 4
      %v789 = vrot.slane %v464, 5
      %v790 = vsel %vm762, %v788, %v789
      %v791 = vrot.slane %v743, 5
      %v792 = vrot.slane %v791, 4
      %v793 = vrot.slane %v466, 5
      %v794 = vsel %vm762, %v792, %v793
      %s795 = scalar_lea.vmem %s244, 128
      %v796 = vld [vmem:[%s795] sm:$0xf]
      %v797 = vld [vmem:[%s795 + $0x4] sm:$0xf]
      %v798 = vld [vmem:[%s795 + $0x8] sm:$0xf]
      %v799 = vld [vmem:[%s795 + $0xc] sm:$0xf]
      %v800 = vld [vmem:[%s795 + $0x10] sm:$0xf]
      %v801 = vld [vmem:[%s795 + $0x14] sm:$0xf]
      %v802 = vld [vmem:[%s795 + $0x18] sm:$0xf]
      %v803 = vld [vmem:[%s795 + $0x1c] sm:$0xf]
      %v804 = vld [vmem:[%s795 + $0x20] sm:$0xf]
      %v805 = vld [vmem:[%s795 + $0x24] sm:$0xf]
      %v806 = vld [vmem:[%s795 + $0x28] sm:$0xf]
      %v807 = vld [vmem:[%s795 + $0x2c] sm:$0xf]
      %v808 = vld [vmem:[%s795 + $0x30] sm:$0xf]
      %v809 = vld [vmem:[%s795 + $0x34] sm:$0xf]
      %v810 = vld [vmem:[%s795 + $0x38] sm:$0xf]
      %v811 = vld [vmem:[%s795 + $0x3c] sm:$0xf]
      %v812 = vunpack.c.l.b16 %v766
      %v813 = vunpack.c.l.b16 %v770
      %v814 = vunpack.c.l.b16 %v774
      %v815 = vunpack.c.l.b16 %v778
      %v816 = vunpack.c.l.b16 %v782
      %v817 = vunpack.c.l.b16 %v786
      %v818 = vunpack.c.l.b16 %v790
      %v819 = vunpack.c.l.b16 %v794
      %v820 = vpack.c.b16 %v813, %v812
      %v821 = vpack.c.b16 %v815, %v814
      %v822 = vpack.c.b16 %v817, %v816
      %v823 = vpack.c.b16 %v819, %v818
      %v844 = vunpack.c.l.b16 %v796
      %v845 = vunpack.c.l.b16 %v797
      %v846 = vunpack.c.l.b16 %v798
      %v847 = vunpack.c.l.b16 %v799
      %v848 = vunpack.c.l.b16 %v800
      %v849 = vunpack.c.l.b16 %v801
      %v850 = vunpack.c.l.b16 %v802
      %v851 = vunpack.c.l.b16 %v803
      %v852 = vunpack.c.l.b16 %v804
      %v853 = vunpack.c.l.b16 %v805
      %v854 = vunpack.c.l.b16 %v806
      %v855 = vunpack.c.l.b16 %v807
      %v856 = vunpack.c.l.b16 %v808
      %v857 = vunpack.c.l.b16 %v809
      %v858 = vunpack.c.l.b16 %v810
      %v859 = vunpack.c.l.b16 %v811
      %v860 = vpack.c.b16 %v845, %v844
      %v861 = vpack.c.b16 %v847, %v846
      %v862 = vpack.c.b16 %v849, %v848
      %v863 = vpack.c.b16 %v851, %v850
      %v864 = vpack.c.b16 %v853, %v852
      %v865 = vpack.c.b16 %v855, %v854
      %v866 = vpack.c.b16 %v857, %v856
      %v867 = vpack.c.b16 %v859, %v858
      %876 = vmatprep.subr.bf16.mxu0 0
      %877 = vmatpush1.bf16.msra.mxu0 %v860
      %878 = vmatprep.subr.bf16.mxu0 0
      %879 = vmatpush1.bf16.msra.mxu0 %v861
      %880 = vmatprep.subr.bf16.mxu0 0
      %881 = vmatpush1.bf16.msra.mxu0 %v862
      %882 = vmatprep.subr.bf16.mxu0 0
      %883 = vmatpush1.bf16.msra.mxu0 %v863
      %884 = vmatprep.subr.bf16.mxu0 0
      %885 = vmatpush1.bf16.msra.mxu0 %v864
      %886 = vmatprep.subr.bf16.mxu0 0
      %887 = vmatpush1.bf16.msra.mxu0 %v865
      %888 = vmatprep.subr.bf16.mxu0 0
      %889 = vmatpush1.bf16.msra.mxu0 %v866
      %890 = vmatprep.subr.bf16.mxu0 0
      %891 = vmatpush1.bf16.msra.mxu0 %v867
      %892 = vmatprep.subr.bf16.mxu0 0
      %893 = vmatpush1.bf16.msra.mxu0 0
      %894 = vmatprep.subr.bf16.mxu0 0
      %895 = vmatpush1.bf16.msra.mxu0 0
      %896 = vmatprep.subr.bf16.mxu0 0
      %897 = vmatpush1.bf16.msra.mxu0 0
      %898 = vmatprep.subr.bf16.mxu0 0
      %899 = vmatpush1.bf16.msra.mxu0 0
      %900 = vmatprep.subr.bf16.mxu0 0
      %901 = vmatpush1.bf16.msra.mxu0 0
      %902 = vmatprep.subr.bf16.mxu0 0
      %903 = vmatpush1.bf16.msra.mxu0 0
      %904 = vmatprep.subr.bf16.mxu0 0
      %905 = vmatpush1.bf16.msra.mxu0 0
      %906 = vmatprep.subr.bf16.mxu0 0
      %907 = vmatpush1.bf16.msra.mxu0 0
      %908 = vmatprep.mubr.bf16.mxu0 0
      %909 = vmatmul.mubr.bf16.gmra.mrb[0].mxu0 %v820
      %v910 = vpop.f32.mrb[0].mxu0
      %v911 = vadd.f32 0.0, %v910
      %v912 = vpop.f32.mrb[0].mxu0
      %v913 = vpop.f32.mrb[0].mxu0
      %v914 = vadd.f32 0.0, %v913
      %v915 = vpop.f32.mrb[0].mxu0
      %916 = vmatprep.mubr.bf16.mxu0 0
      %917 = vmatmul.mubr.bf16.gmra.mrb[0].mxu0 %v821
      %v918 = vpop.f32.mrb[0].mxu0
      %v919 = vadd.f32 0.0, %v918
      %v920 = vpop.f32.mrb[0].mxu0
      %v921 = vpop.f32.mrb[0].mxu0
      %v922 = vadd.f32 0.0, %v921
      %v923 = vpop.f32.mrb[0].mxu0
      %924 = vmatprep.mubr.bf16.mxu0 0
      %925 = vmatmul.mubr.bf16.gmra.mrb[0].mxu0 %v822
      %v926 = vpop.f32.mrb[0].mxu0
      %v927 = vadd.f32 0.0, %v926
      %v928 = vpop.f32.mrb[0].mxu0
      %v929 = vpop.f32.mrb[0].mxu0
      %v930 = vadd.f32 0.0, %v929
      %v931 = vpop.f32.mrb[0].mxu0
      %932 = vmatprep.mubr.bf16.mxu0 0
      %933 = vmatmul.mubr.bf16.gmra.mrb[0].mxu0 %v823
      %v934 = vpop.f32.mrb[0].mxu0
      %v935 = vadd.f32 0.0, %v934
      %v936 = vpop.f32.mrb[0].mxu0
      %v937 = vpop.f32.mrb[0].mxu0
      %v938 = vadd.f32 0.0, %v937
      %v939 = vpop.f32.mrb[0].mxu0
      %940 = vdwg.mxu0
      %v941 = vadd.f32 %v728, %v911
      %v942 = vadd.f32 %v729, %v914
      %v943 = vadd.f32 %v730, %v919
      %v944 = vadd.f32 %v731, %v922
      %v945 = vadd.f32 %v732, %v927
      %v946 = vadd.f32 %v733, %v930
      %v947 = vadd.f32 %v734, %v935
      %v948 = vadd.f32 %v735, %v938
      %s949 = scalar_lea.vmem %s236, 8
      %v950 = vld [vmem:[%s949] sm:$0xf]
      %v951 = vld [vmem:[%s949 + $0x8] sm:$0xf]
      %v952 = vld [vmem:[%s949 + $0x10] sm:$0xf]
      %v953 = vld [vmem:[%s949 + $0x18] sm:$0xf]
      %v954 = vld [vmem:[%s949 + $0x20] sm:$0xf]
      %v955 = vld [vmem:[%s949 + $0x28] sm:$0xf]
      %v956 = vld [vmem:[%s949 + $0x30] sm:$0xf]
      %v957 = vld [vmem:[%s949 + $0x38] sm:$0xf]
      %s958 = scalar_lea.vmem %s244, 192
      %v959 = vld [vmem:[%s958] sm:$0xf]
      %v960 = vld [vmem:[%s958 + $0x4] sm:$0xf]
      %v961 = vld [vmem:[%s958 + $0x8] sm:$0xf]
      %v962 = vld [vmem:[%s958 + $0xc] sm:$0xf]
      %v963 = vld [vmem:[%s958 + $0x10] sm:$0xf]
      %v964 = vld [vmem:[%s958 + $0x14] sm:$0xf]
      %v965 = vld [vmem:[%s958 + $0x18] sm:$0xf]
      %v966 = vld [vmem:[%s958 + $0x1c] sm:$0xf]
      %v967 = vld [vmem:[%s958 + $0x20] sm:$0xf]
      %v968 = vld [vmem:[%s958 + $0x24] sm:$0xf]
      %v969 = vld [vmem:[%s958 + $0x28] sm:$0xf]
      %v970 = vld [vmem:[%s958 + $0x2c] sm:$0xf]
      %v971 = vld [vmem:[%s958 + $0x30] sm:$0xf]
      %v972 = vld [vmem:[%s958 + $0x34] sm:$0xf]
      %v973 = vld [vmem:[%s958 + $0x38] sm:$0xf]
      %v974 = vld [vmem:[%s958 + $0x3c] sm:$0xf]
      %v983 = vunpack.c.l.b16 %v950
      %v984 = vunpack.c.l.b16 %v951
      %v985 = vunpack.c.l.b16 %v952
      %v986 = vunpack.c.l.b16 %v953
      %v987 = vunpack.c.l.b16 %v954
      %v988 = vunpack.c.l.b16 %v955
      %v989 = vunpack.c.l.b16 %v956
      %v990 = vunpack.c.l.b16 %v957
      %v991 = vpack.c.b16 %v984, %v983
      %v992 = vpack.c.b16 %v986, %v985
      %v993 = vpack.c.b16 %v988, %v987
      %v994 = vpack.c.b16 %v990, %v989
      %v1015 = vunpack.c.l.b16 %v959
      %v1016 = vunpack.c.l.b16 %v960
      %v1017 = vunpack.c.l.b16 %v961
      %v1018 = vunpack.c.l.b16 %v962
      %v1019 = vunpack.c.l.b16 %v963
      %v1020 = vunpack.c.l.b16 %v964
      %v1021 = vunpack.c.l.b16 %v965
      %v1022 = vunpack.c.l.b16 %v966
      %v1023 = vunpack.c.l.b16 %v967
      %v1024 = vunpack.c.l.b16 %v968
      %v1025 = vunpack.c.l.b16 %v969
      %v1026 = vunpack.c.l.b16 %v970
      %v1027 = vunpack.c.l.b16 %v971
      %v1028 = vunpack.c.l.b16 %v972
      %v1029 = vunpack.c.l.b16 %v973
      %v1030 = vunpack.c.l.b16 %v974
      %v1031 = vpack.c.b16 %v1016, %v1015
      %v1032 = vpack.c.b16 %v1018, %v1017
      %v1033 = vpack.c.b16 %v1020, %v1019
      %v1034 = vpack.c.b16 %v1022, %v1021
      %v1035 = vpack.c.b16 %v1024, %v1023
      %v1036 = vpack.c.b16 %v1026, %v1025
      %v1037 = vpack.c.b16 %v1028, %v1027
      %v1038 = vpack.c.b16 %v1030, %v1029
      %1047 = vmatprep.subr.bf16.mxu0 0
      %1048 = vmatpush1.bf16.msra.mxu0 %v1031
      %1049 = vmatprep.subr.bf16.mxu0 0
      %1050 = vmatpush1.bf16.msra.mxu0 %v1032
      %1051 = vmatprep.subr.bf16.mxu0 0
      %1052 = vmatpush1.bf16.msra.mxu0 %v1033
      %1053 = vmatprep.subr.bf16.mxu0 0
      %1054 = vmatpush1.bf16.msra.mxu0 %v1034
      %1055 = vmatprep.subr.bf16.mxu0 0
      %1056 = vmatpush1.bf16.msra.mxu0 %v1035
      %1057 = vmatprep.subr.bf16.mxu0 0
      %1058 = vmatpush1.bf16.msra.mxu0 %v1036
      %1059 = vmatprep.subr.bf16.mxu0 0
      %1060 = vmatpush1.bf16.msra.mxu0 %v1037
      %1061 = vmatprep.subr.bf16.mxu0 0
      %1062 = vmatpush1.bf16.msra.mxu0 %v1038
      %1063 = vmatprep.subr.bf16.mxu0 0
      %1064 = vmatpush1.bf16.msra.mxu0 0
      %1065 = vmatprep.subr.bf16.mxu0 0
      %1066 = vmatpush1.bf16.msra.mxu0 0
      %1067 = vmatprep.subr.bf16.mxu0 0
      %1068 = vmatpush1.bf16.msra.mxu0 0
      %1069 = vmatprep.subr.bf16.mxu0 0
      %1070 = vmatpush1.bf16.msra.mxu0 0
      %1071 = vmatprep.subr.bf16.mxu0 0
      %1072 = vmatpush1.bf16.msra.mxu0 0
      %1073 = vmatprep.subr.bf16.mxu0 0
      %1074 = vmatpush1.bf16.msra.mxu0 0
      %1075 = vmatprep.subr.bf16.mxu0 0
      %1076 = vmatpush1.bf16.msra.mxu0 0
      %1077 = vmatprep.subr.bf16.mxu0 0
      %1078 = vmatpush1.bf16.msra.mxu0 0
      %1079 = vmatprep.mubr.bf16.mxu0 0
      %1080 = vmatmul.mubr.bf16.gmra.mrb[0].mxu0 %v991
      %v1081 = vpop.f32.mrb[0].mxu0
      %v1082 = vadd.f32 0.0, %v1081
      %v1083 = vpop.f32.mrb[0].mxu0
      %v1084 = vpop.f32.mrb[0].mxu0
      %v1085 = vadd.f32 0.0, %v1084
      %v1086 = vpop.f32.mrb[0].mxu0
      %1087 = vmatprep.mubr.bf16.mxu0 0
      %1088 = vmatmul.mubr.bf16.gmra.mrb[0].mxu0 %v992
      %v1089 = vpop.f32.mrb[0].mxu0
      %v1090 = vadd.f32 0.0, %v1089
      %v1091 = vpop.f32.mrb[0].mxu0
      %v1092 = vpop.f32.mrb[0].mxu0
      %v1093 = vadd.f32 0.0, %v1092
      %v1094 = vpop.f32.mrb[0].mxu0
      %1095 = vmatprep.mubr.bf16.mxu0 0
      %1096 = vmatmul.mubr.bf16.gmra.mrb[0].mxu0 %v993
      %v1097 = vpop.f32.mrb[0].mxu0
      %v1098 = vadd.f32 0.0, %v1097
      %v1099 = vpop.f32.mrb[0].mxu0
      %v1100 = vpop.f32.mrb[0].mxu0
      %v1101 = vadd.f32 0.0, %v1100
      %v1102 = vpop.f32.mrb[0].mxu0
      %1103 = vmatprep.mubr.bf16.mxu0 0
      %1104 = vmatmul.mubr.bf16.gmra.mrb[0].mxu0 %v994
      %v1105 = vpop.f32.mrb[0].mxu0
      %v1106 = vadd.f32 0.0, %v1105
      %v1107 = vpop.f32.mrb[0].mxu0
      %v1108 = vpop.f32.mrb[0].mxu0
      %v1109 = vadd.f32 0.0, %v1108
      %v1110 = vpop.f32.mrb[0].mxu0
      %1111 = vdwg.mxu0
      %v1112 = vadd.f32 %v941, %v1082
      %v1113 = vadd.f32 %v942, %v1085
      %v1114 = vadd.f32 %v943, %v1090
      %v1115 = vadd.f32 %v944, %v1093
      %v1116 = vadd.f32 %v945, %v1098
      %v1117 = vadd.f32 %v946, %v1101
      %v1118 = vadd.f32 %v947, %v1106
      %v1119 = vadd.f32 %v948, %v1109
      %v1120 = vld [vmem:[%s949] sm:$0xf]
      %v1121 = vld [vmem:[%s949 + $0x4] sm:$0x1]
      %v1122 = vld [vmem:[%s949 + $0x8] sm:$0xf]
      %v1123 = vld [vmem:[%s949 + $0xc] sm:$0x1]
      %v1124 = vld [vmem:[%s949 + $0x10] sm:$0xf]
      %v1125 = vld [vmem:[%s949 + $0x14] sm:$0x1]
      %v1126 = vld [vmem:[%s949 + $0x18] sm:$0xf]
      %v1127 = vld [vmem:[%s949 + $0x1c] sm:$0x1]
      %v1128 = vld [vmem:[%s949 + $0x20] sm:$0xf]
      %v1129 = vld [vmem:[%s949 + $0x24] sm:$0x1]
      %v1130 = vld [vmem:[%s949 + $0x28] sm:$0xf]
      %v1131 = vld [vmem:[%s949 + $0x2c] sm:$0x1]
      %v1132 = vld [vmem:[%s949 + $0x30] sm:$0xf]
      %v1133 = vld [vmem:[%s949 + $0x34] sm:$0x1]
      %v1134 = vld [vmem:[%s949 + $0x38] sm:$0xf]
      %v1135 = vld [vmem:[%s949 + $0x3c] sm:$0x1]
      %v1137 = vshrl.u32 %v1120, 16
      %v1139 = vrot.slane %v1137, 4
      %v1140 = vshll.u32 %v1120, 16
      %v1142 = vrot.slane %v1140, 5
      %v1143 = vor.u32 %v1139, %v1142
      %v1144 = vrot.slane %v1143, 4
      %v1146 = vshll.u32 %v1121, 16
      %v1148 = vrot.slane %v1146, 5
      %v1149 = vsel %vm469, %v1144, %v1148
      %v1151 = vshrl.u32 %v1122, 16
      %v1153 = vrot.slane %v1151, 4
      %v1154 = vshll.u32 %v1122, 16
      %v1156 = vrot.slane %v1154, 5
      %v1157 = vor.u32 %v1153, %v1156
      %v1158 = vrot.slane %v1157, 4
      %v1160 = vshll.u32 %v1123, 16
      %v1162 = vrot.slane %v1160, 5
      %v1163 = vsel %vm469, %v1158, %v1162
      %v1165 = vshrl.u32 %v1124, 16
      %v1167 = vrot.slane %v1165, 4
      %v1168 = vshll.u32 %v1124, 16
      %v1170 = vrot.slane %v1168, 5
      %v1171 = vor.u32 %v1167, %v1170
      %v1172 = vrot.slane %v1171, 4
      %v1174 = vshll.u32 %v1125, 16
      %v1176 = vrot.slane %v1174, 5
      %v1177 = vsel %vm469, %v1172, %v1176
      %v1179 = vshrl.u32 %v1126, 16
      %v1181 = vrot.slane %v1179, 4
      %v1182 = vshll.u32 %v1126, 16
      %v1184 = vrot.slane %v1182, 5
      %v1185 = vor.u32 %v1181, %v1184
      %v1186 = vrot.slane %v1185, 4
      %v1188 = vshll.u32 %v1127, 16
      %v1190 = vrot.slane %v1188, 5
      %v1191 = vsel %vm469, %v1186, %v1190
      %v1193 = vshrl.u32 %v1128, 16
      %v1195 = vrot.slane %v1193, 4
      %v1196 = vshll.u32 %v1128, 16
      %v1198 = vrot.slane %v1196, 5
      %v1199 = vor.u32 %v1195, %v1198
      %v1200 = vrot.slane %v1199, 4
      %v1202 = vshll.u32 %v1129, 16
      %v1204 = vrot.slane %v1202, 5
      %v1205 = vsel %vm469, %v1200, %v1204
      %v1207 = vshrl.u32 %v1130, 16
      %v1209 = vrot.slane %v1207, 4
      %v1210 = vshll.u32 %v1130, 16
      %v1212 = vrot.slane %v1210, 5
      %v1213 = vor.u32 %v1209, %v1212
      %v1214 = vrot.slane %v1213, 4
      %v1216 = vshll.u32 %v1131, 16
      %v1218 = vrot.slane %v1216, 5
      %v1219 = vsel %vm469, %v1214, %v1218
      %v1221 = vshrl.u32 %v1132, 16
      %v1223 = vrot.slane %v1221, 4
      %v1224 = vshll.u32 %v1132, 16
      %v1226 = vrot.slane %v1224, 5
      %v1227 = vor.u32 %v1223, %v1226
      %v1228 = vrot.slane %v1227, 4
      %v1230 = vshll.u32 %v1133, 16
      %v1232 = vrot.slane %v1230, 5
      %v1233 = vsel %vm469, %v1228, %v1232
      %v1235 = vshrl.u32 %v1134, 16
      %v1237 = vrot.slane %v1235, 4
      %v1238 = vshll.u32 %v1134, 16
      %v1240 = vrot.slane %v1238, 5
      %v1241 = vor.u32 %v1237, %v1240
      %v1242 = vrot.slane %v1241, 4
      %v1244 = vshll.u32 %v1135, 16
      %v1246 = vrot.slane %v1244, 5
      %v1247 = vsel %vm469, %v1242, %v1246
      %s1248 = scalar_lea.vmem %s244, 256
      %v1249 = vld [vmem:[%s1248] sm:$0xf]
      %v1250 = vld [vmem:[%s1248 + $0x4] sm:$0xf]
      %v1251 = vld [vmem:[%s1248 + $0x8] sm:$0xf]
      %v1252 = vld [vmem:[%s1248 + $0xc] sm:$0xf]
      %v1253 = vld [vmem:[%s1248 + $0x10] sm:$0xf]
      %v1254 = vld [vmem:[%s1248 + $0x14] sm:$0xf]
      %v1255 = vld [vmem:[%s1248 + $0x18] sm:$0xf]
      %v1256 = vld [vmem:[%s1248 + $0x1c] sm:$0xf]
      %v1257 = vld [vmem:[%s1248 + $0x20] sm:$0xf]
      %v1258 = vld [vmem:[%s1248 + $0x24] sm:$0xf]
      %v1259 = vld [vmem:[%s1248 + $0x28] sm:$0xf]
      %v1260 = vld [vmem:[%s1248 + $0x2c] sm:$0xf]
      %v1261 = vld [vmem:[%s1248 + $0x30] sm:$0xf]
      %v1262 = vld [vmem:[%s1248 + $0x34] sm:$0xf]
      %v1263 = vld [vmem:[%s1248 + $0x38] sm:$0xf]
      %v1264 = vld [vmem:[%s1248 + $0x3c] sm:$0xf]
      %v1265 = vunpack.c.l.b16 %v1149
      %v1266 = vunpack.c.l.b16 %v1163
      %v1267 = vunpack.c.l.b16 %v1177
      %v1268 = vunpack.c.l.b16 %v1191
      %v1269 = vunpack.c.l.b16 %v1205
      %v1270 = vunpack.c.l.b16 %v1219
      %v1271 = vunpack.c.l.b16 %v1233
      %v1272 = vunpack.c.l.b16 %v1247
      %v1273 = vpack.c.b16 %v1266, %v1265
      %v1274 = vpack.c.b16 %v1268, %v1267
      %v1275 = vpack.c.b16 %v1270, %v1269
      %v1276 = vpack.c.b16 %v1272, %v1271
      %v1297 = vunpack.c.l.b16 %v1249
      %v1298 = vunpack.c.l.b16 %v1250
      %v1299 = vunpack.c.l.b16 %v1251
      %v1300 = vunpack.c.l.b16 %v1252
      %v1301 = vunpack.c.l.b16 %v1253
      %v1302 = vunpack.c.l.b16 %v1254
      %v1303 = vunpack.c.l.b16 %v1255
      %v1304 = vunpack.c.l.b16 %v1256
      %v1305 = vunpack.c.l.b16 %v1257
      %v1306 = vunpack.c.l.b16 %v1258
      %v1307 = vunpack.c.l.b16 %v1259
      %v1308 = vunpack.c.l.b16 %v1260
      %v1309 = vunpack.c.l.b16 %v1261
      %v1310 = vunpack.c.l.b16 %v1262
      %v1311 = vunpack.c.l.b16 %v1263
      %v1312 = vunpack.c.l.b16 %v1264
      %v1313 = vpack.c.b16 %v1298, %v1297
      %v1314 = vpack.c.b16 %v1300, %v1299
      %v1315 = vpack.c.b16 %v1302, %v1301
      %v1316 = vpack.c.b16 %v1304, %v1303
      %v1317 = vpack.c.b16 %v1306, %v1305
      %v1318 = vpack.c.b16 %v1308, %v1307
      %v1319 = vpack.c.b16 %v1310, %v1309
      %v1320 = vpack.c.b16 %v1312, %v1311
      %1329 = vmatprep.subr.bf16.mxu0 0
      %1330 = vmatpush1.bf16.msra.mxu0 %v1313
      %1331 = vmatprep.subr.bf16.mxu0 0
      %1332 = vmatpush1.bf16.msra.mxu0 %v1314
      %1333 = vmatprep.subr.bf16.mxu0 0
      %1334 = vmatpush1.bf16.msra.mxu0 %v1315
      %1335 = vmatprep.subr.bf16.mxu0 0
      %1336 = vmatpush1.bf16.msra.mxu0 %v1316
      %1337 = vmatprep.subr.bf16.mxu0 0
      %1338 = vmatpush1.bf16.msra.mxu0 %v1317
      %1339 = vmatprep.subr.bf16.mxu0 0
      %1340 = vmatpush1.bf16.msra.mxu0 %v1318
      %1341 = vmatprep.subr.bf16.mxu0 0
      %1342 = vmatpush1.bf16.msra.mxu0 %v1319
      %1343 = vmatprep.subr.bf16.mxu0 0
      %1344 = vmatpush1.bf16.msra.mxu0 %v1320
      %1345 = vmatprep.subr.bf16.mxu0 0
      %1346 = vmatpush1.bf16.msra.mxu0 0
      %1347 = vmatprep.subr.bf16.mxu0 0
      %1348 = vmatpush1.bf16.msra.mxu0 0
      %1349 = vmatprep.subr.bf16.mxu0 0
      %1350 = vmatpush1.bf16.msra.mxu0 0
      %1351 = vmatprep.subr.bf16.mxu0 0
      %1352 = vmatpush1.bf16.msra.mxu0 0
      %1353 = vmatprep.subr.bf16.mxu0 0
      %1354 = vmatpush1.bf16.msra.mxu0 0
      %1355 = vmatprep.subr.bf16.mxu0 0
      %1356 = vmatpush1.bf16.msra.mxu0 0
      %1357 = vmatprep.subr.bf16.mxu0 0
      %1358 = vmatpush1.bf16.msra.mxu0 0
      %1359 = vmatprep.subr.bf16.mxu0 0
      %1360 = vmatpush1.bf16.msra.mxu0 0
      %1361 = vmatprep.mubr.bf16.mxu0 0
      %1362 = vmatmul.mubr.bf16.gmra.mrb[0].mxu0 %v1273
      %v1363 = vpop.f32.mrb[0].mxu0
      %v1364 = vadd.f32 0.0, %v1363
      %v1365 = vpop.f32.mrb[0].mxu0
      %v1366 = vpop.f32.mrb[0].mxu0
      %v1367 = vadd.f32 0.0, %v1366
      %v1368 = vpop.f32.mrb[0].mxu0
      %1369 = vmatprep.mubr.bf16.mxu0 0
      %1370 = vmatmul.mubr.bf16.gmra.mrb[0].mxu0 %v1274
      %v1371 = vpop.f32.mrb[0].mxu0
      %v1372 = vadd.f32 0.0, %v1371
      %v1373 = vpop.f32.mrb[0].mxu0
      %v1374 = vpop.f32.mrb[0].mxu0
      %v1375 = vadd.f32 0.0, %v1374
      %v1376 = vpop.f32.mrb[0].mxu0
      %1377 = vmatprep.mubr.bf16.mxu0 0
      %1378 = vmatmul.mubr.bf16.gmra.mrb[0].mxu0 %v1275
      %v1379 = vpop.f32.mrb[0].mxu0
      %v1380 = vadd.f32 0.0, %v1379
      %v1381 = vpop.f32.mrb[0].mxu0
      %v1382 = vpop.f32.mrb[0].mxu0
      %v1383 = vadd.f32 0.0, %v1382
      %v1384 = vpop.f32.mrb[0].mxu0
      %1385 = vmatprep.mubr.bf16.mxu0 0
      %1386 = vmatmul.mubr.bf16.gmra.mrb[0].mxu0 %v1276
      %v1387 = vpop.f32.mrb[0].mxu0
      %v1388 = vadd.f32 0.0, %v1387
      %v1389 = vpop.f32.mrb[0].mxu0
      %v1390 = vpop.f32.mrb[0].mxu0
      %v1391 = vadd.f32 0.0, %v1390
      %v1392 = vpop.f32.mrb[0].mxu0
      %1393 = vdwg.mxu0
      %v1394 = vadd.f32 %v1112, %v1364
      %v1395 = vadd.f32 %v1113, %v1367
      %v1396 = vadd.f32 %v1114, %v1372
      %v1397 = vadd.f32 %v1115, %v1375
      %v1398 = vadd.f32 %v1116, %v1380
      %v1399 = vadd.f32 %v1117, %v1383
      %v1400 = vadd.f32 %v1118, %v1388
      %v1401 = vadd.f32 %v1119, %v1391
      %v1402 = vld [vmem:[%s949] sm:$0xe]
      %v1403 = vld [vmem:[%s949 + $0x8] sm:$0xe]
      %v1404 = vld [vmem:[%s949 + $0x10] sm:$0xe]
      %v1405 = vld [vmem:[%s949 + $0x18] sm:$0xe]
      %v1406 = vld [vmem:[%s949 + $0x20] sm:$0xe]
      %v1407 = vld [vmem:[%s949 + $0x28] sm:$0xe]
      %v1408 = vld [vmem:[%s949 + $0x30] sm:$0xe]
      %v1409 = vld [vmem:[%s949 + $0x38] sm:$0xe]
      %v1426 = vrot.slane %v1402, 5
      %v1427 = vrot.slane %v1426, 4
      %v1428 = vrot.slane %v1121, 5
      %v1429 = vsel %vm762, %v1427, %v1428
      %v1430 = vrot.slane %v1403, 5
      %v1431 = vrot.slane %v1430, 4
      %v1432 = vrot.slane %v1123, 5
      %v1433 = vsel %vm762, %v1431, %v1432
      %v1434 = vrot.slane %v1404, 5
      %v1435 = vrot.slane %v1434, 4
      %v1436 = vrot.slane %v1125, 5
      %v1437 = vsel %vm762, %v1435, %v1436
      %v1438 = vrot.slane %v1405, 5
      %v1439 = vrot.slane %v1438, 4
      %v1440 = vrot.slane %v1127, 5
      %v1441 = vsel %vm762, %v1439, %v1440
      %v1442 = vrot.slane %v1406, 5
      %v1443 = vrot.slane %v1442, 4
      %v1444 = vrot.slane %v1129, 5
      %v1445 = vsel %vm762, %v1443, %v1444
      %v1446 = vrot.slane %v1407, 5
      %v1447 = vrot.slane %v1446, 4
      %v1448 = vrot.slane %v1131, 5
      %v1449 = vsel %vm762, %v1447, %v1448
      %v1450 = vrot.slane %v1408, 5
      %v1451 = vrot.slane %v1450, 4
      %v1452 = vrot.slane %v1133, 5
      %v1453 = vsel %vm762, %v1451, %v1452
      %v1454 = vrot.slane %v1409, 5
      %v1455 = vrot.slane %v1454, 4
      %v1456 = vrot.slane %v1135, 5
      %v1457 = vsel %vm762, %v1455, %v1456
      %s1458 = scalar_lea.vmem %s244, 320
      %v1459 = vld [vmem:[%s1458] sm:$0xf]
      %v1460 = vld [vmem:[%s1458 + $0x4] sm:$0xf]
      %v1461 = vld [vmem:[%s1458 + $0x8] sm:$0xf]
      %v1462 = vld [vmem:[%s1458 + $0xc] sm:$0xf]
      %v1463 = vld [vmem:[%s1458 + $0x10] sm:$0xf]
      %v1464 = vld [vmem:[%s1458 + $0x14] sm:$0xf]
      %v1465 = vld [vmem:[%s1458 + $0x18] sm:$0xf]
      %v1466 = vld [vmem:[%s1458 + $0x1c] sm:$0xf]
      %v1467 = vld [vmem:[%s1458 + $0x20] sm:$0xf]
      %v1468 = vld [vmem:[%s1458 + $0x24] sm:$0xf]
      %v1469 = vld [vmem:[%s1458 + $0x28] sm:$0xf]
      %v1470 = vld [vmem:[%s1458 + $0x2c] sm:$0xf]
      %v1471 = vld [vmem:[%s1458 + $0x30] sm:$0xf]
      %v1472 = vld [vmem:[%s1458 + $0x34] sm:$0xf]
      %v1473 = vld [vmem:[%s1458 + $0x38] sm:$0xf]
      %v1474 = vld [vmem:[%s1458 + $0x3c] sm:$0xf]
      %v1475 = vunpack.c.l.b16 %v1429
      %v1476 = vunpack.c.l.b16 %v1433
      %v1477 = vunpack.c.l.b16 %v1437
      %v1478 = vunpack.c.l.b16 %v1441
      %v1479 = vunpack.c.l.b16 %v1445
      %v1480 = vunpack.c.l.b16 %v1449
      %v1481 = vunpack.c.l.b16 %v1453
      %v1482 = vunpack.c.l.b16 %v1457
      %v1483 = vpack.c.b16 %v1476, %v1475
      %v1484 = vpack.c.b16 %v1478, %v1477
      %v1485 = vpack.c.b16 %v1480, %v1479
      %v1486 = vpack.c.b16 %v1482, %v1481
      %v1507 = vunpack.c.l.b16 %v1459
      %v1508 = vunpack.c.l.b16 %v1460
      %v1509 = vunpack.c.l.b16 %v1461
      %v1510 = vunpack.c.l.b16 %v1462
      %v1511 = vunpack.c.l.b16 %v1463
      %v1512 = vunpack.c.l.b16 %v1464
      %v1513 = vunpack.c.l.b16 %v1465
      %v1514 = vunpack.c.l.b16 %v1466
      %v1515 = vunpack.c.l.b16 %v1467
      %v1516 = vunpack.c.l.b16 %v1468
      %v1517 = vunpack.c.l.b16 %v1469
      %v1518 = vunpack.c.l.b16 %v1470
      %v1519 = vunpack.c.l.b16 %v1471
      %v1520 = vunpack.c.l.b16 %v1472
      %v1521 = vunpack.c.l.b16 %v1473
      %v1522 = vunpack.c.l.b16 %v1474
      %v1523 = vpack.c.b16 %v1508, %v1507
      %v1524 = vpack.c.b16 %v1510, %v1509
      %v1525 = vpack.c.b16 %v1512, %v1511
      %v1526 = vpack.c.b16 %v1514, %v1513
      %v1527 = vpack.c.b16 %v1516, %v1515
      %v1528 = vpack.c.b16 %v1518, %v1517
      %v1529 = vpack.c.b16 %v1520, %v1519
      %v1530 = vpack.c.b16 %v1522, %v1521
      %1539 = vmatprep.subr.bf16.mxu0 0
      %1540 = vmatpush1.bf16.msra.mxu0 %v1523
      %1541 = vmatprep.subr.bf16.mxu0 0
      %1542 = vmatpush1.bf16.msra.mxu0 %v1524
      %1543 = vmatprep.subr.bf16.mxu0 0
      %1544 = vmatpush1.bf16.msra.mxu0 %v1525
      %1545 = vmatprep.subr.bf16.mxu0 0
      %1546 = vmatpush1.bf16.msra.mxu0 %v1526
      %1547 = vmatprep.subr.bf16.mxu0 0
      %1548 = vmatpush1.bf16.msra.mxu0 %v1527
      %1549 = vmatprep.subr.bf16.mxu0 0
      %1550 = vmatpush1.bf16.msra.mxu0 %v1528
      %1551 = vmatprep.subr.bf16.mxu0 0
      %1552 = vmatpush1.bf16.msra.mxu0 %v1529
      %1553 = vmatprep.subr.bf16.mxu0 0
      %1554 = vmatpush1.bf16.msra.mxu0 %v1530
      %1555 = vmatprep.subr.bf16.mxu0 0
      %1556 = vmatpush1.bf16.msra.mxu0 0
      %1557 = vmatprep.subr.bf16.mxu0 0
      %1558 = vmatpush1.bf16.msra.mxu0 0
      %1559 = vmatprep.subr.bf16.mxu0 0
      %1560 = vmatpush1.bf16.msra.mxu0 0
      %1561 = vmatprep.subr.bf16.mxu0 0
      %1562 = vmatpush1.bf16.msra.mxu0 0
      %1563 = vmatprep.subr.bf16.mxu0 0
      %1564 = vmatpush1.bf16.msra.mxu0 0
      %1565 = vmatprep.subr.bf16.mxu0 0
      %1566 = vmatpush1.bf16.msra.mxu0 0
      %1567 = vmatprep.subr.bf16.mxu0 0
      %1568 = vmatpush1.bf16.msra.mxu0 0
      %1569 = vmatprep.subr.bf16.mxu0 0
      %1570 = vmatpush1.bf16.msra.mxu0 0
      %1571 = vmatprep.mubr.bf16.mxu0 0
      %1572 = vmatmul.mubr.bf16.gmra.mrb[0].mxu0 %v1483
      %v1573 = vpop.f32.mrb[0].mxu0
      %v1574 = vadd.f32 0.0, %v1573
      %v1575 = vpop.f32.mrb[0].mxu0
      %v1576 = vpop.f32.mrb[0].mxu0
      %v1577 = vadd.f32 0.0, %v1576
      %v1578 = vpop.f32.mrb[0].mxu0
      %1579 = vmatprep.mubr.bf16.mxu0 0
      %1580 = vmatmul.mubr.bf16.gmra.mrb[0].mxu0 %v1484
      %v1581 = vpop.f32.mrb[0].mxu0
      %v1582 = vadd.f32 0.0, %v1581
      %v1583 = vpop.f32.mrb[0].mxu0
      %v1584 = vpop.f32.mrb[0].mxu0
      %v1585 = vadd.f32 0.0, %v1584
      %v1586 = vpop.f32.mrb[0].mxu0
      %1587 = vmatprep.mubr.bf16.mxu0 0
      %1588 = vmatmul.mubr.bf16.gmra.mrb[0].mxu0 %v1485
      %v1589 = vpop.f32.mrb[0].mxu0
      %v1590 = vadd.f32 0.0, %v1589
      %v1591 = vpop.f32.mrb[0].mxu0
      %v1592 = vpop.f32.mrb[0].mxu0
      %v1593 = vadd.f32 0.0, %v1592
      %v1594 = vpop.f32.mrb[0].mxu0
      %1595 = vmatprep.mubr.bf16.mxu0 0
      %1596 = vmatmul.mubr.bf16.gmra.mrb[0].mxu0 %v1486
      %v1597 = vpop.f32.mrb[0].mxu0
      %v1598 = vadd.f32 0.0, %v1597
      %v1599 = vpop.f32.mrb[0].mxu0
      %v1600 = vpop.f32.mrb[0].mxu0
      %v1601 = vadd.f32 0.0, %v1600
      %v1602 = vpop.f32.mrb[0].mxu0
      %1603 = vdwg.mxu0
      %v1604 = vadd.f32 %v1394, %v1574
      %v1605 = vadd.f32 %v1395, %v1577
      %v1606 = vadd.f32 %v1396, %v1582
      %v1607 = vadd.f32 %v1397, %v1585
      %v1608 = vadd.f32 %v1398, %v1590
      %v1609 = vadd.f32 %v1399, %v1593
      %v1610 = vadd.f32 %v1400, %v1598
      %v1611 = vadd.f32 %v1401, %v1601
      %s1612 = scalar_lea.vmem %s236, 16
      %v1613 = vld [vmem:[%s1612] sm:$0xf]
      %v1614 = vld [vmem:[%s1612 + $0x8] sm:$0xf]
      %v1615 = vld [vmem:[%s1612 + $0x10] sm:$0xf]
      %v1616 = vld [vmem:[%s1612 + $0x18] sm:$0xf]
      %v1617 = vld [vmem:[%s1612 + $0x20] sm:$0xf]
      %v1618 = vld [vmem:[%s1612 + $0x28] sm:$0xf]
      %v1619 = vld [vmem:[%s1612 + $0x30] sm:$0xf]
      %v1620 = vld [vmem:[%s1612 + $0x38] sm:$0xf]
      %s1621 = scalar_lea.vmem %s244, 384
      %v1622 = vld [vmem:[%s1621] sm:$0xf]
      %v1623 = vld [vmem:[%s1621 + $0x4] sm:$0xf]
      %v1624 = vld [vmem:[%s1621 + $0x8] sm:$0xf]
      %v1625 = vld [vmem:[%s1621 + $0xc] sm:$0xf]
      %v1626 = vld [vmem:[%s1621 + $0x10] sm:$0xf]
      %v1627 = vld [vmem:[%s1621 + $0x14] sm:$0xf]
      %v1628 = vld [vmem:[%s1621 + $0x18] sm:$0xf]
      %v1629 = vld [vmem:[%s1621 + $0x1c] sm:$0xf]
      %v1630 = vld [vmem:[%s1621 + $0x20] sm:$0xf]
      %v1631 = vld [vmem:[%s1621 + $0x24] sm:$0xf]
      %v1632 = vld [vmem:[%s1621 + $0x28] sm:$0xf]
      %v1633 = vld [vmem:[%s1621 + $0x2c] sm:$0xf]
      %v1634 = vld [vmem:[%s1621 + $0x30] sm:$0xf]
      %v1635 = vld [vmem:[%s1621 + $0x34] sm:$0xf]
      %v1636 = vld [vmem:[%s1621 + $0x38] sm:$0xf]
      %v1637 = vld [vmem:[%s1621 + $0x3c] sm:$0xf]
      %v1646 = vunpack.c.l.b16 %v1613
      %v1647 = vunpack.c.l.b16 %v1614
      %v1648 = vunpack.c.l.b16 %v1615
      %v1649 = vunpack.c.l.b16 %v1616
      %v1650 = vunpack.c.l.b16 %v1617
      %v1651 = vunpack.c.l.b16 %v1618
      %v1652 = vunpack.c.l.b16 %v1619
      %v1653 = vunpack.c.l.b16 %v1620
      %v1654 = vpack.c.b16 %v1647, %v1646
      %v1655 = vpack.c.b16 %v1649, %v1648
      %v1656 = vpack.c.b16 %v1651, %v1650
      %v1657 = vpack.c.b16 %v1653, %v1652
      %v1678 = vunpack.c.l.b16 %v1622
      %v1679 = vunpack.c.l.b16 %v1623
      %v1680 = vunpack.c.l.b16 %v1624
      %v1681 = vunpack.c.l.b16 %v1625
      %v1682 = vunpack.c.l.b16 %v1626
      %v1683 = vunpack.c.l.b16 %v1627
      %v1684 = vunpack.c.l.b16 %v1628
      %v1685 = vunpack.c.l.b16 %v1629
      %v1686 = vunpack.c.l.b16 %v1630
      %v1687 = vunpack.c.l.b16 %v1631
      %v1688 = vunpack.c.l.b16 %v1632
      %v1689 = vunpack.c.l.b16 %v1633
      %v1690 = vunpack.c.l.b16 %v1634
      %v1691 = vunpack.c.l.b16 %v1635
      %v1692 = vunpack.c.l.b16 %v1636
      %v1693 = vunpack.c.l.b16 %v1637
      %v1694 = vpack.c.b16 %v1679, %v1678
      %v1695 = vpack.c.b16 %v1681, %v1680
      %v1696 = vpack.c.b16 %v1683, %v1682
      %v1697 = vpack.c.b16 %v1685, %v1684
      %v1698 = vpack.c.b16 %v1687, %v1686
      %v1699 = vpack.c.b16 %v1689, %v1688
      %v1700 = vpack.c.b16 %v1691, %v1690
      %v1701 = vpack.c.b16 %v1693, %v1692
      %1710 = vmatprep.subr.bf16.mxu0 0
      %1711 = vmatpush1.bf16.msra.mxu0 %v1694
      %1712 = vmatprep.subr.bf16.mxu0 0
      %1713 = vmatpush1.bf16.msra.mxu0 %v1695
      %1714 = vmatprep.subr.bf16.mxu0 0
      %1715 = vmatpush1.bf16.msra.mxu0 %v1696
      %1716 = vmatprep.subr.bf16.mxu0 0
      %1717 = vmatpush1.bf16.msra.mxu0 %v1697
      %1718 = vmatprep.subr.bf16.mxu0 0
      %1719 = vmatpush1.bf16.msra.mxu0 %v1698
      %1720 = vmatprep.subr.bf16.mxu0 0
      %1721 = vmatpush1.bf16.msra.mxu0 %v1699
      %1722 = vmatprep.subr.bf16.mxu0 0
      %1723 = vmatpush1.bf16.msra.mxu0 %v1700
      %1724 = vmatprep.subr.bf16.mxu0 0
      %1725 = vmatpush1.bf16.msra.mxu0 %v1701
      %1726 = vmatprep.subr.bf16.mxu0 0
      %1727 = vmatpush1.bf16.msra.mxu0 0
      %1728 = vmatprep.subr.bf16.mxu0 0
      %1729 = vmatpush1.bf16.msra.mxu0 0
      %1730 = vmatprep.subr.bf16.mxu0 0
      %1731 = vmatpush1.bf16.msra.mxu0 0
      %1732 = vmatprep.subr.bf16.mxu0 0
      %1733 = vmatpush1.bf16.msra.mxu0 0
      %1734 = vmatprep.subr.bf16.mxu0 0
      %1735 = vmatpush1.bf16.msra.mxu0 0
      %1736 = vmatprep.subr.bf16.mxu0 0
      %1737 = vmatpush1.bf16.msra.mxu0 0
      %1738 = vmatprep.subr.bf16.mxu0 0
      %1739 = vmatpush1.bf16.msra.mxu0 0
      %1740 = vmatprep.subr.bf16.mxu0 0
      %1741 = vmatpush1.bf16.msra.mxu0 0
      %1742 = vmatprep.mubr.bf16.mxu0 0
      %1743 = vmatmul.mubr.bf16.gmra.mrb[0].mxu0 %v1654
      %v1744 = vpop.f32.mrb[0].mxu0
      %v1745 = vadd.f32 0.0, %v1744
      %v1746 = vpop.f32.mrb[0].mxu0
      %v1747 = vpop.f32.mrb[0].mxu0
      %v1748 = vadd.f32 0.0, %v1747
      %v1749 = vpop.f32.mrb[0].mxu0
      %1750 = vmatprep.mubr.bf16.mxu0 0
      %1751 = vmatmul.mubr.bf16.gmra.mrb[0].mxu0 %v1655
      %v1752 = vpop.f32.mrb[0].mxu0
      %v1753 = vadd.f32 0.0, %v1752
      %v1754 = vpop.f32.mrb[0].mxu0
      %v1755 = vpop.f32.mrb[0].mxu0
      %v1756 = vadd.f32 0.0, %v1755
      %v1757 = vpop.f32.mrb[0].mxu0
      %1758 = vmatprep.mubr.bf16.mxu0 0
      %1759 = vmatmul.mubr.bf16.gmra.mrb[0].mxu0 %v1656
      %v1760 = vpop.f32.mrb[0].mxu0
      %v1761 = vadd.f32 0.0, %v1760
      %v1762 = vpop.f32.mrb[0].mxu0
      %v1763 = vpop.f32.mrb[0].mxu0
      %v1764 = vadd.f32 0.0, %v1763
      %v1765 = vpop.f32.mrb[0].mxu0
      %1766 = vmatprep.mubr.bf16.mxu0 0
      %1767 = vmatmul.mubr.bf16.gmra.mrb[0].mxu0 %v1657
      %v1768 = vpop.f32.mrb[0].mxu0
      %v1769 = vadd.f32 0.0, %v1768
      %v1770 = vpop.f32.mrb[0].mxu0
      %v1771 = vpop.f32.mrb[0].mxu0
      %v1772 = vadd.f32 0.0, %v1771
      %v1773 = vpop.f32.mrb[0].mxu0
      %1774 = vdwg.mxu0
      %v1775 = vadd.f32 %v1604, %v1745
      %v1776 = vadd.f32 %v1605, %v1748
      %v1777 = vadd.f32 %v1606, %v1753
      %v1778 = vadd.f32 %v1607, %v1756
      %v1779 = vadd.f32 %v1608, %v1761
      %v1780 = vadd.f32 %v1609, %v1764
      %v1781 = vadd.f32 %v1610, %v1769
      %v1782 = vadd.f32 %v1611, %v1772
      %v1783 = vld [vmem:[%s1612] sm:$0xf]
      %v1784 = vld [vmem:[%s1612 + $0x4] sm:$0x1]
      %v1785 = vld [vmem:[%s1612 + $0x8] sm:$0xf]
      %v1786 = vld [vmem:[%s1612 + $0xc] sm:$0x1]
      %v1787 = vld [vmem:[%s1612 + $0x10] sm:$0xf]
      %v1788 = vld [vmem:[%s1612 + $0x14] sm:$0x1]
      %v1789 = vld [vmem:[%s1612 + $0x18] sm:$0xf]
      %v1790 = vld [vmem:[%s1612 + $0x1c] sm:$0x1]
      %v1791 = vld [vmem:[%s1612 + $0x20] sm:$0xf]
      %v1792 = vld [vmem:[%s1612 + $0x24] sm:$0x1]
      %v1793 = vld [vmem:[%s1612 + $0x28] sm:$0xf]
      %v1794 = vld [vmem:[%s1612 + $0x2c] sm:$0x1]
      %v1795 = vld [vmem:[%s1612 + $0x30] sm:$0xf]
      %v1796 = vld [vmem:[%s1612 + $0x34] sm:$0x1]
      %v1797 = vld [vmem:[%s1612 + $0x38] sm:$0xf]
      %v1798 = vld [vmem:[%s1612 + $0x3c] sm:$0x1]
      %v1800 = vshrl.u32 %v1783, 16
      %v1802 = vrot.slane %v1800, 4
      %v1803 = vshll.u32 %v1783, 16
      %v1805 = vrot.slane %v1803, 5
      %v1806 = vor.u32 %v1802, %v1805
      %v1807 = vrot.slane %v1806, 4
      %v1809 = vshll.u32 %v1784, 16
      %v1811 = vrot.slane %v1809, 5
      %v1812 = vsel %vm469, %v1807, %v1811
      %v1814 = vshrl.u32 %v1785, 16
      %v1816 = vrot.slane %v1814, 4
      %v1817 = vshll.u32 %v1785, 16
      %v1819 = vrot.slane %v1817, 5
      %v1820 = vor.u32 %v1816, %v1819
      %v1821 = vrot.slane %v1820, 4
      %v1823 = vshll.u32 %v1786, 16
      %v1825 = vrot.slane %v1823, 5
      %v1826 = vsel %vm469, %v1821, %v1825
      %v1828 = vshrl.u32 %v1787, 16
      %v1830 = vrot.slane %v1828, 4
      %v1831 = vshll.u32 %v1787, 16
      %v1833 = vrot.slane %v1831, 5
      %v1834 = vor.u32 %v1830, %v1833
      %v1835 = vrot.slane %v1834, 4
      %v1837 = vshll.u32 %v1788, 16
      %v1839 = vrot.slane %v1837, 5
      %v1840 = vsel %vm469, %v1835, %v1839
      %v1842 = vshrl.u32 %v1789, 16
      %v1844 = vrot.slane %v1842, 4
      %v1845 = vshll.u32 %v1789, 16
      %v1847 = vrot.slane %v1845, 5
      %v1848 = vor.u32 %v1844, %v1847
      %v1849 = vrot.slane %v1848, 4
      %v1851 = vshll.u32 %v1790, 16
      %v1853 = vrot.slane %v1851, 5
      %v1854 = vsel %vm469, %v1849, %v1853
      %v1856 = vshrl.u32 %v1791, 16
      %v1858 = vrot.slane %v1856, 4
      %v1859 = vshll.u32 %v1791, 16
      %v1861 = vrot.slane %v1859, 5
      %v1862 = vor.u32 %v1858, %v1861
      %v1863 = vrot.slane %v1862, 4
      %v1865 = vshll.u32 %v1792, 16
      %v1867 = vrot.slane %v1865, 5
      %v1868 = vsel %vm469, %v1863, %v1867
      %v1870 = vshrl.u32 %v1793, 16
      %v1872 = vrot.slane %v1870, 4
      %v1873 = vshll.u32 %v1793, 16
      %v1875 = vrot.slane %v1873, 5
      %v1876 = vor.u32 %v1872, %v1875
      %v1877 = vrot.slane %v1876, 4
      %v1879 = vshll.u32 %v1794, 16
      %v1881 = vrot.slane %v1879, 5
      %v1882 = vsel %vm469, %v1877, %v1881
      %v1884 = vshrl.u32 %v1795, 16
      %v1886 = vrot.slane %v1884, 4
      %v1887 = vshll.u32 %v1795, 16
      %v1889 = vrot.slane %v1887, 5
      %v1890 = vor.u32 %v1886, %v1889
      %v1891 = vrot.slane %v1890, 4
      %v1893 = vshll.u32 %v1796, 16
      %v1895 = vrot.slane %v1893, 5
      %v1896 = vsel %vm469, %v1891, %v1895
      %v1898 = vshrl.u32 %v1797, 16
      %v1900 = vrot.slane %v1898, 4
      %v1901 = vshll.u32 %v1797, 16
      %v1903 = vrot.slane %v1901, 5
      %v1904 = vor.u32 %v1900, %v1903
      %v1905 = vrot.slane %v1904, 4
      %v1907 = vshll.u32 %v1798, 16
      %v1909 = vrot.slane %v1907, 5
      %v1910 = vsel %vm469, %v1905, %v1909
      %s1911 = scalar_lea.vmem %s244, 448
      %v1912 = vld [vmem:[%s1911] sm:$0xf]
      %v1913 = vld [vmem:[%s1911 + $0x4] sm:$0xf]
      %v1914 = vld [vmem:[%s1911 + $0x8] sm:$0xf]
      %v1915 = vld [vmem:[%s1911 + $0xc] sm:$0xf]
      %v1916 = vld [vmem:[%s1911 + $0x10] sm:$0xf]
      %v1917 = vld [vmem:[%s1911 + $0x14] sm:$0xf]
      %v1918 = vld [vmem:[%s1911 + $0x18] sm:$0xf]
      %v1919 = vld [vmem:[%s1911 + $0x1c] sm:$0xf]
      %v1920 = vld [vmem:[%s1911 + $0x20] sm:$0xf]
      %v1921 = vld [vmem:[%s1911 + $0x24] sm:$0xf]
      %v1922 = vld [vmem:[%s1911 + $0x28] sm:$0xf]
      %v1923 = vld [vmem:[%s1911 + $0x2c] sm:$0xf]
      %v1924 = vld [vmem:[%s1911 + $0x30] sm:$0xf]
      %v1925 = vld [vmem:[%s1911 + $0x34] sm:$0xf]
      %v1926 = vld [vmem:[%s1911 + $0x38] sm:$0xf]
      %v1927 = vld [vmem:[%s1911 + $0x3c] sm:$0xf]
      %v1928 = vunpack.c.l.b16 %v1812
      %v1929 = vunpack.c.l.b16 %v1826
      %v1930 = vunpack.c.l.b16 %v1840
      %v1931 = vunpack.c.l.b16 %v1854
      %v1932 = vunpack.c.l.b16 %v1868
      %v1933 = vunpack.c.l.b16 %v1882
      %v1934 = vunpack.c.l.b16 %v1896
      %v1935 = vunpack.c.l.b16 %v1910
      %v1936 = vpack.c.b16 %v1929, %v1928
      %v1937 = vpack.c.b16 %v1931, %v1930
      %v1938 = vpack.c.b16 %v1933, %v1932
      %v1939 = vpack.c.b16 %v1935, %v1934
      %v1960 = vunpack.c.l.b16 %v1912
      %v1961 = vunpack.c.l.b16 %v1913
      %v1962 = vunpack.c.l.b16 %v1914
      %v1963 = vunpack.c.l.b16 %v1915
      %v1964 = vunpack.c.l.b16 %v1916
      %v1965 = vunpack.c.l.b16 %v1917
      %v1966 = vunpack.c.l.b16 %v1918
      %v1967 = vunpack.c.l.b16 %v1919
      %v1968 = vunpack.c.l.b16 %v1920
      %v1969 = vunpack.c.l.b16 %v1921
      %v1970 = vunpack.c.l.b16 %v1922
      %v1971 = vunpack.c.l.b16 %v1923
      %v1972 = vunpack.c.l.b16 %v1924
      %v1973 = vunpack.c.l.b16 %v1925
      %v1974 = vunpack.c.l.b16 %v1926
      %v1975 = vunpack.c.l.b16 %v1927
      %v1976 = vpack.c.b16 %v1961, %v1960
      %v1977 = vpack.c.b16 %v1963, %v1962
      %v1978 = vpack.c.b16 %v1965, %v1964
      %v1979 = vpack.c.b16 %v1967, %v1966
      %v1980 = vpack.c.b16 %v1969, %v1968
      %v1981 = vpack.c.b16 %v1971, %v1970
      %v1982 = vpack.c.b16 %v1973, %v1972
      %v1983 = vpack.c.b16 %v1975, %v1974
      %1992 = vmatprep.subr.bf16.mxu0 0
      %1993 = vmatpush1.bf16.msra.mxu0 %v1976
      %1994 = vmatprep.subr.bf16.mxu0 0
      %1995 = vmatpush1.bf16.msra.mxu0 %v1977
      %1996 = vmatprep.subr.bf16.mxu0 0
      %1997 = vmatpush1.bf16.msra.mxu0 %v1978
      %1998 = vmatprep.subr.bf16.mxu0 0
      %1999 = vmatpush1.bf16.msra.mxu0 %v1979
      %2000 = vmatprep.subr.bf16.mxu0 0
      %2001 = vmatpush1.bf16.msra.mxu0 %v1980
      %2002 = vmatprep.subr.bf16.mxu0 0
      %2003 = vmatpush1.bf16.msra.mxu0 %v1981
      %2004 = vmatprep.subr.bf16.mxu0 0
      %2005 = vmatpush1.bf16.msra.mxu0 %v1982
      %2006 = vmatprep.subr.bf16.mxu0 0
      %2007 = vmatpush1.bf16.msra.mxu0 %v1983
      %2008 = vmatprep.subr.bf16.mxu0 0
      %2009 = vmatpush1.bf16.msra.mxu0 0
      %2010 = vmatprep.subr.bf16.mxu0 0
      %2011 = vmatpush1.bf16.msra.mxu0 0
      %2012 = vmatprep.subr.bf16.mxu0 0
      %2013 = vmatpush1.bf16.msra.mxu0 0
      %2014 = vmatprep.subr.bf16.mxu0 0
      %2015 = vmatpush1.bf16.msra.mxu0 0
      %2016 = vmatprep.subr.bf16.mxu0 0
      %2017 = vmatpush1.bf16.msra.mxu0 0
      %2018 = vmatprep.subr.bf16.mxu0 0
      %2019 = vmatpush1.bf16.msra.mxu0 0
      %2020 = vmatprep.subr.bf16.mxu0 0
      %2021 = vmatpush1.bf16.msra.mxu0 0
      %2022 = vmatprep.subr.bf16.mxu0 0
      %2023 = vmatpush1.bf16.msra.mxu0 0
      %2024 = vmatprep.mubr.bf16.mxu0 0
      %2025 = vmatmul.mubr.bf16.gmra.mrb[0].mxu0 %v1936
      %v2026 = vpop.f32.mrb[0].mxu0
      %v2027 = vadd.f32 0.0, %v2026
      %v2028 = vpop.f32.mrb[0].mxu0
      %v2029 = vpop.f32.mrb[0].mxu0
      %v2030 = vadd.f32 0.0, %v2029
      %v2031 = vpop.f32.mrb[0].mxu0
      %2032 = vmatprep.mubr.bf16.mxu0 0
      %2033 = vmatmul.mubr.bf16.gmra.mrb[0].mxu0 %v1937
      %v2034 = vpop.f32.mrb[0].mxu0
      %v2035 = vadd.f32 0.0, %v2034
      %v2036 = vpop.f32.mrb[0].mxu0
      %v2037 = vpop.f32.mrb[0].mxu0
      %v2038 = vadd.f32 0.0, %v2037
      %v2039 = vpop.f32.mrb[0].mxu0
      %2040 = vmatprep.mubr.bf16.mxu0 0
      %2041 = vmatmul.mubr.bf16.gmra.mrb[0].mxu0 %v1938
      %v2042 = vpop.f32.mrb[0].mxu0
      %v2043 = vadd.f32 0.0, %v2042
      %v2044 = vpop.f32.mrb[0].mxu0
      %v2045 = vpop.f32.mrb[0].mxu0
      %v2046 = vadd.f32 0.0, %v2045
      %v2047 = vpop.f32.mrb[0].mxu0
      %2048 = vmatprep.mubr.bf16.mxu0 0
      %2049 = vmatmul.mubr.bf16.gmra.mrb[0].mxu0 %v1939
      %v2050 = vpop.f32.mrb[0].mxu0
      %v2051 = vadd.f32 0.0, %v2050
      %v2052 = vpop.f32.mrb[0].mxu0
      %v2053 = vpop.f32.mrb[0].mxu0
      %v2054 = vadd.f32 0.0, %v2053
      %v2055 = vpop.f32.mrb[0].mxu0
      %2056 = vdwg.mxu0
      %v2057 = vadd.f32 %v1775, %v2027
      %v2058 = vadd.f32 %v1776, %v2030
      %v2059 = vadd.f32 %v1777, %v2035
      %v2060 = vadd.f32 %v1778, %v2038
      %v2061 = vadd.f32 %v1779, %v2043
      %v2062 = vadd.f32 %v1780, %v2046
      %v2063 = vadd.f32 %v1781, %v2051
      %v2064 = vadd.f32 %v1782, %v2054
      %v2065 = vld [vmem:[%s1612] sm:$0xe]
      %v2066 = vld [vmem:[%s1612 + $0x8] sm:$0xe]
      %v2067 = vld [vmem:[%s1612 + $0x10] sm:$0xe]
      %v2068 = vld [vmem:[%s1612 + $0x18] sm:$0xe]
      %v2069 = vld [vmem:[%s1612 + $0x20] sm:$0xe]
      %v2070 = vld [vmem:[%s1612 + $0x28] sm:$0xe]
      %v2071 = vld [vmem:[%s1612 + $0x30] sm:$0xe]
      %v2072 = vld [vmem:[%s1612 + $0x38] sm:$0xe]
      %v2089 = vrot.slane %v2065, 5
      %v2090 = vrot.slane %v2089, 4
      %v2091 = vrot.slane %v1784, 5
      %v2092 = vsel %vm762, %v2090, %v2091
      %v2093 = vrot.slane %v2066, 5
      %v2094 = vrot.slane %v2093, 4
      %v2095 = vrot.slane %v1786, 5
      %v2096 = vsel %vm762, %v2094, %v2095
      %v2097 = vrot.slane %v2067, 5
      %v2098 = vrot.slane %v2097, 4
      %v2099 = vrot.slane %v1788, 5
      %v2100 = vsel %vm762, %v2098, %v2099
      %v2101 = vrot.slane %v2068, 5
      %v2102 = vrot.slane %v2101, 4
      %v2103 = vrot.slane %v1790, 5
      %v2104 = vsel %vm762, %v2102, %v2103
      %v2105 = vrot.slane %v2069, 5
      %v2106 = vrot.slane %v2105, 4
      %v2107 = vrot.slane %v1792, 5
      %v2108 = vsel %vm762, %v2106, %v2107
      %v2109 = vrot.slane %v2070, 5
      %v2110 = vrot.slane %v2109, 4
      %v2111 = vrot.slane %v1794, 5
      %v2112 = vsel %vm762, %v2110, %v2111
      %v2113 = vrot.slane %v2071, 5
      %v2114 = vrot.slane %v2113, 4
      %v2115 = vrot.slane %v1796, 5
      %v2116 = vsel %vm762, %v2114, %v2115
      %v2117 = vrot.slane %v2072, 5
      %v2118 = vrot.slane %v2117, 4
      %v2119 = vrot.slane %v1798, 5
      %v2120 = vsel %vm762, %v2118, %v2119
      %s2121 = scalar_lea.vmem %s244, 512
      %v2122 = vld [vmem:[%s2121] sm:$0xf]
      %v2123 = vld [vmem:[%s2121 + $0x4] sm:$0xf]
      %v2124 = vld [vmem:[%s2121 + $0x8] sm:$0xf]
      %v2125 = vld [vmem:[%s2121 + $0xc] sm:$0xf]
      %v2126 = vld [vmem:[%s2121 + $0x10] sm:$0xf]
      %v2127 = vld [vmem:[%s2121 + $0x14] sm:$0xf]
      %v2128 = vld [vmem:[%s2121 + $0x18] sm:$0xf]
      %v2129 = vld [vmem:[%s2121 + $0x1c] sm:$0xf]
      %v2130 = vld [vmem:[%s2121 + $0x20] sm:$0xf]
      %v2131 = vld [vmem:[%s2121 + $0x24] sm:$0xf]
      %v2132 = vld [vmem:[%s2121 + $0x28] sm:$0xf]
      %v2133 = vld [vmem:[%s2121 + $0x2c] sm:$0xf]
      %v2134 = vld [vmem:[%s2121 + $0x30] sm:$0xf]
      %v2135 = vld [vmem:[%s2121 + $0x34] sm:$0xf]
      %v2136 = vld [vmem:[%s2121 + $0x38] sm:$0xf]
      %v2137 = vld [vmem:[%s2121 + $0x3c] sm:$0xf]
      %v2138 = vunpack.c.l.b16 %v2092
      %v2139 = vunpack.c.l.b16 %v2096
      %v2140 = vunpack.c.l.b16 %v2100
      %v2141 = vunpack.c.l.b16 %v2104
      %v2142 = vunpack.c.l.b16 %v2108
      %v2143 = vunpack.c.l.b16 %v2112
      %v2144 = vunpack.c.l.b16 %v2116
      %v2145 = vunpack.c.l.b16 %v2120
      %v2146 = vpack.c.b16 %v2139, %v2138
      %v2147 = vpack.c.b16 %v2141, %v2140
      %v2148 = vpack.c.b16 %v2143, %v2142
      %v2149 = vpack.c.b16 %v2145, %v2144
      %v2170 = vunpack.c.l.b16 %v2122
      %v2171 = vunpack.c.l.b16 %v2123
      %v2172 = vunpack.c.l.b16 %v2124
      %v2173 = vunpack.c.l.b16 %v2125
      %v2174 = vunpack.c.l.b16 %v2126
      %v2175 = vunpack.c.l.b16 %v2127
      %v2176 = vunpack.c.l.b16 %v2128
      %v2177 = vunpack.c.l.b16 %v2129
      %v2178 = vunpack.c.l.b16 %v2130
      %v2179 = vunpack.c.l.b16 %v2131
      %v2180 = vunpack.c.l.b16 %v2132
      %v2181 = vunpack.c.l.b16 %v2133
      %v2182 = vunpack.c.l.b16 %v2134
      %v2183 = vunpack.c.l.b16 %v2135
      %v2184 = vunpack.c.l.b16 %v2136
      %v2185 = vunpack.c.l.b16 %v2137
      %v2186 = vpack.c.b16 %v2171, %v2170
      %v2187 = vpack.c.b16 %v2173, %v2172
      %v2188 = vpack.c.b16 %v2175, %v2174
      %v2189 = vpack.c.b16 %v2177, %v2176
      %v2190 = vpack.c.b16 %v2179, %v2178
      %v2191 = vpack.c.b16 %v2181, %v2180
      %v2192 = vpack.c.b16 %v2183, %v2182
      %v2193 = vpack.c.b16 %v2185, %v2184
      %2202 = vmatprep.subr.bf16.mxu0 0
      %2203 = vmatpush1.bf16.msra.mxu0 %v2186
      %2204 = vmatprep.subr.bf16.mxu0 0
      %2205 = vmatpush1.bf16.msra.mxu0 %v2187
      %2206 = vmatprep.subr.bf16.mxu0 0
      %2207 = vmatpush1.bf16.msra.mxu0 %v2188
      %2208 = vmatprep.subr.bf16.mxu0 0
      %2209 = vmatpush1.bf16.msra.mxu0 %v2189
      %2210 = vmatprep.subr.bf16.mxu0 0
      %2211 = vmatpush1.bf16.msra.mxu0 %v2190
      %2212 = vmatprep.subr.bf16.mxu0 0
      %2213 = vmatpush1.bf16.msra.mxu0 %v2191
      %2214 = vmatprep.subr.bf16.mxu0 0
      %2215 = vmatpush1.bf16.msra.mxu0 %v2192
      %2216 = vmatprep.subr.bf16.mxu0 0
      %2217 = vmatpush1.bf16.msra.mxu0 %v2193
      %2218 = vmatprep.subr.bf16.mxu0 0
      %2219 = vmatpush1.bf16.msra.mxu0 0
      %2220 = vmatprep.subr.bf16.mxu0 0
      %2221 = vmatpush1.bf16.msra.mxu0 0
      %2222 = vmatprep.subr.bf16.mxu0 0
      %2223 = vmatpush1.bf16.msra.mxu0 0
      %2224 = vmatprep.subr.bf16.mxu0 0
      %2225 = vmatpush1.bf16.msra.mxu0 0
      %2226 = vmatprep.subr.bf16.mxu0 0
      %2227 = vmatpush1.bf16.msra.mxu0 0
      %2228 = vmatprep.subr.bf16.mxu0 0
      %2229 = vmatpush1.bf16.msra.mxu0 0
      %2230 = vmatprep.subr.bf16.mxu0 0
      %2231 = vmatpush1.bf16.msra.mxu0 0
      %2232 = vmatprep.subr.bf16.mxu0 0
      %2233 = vmatpush1.bf16.msra.mxu0 0
      %2234 = vmatprep.mubr.bf16.mxu0 0
      %2235 = vmatmul.mubr.bf16.gmra.mrb[0].mxu0 %v2146
      %v2236 = vpop.f32.mrb[0].mxu0
      %v2237 = vadd.f32 0.0, %v2236
      %v2238 = vpop.f32.mrb[0].mxu0
      %v2239 = vpop.f32.mrb[0].mxu0
      %v2240 = vadd.f32 0.0, %v2239
      %v2241 = vpop.f32.mrb[0].mxu0
      %2242 = vmatprep.mubr.bf16.mxu0 0
      %2243 = vmatmul.mubr.bf16.gmra.mrb[0].mxu0 %v2147
      %v2244 = vpop.f32.mrb[0].mxu0
      %v2245 = vadd.f32 0.0, %v2244
      %v2246 = vpop.f32.mrb[0].mxu0
      %v2247 = vpop.f32.mrb[0].mxu0
      %v2248 = vadd.f32 0.0, %v2247
      %v2249 = vpop.f32.mrb[0].mxu0
      %2250 = vmatprep.mubr.bf16.mxu0 0
      %2251 = vmatmul.mubr.bf16.gmra.mrb[0].mxu0 %v2148
      %v2252 = vpop.f32.mrb[0].mxu0
      %v2253 = vadd.f32 0.0, %v2252
      %v2254 = vpop.f32.mrb[0].mxu0
      %v2255 = vpop.f32.mrb[0].mxu0
      %v2256 = vadd.f32 0.0, %v2255
      %v2257 = vpop.f32.mrb[0].mxu0
      %2258 = vmatprep.mubr.bf16.mxu0 0
      %2259 = vmatmul.mubr.bf16.gmra.mrb[0].mxu0 %v2149
      %v2260 = vpop.f32.mrb[0].mxu0
      %v2261 = vadd.f32 0.0, %v2260
      %v2262 = vpop.f32.mrb[0].mxu0
      %v2263 = vpop.f32.mrb[0].mxu0
      %v2264 = vadd.f32 0.0, %v2263
      %v2265 = vpop.f32.mrb[0].mxu0
      %2266 = vdwg.mxu0
      %v2267 = vadd.f32 %v2057, %v2237
      %v2268 = vadd.f32 %v2058, %v2240
      %v2269 = vadd.f32 %v2059, %v2245
      %v2270 = vadd.f32 %v2060, %v2248
      %v2271 = vadd.f32 %v2061, %v2253
      %v2272 = vadd.f32 %v2062, %v2256
      %v2273 = vadd.f32 %v2063, %v2261
      %v2274 = vadd.f32 %v2064, %v2264
      %2275 = vst [vmem:[#allocation2] sm:$0xff] %v2267
      %2276 = vst [vmem:[#allocation2 + $0x8] sm:$0xff] %v2268
      %2277 = vst [vmem:[#allocation2 + $0x10] sm:$0xff] %v2269
      %2278 = vst [vmem:[#allocation2 + $0x18] sm:$0xff] %v2270
      %2279 = vst [vmem:[#allocation2 + $0x20] sm:$0xff] %v2271
      %2280 = vst [vmem:[#allocation2 + $0x28] sm:$0xff] %v2272
      %2281 = vst [vmem:[#allocation2 + $0x30] sm:$0xff] %v2273
      %2282 = vst [vmem:[#allocation2 + $0x38] sm:$0xff] %v2274
      // Predicated region
      $region33: #{_lambda_.11} parent=27 // pred_check
        %p2283 = pneg %p262
      $region34: #{_lambda_.11} parent=27 // pred_check_branch
        %2285 = sbr.rel (%p2283) target = $region36
      $region35: #{_lambda_.11} parent=27 // pred_region
        %v2286 = vpack.c.bf16 %v2267, %v2267
        %v2287 = vpack.c.bf16 %v2268, %v2268
        %v2288 = vpack.c.bf16 %v2269, %v2269
        %v2289 = vpack.c.bf16 %v2270, %v2270
        %v2290 = vpack.c.bf16 %v2271, %v2271
        %v2291 = vpack.c.bf16 %v2272, %v2272
        %v2292 = vpack.c.bf16 %v2273, %v2273
        %v2293 = vpack.c.bf16 %v2274, %v2274
        %2294 = vst [vmem:[%s253] sm:$0xf] %v2286
        %2295 = vst [vmem:[%s253 + $0x4] sm:$0xf] %v2287
        %2296 = vst [vmem:[%s253 + $0x8] sm:$0xf] %v2288
        %2297 = vst [vmem:[%s253 + $0xc] sm:$0xf] %v2289
        %2298 = vst [vmem:[%s253 + $0x10] sm:$0xf] %v2290
        %2299 = vst [vmem:[%s253 + $0x14] sm:$0xf] %v2291
        %2300 = vst [vmem:[%s253 + $0x18] sm:$0xf] %v2292
        %2301 = vst [vmem:[%s253 + $0x1c] sm:$0xf] %v2293
        %v2302 = vadd.f32 %v2267, %v2268
        %v2303 = vadd.f32 %v2302, %v2269
        %v2304 = vadd.f32 %v2303, %v2270
        %v2305 = vadd.f32 %v2304, %v2271
        %v2306 = vadd.f32 %v2305, %v2272
        %v2307 = vadd.f32 %v2306, %v2273
        %v2308 = vadd.f32 %v2307, %v2274
        %v2309 = vrot.slane %v2308, 4
        %v2310 = vadd.f32 %v2308, %v2309
        %v2311 = vrot.slane %v2310, 2
        %v2312 = vadd.f32 %v2310, %v2311
        %v2313 = vrot.slane %v2312, 1
        %v2314 = vadd.f32 %v2312, %v2313
        %2315 = vst [vmem:[%s260] sm:$0x1] %v2314
        %v2316 = vmul.f32 %v2267, %v2267
        %v2317 = vmul.f32 %v2268, %v2268
        %v2318 = vmul.f32 %v2269, %v2269
        %v2319 = vmul.f32 %v2270, %v2270
        %v2320 = vmul.f32 %v2271, %v2271
        %v2321 = vmul.f32 %v2272, %v2272
        %v2322 = vmul.f32 %v2273, %v2273
        %v2323 = vmul.f32 %v2274, %v2274
        %v2324 = vadd.f32 %v2316, %v2317
        %v2325 = vadd.f32 %v2324, %v2318
        %v2326 = vadd.f32 %v2325, %v2319
        %v2327 = vadd.f32 %v2326, %v2320
        %v2328 = vadd.f32 %v2327, %v2321
        %v2329 = vadd.f32 %v2328, %v2322
        %v2330 = vadd.f32 %v2329, %v2323
        %v2331 = vrot.slane %v2330, 4
        %v2332 = vadd.f32 %v2330, %v2331
        %v2333 = vrot.slane %v2332, 2
        %v2334 = vadd.f32 %v2332, %v2333
        %v2335 = vrot.slane %v2334, 1
        %v2336 = vadd.f32 %v2334, %v2335
        %2337 = vst [vmem:[%s260 + $0x1] sm:$0x1] %v2336
      $region36: #{_lambda_.11} parent=27 // pred_fallthru
        _
      %p2338 = scmp.lt.s32.totalorder %s20, 1
      %s2339 = scalar_select %p2338, %s20, 1
      %p2340 = scmp.lt.s32.totalorder %s21, 0
      %s2341 = scalar_select %p2340, %s21, 0
      %s2342 = smul.addr %s2339, 8
      %s2343 = sadd.s32 %s2341, %s2342
      %s2344 = smul.addr %s2343, 4
      %s2345 = scalar_lea.vmem %s2, %s2344
      %p2346 = scmp.lt.s32.totalorder %s20, 1
      %s2347 = scalar_select %p2346, %s20, 1
      %p2348 = scmp.lt.s32.totalorder %s21, 0
      %s2349 = scalar_select %p2348, %s21, 0
      %s2350 = sadd.s32 %s2349, %s2347
      %s2351 = smul.addr %s2350, 2
      %s2352 = scalar_lea.vmem %s3, %s2351
      // Predicated region
      $region37: #{_lambda_.11} parent=27 // pred_check
        %p2353 = pneg %p110
      $region38: #{_lambda_.11} parent=27 // pred_check_branch
        %2355 = sbr.rel (%p2353) target = $region40
      $region39: #{_lambda_.11} parent=27 // pred_region
        _
      $region40: #{_lambda_.11} parent=27 // pred_fallthru
        _
      // Predicated region
      $region41: #{_lambda_.11} parent=27 // pred_check
        %p2356 = pneg %p138
      $region42: #{_lambda_.11} parent=27 // pred_check_branch
        %2358 = sbr.rel (%p2356) target = $region44
      $region43: #{_lambda_.11} parent=27 // pred_region
        _
      $region44: #{_lambda_.11} parent=27 // pred_fallthru
        _
    $region28: #{_lambda_.11} parent=5 // pred_fallthru
      _
    %p2359 = scmp.le.s32.totalorder 2, %s10
    // Predicated region
    $region45: #{_lambda_.11} parent=5 // pred_check
      %p2360 = pneg %p2359
    $region46: #{_lambda_.11} parent=5 // pred_check_branch
      %2362 = sbr.rel (%p2360) target = $region48
    $region47: #{_lambda_.11} parent=5 // pred_region
      %s2363 = ssub.s32 %s10, 2
      // Predicated region
      $region49: #{_lambda_.11} parent=47 // pred_check
        %p2364 = pneg %p116
      $region50: #{_lambda_.11} parent=47 // pred_check_branch
        %2366 = sbr.rel (%p2364) target = $region52
      $region51: #{_lambda_.11} parent=47 // pred_region
        %p2367 = scmp.lt.s32.totalorder %s23, 1
        %s2368 = scalar_select %p2367, %s23, 1
        %p2369 = scmp.lt.s32.totalorder %s24, 0
        %s2370 = scalar_select %p2369, %s24, 0
        %s2371 = smul.addr %s2368, 8
        %s2372 = sadd.s32 %s2370, %s2371
        %s2373 = smul.addr %s2372, 4
        %s2374 = scalar_lea.vmem %s2, %s2373
      $region52: #{_lambda_.11} parent=47 // pred_fallthru
        _
      // Predicated region
      $region53: #{_lambda_.11} parent=47 // pred_check
        %p2375 = pneg %p144
      $region54: #{_lambda_.11} parent=47 // pred_check_branch
        %2377 = sbr.rel (%p2375) target = $region56
      $region55: #{_lambda_.11} parent=47 // pred_region
        %p2378 = scmp.lt.s32.totalorder %s23, 1
        %s2379 = scalar_select %p2378, %s23, 1
        %p2380 = scmp.lt.s32.totalorder %s24, 0
        %s2381 = scalar_select %p2380, %s24, 0
        %s2382 = sadd.s32 %s2381, %s2379
        %s2383 = smul.addr %s2382, 2
        %s2384 = scalar_lea.vmem %s3, %s2383
      $region56: #{_lambda_.11} parent=47 // pred_fallthru
        _
    $region48: #{_lambda_.11} parent=5 // pred_fallthru
      _
  $region6: #{_lambda_.11} parent=0 // loop_footer
    %s14 = sadd.s32 1, %s10
  $region7: #{_lambda_.11} parent=0 // loop_footer_branch
    %9 = sbr.rel target = $region3
  $region8: #{_lambda_.11} parent=0 // loop_exit
    _

</llo_original>
